<compile_context>
chip_gen: v5e
topology: v5e:2x2
jax: 0.10.0
libtpu: 0.0.40
codegen_flags: <defaults>
</compile_context>

<pallas_src>
import jax
import jax.numpy as jnp
from jax.experimental import pallas as pl
from jax.experimental.pallas import tpu as pltpu

BN_EPS = 1e-5
LANE = 128

# Feature sizes from the PyTorch module
IN, H0, H1, H2, H3, H4, OUT = 1074, 512, 256, 128, 64, 32, 1074
DIMS = [IN, H0, H1, H2, H3, H4, H3, H2, H1, OUT]       # 9 linear layers
BN_DIMS = [IN, H0, H1, H2, H3, H3, H2, H1]             # 8 BatchNorm1d layers
# Index of the BN that feeds each linear's input (None = no BN on its input)
BN_FOR_LINEAR = [0, 1, 2, 3, 4, None, 5, 6, 7]


def _round_up(n, m):
    return (n + m - 1) // m * m


PDIMS = [_round_up(d, LANE) for d in DIMS]   # lane-padded dims
IN_PAD, OUT_PAD, Z_PAD = PDIMS[0], PDIMS[-1], PDIMS[5]


# ----------------------------------------------------------------------------
# Kernel: 9 x relu(x @ W + b), BN already folded into W/b, dropout = identity.
# ----------------------------------------------------------------------------
def deepae_kernel(x_ref,
                  w1, b1, w2, b2, w3, b3, w4, b4, w5, b5,
                  w6, b6, w7, b7, w8, b8, w9, b9,
                  out_ref, z_ref):
    def layer(x, w_ref, b_ref):
        # bf16 MXU operands, f32 accumulation; bias/ReLU in f32 on the VPU.
        y = jnp.dot(x.astype(w_ref.dtype), w_ref[...],
                    preferred_element_type=jnp.float32) + b_ref[...]
        return jnp.maximum(y, 0.0)

    x = x_ref[...]                       # (TILE_B, IN_PAD) f32
    # encoder
    x = layer(x, w1, b1)
    x = layer(x, w2, b2)
    x = layer(x, w3, b3)
    x = layer(x, w4, b4)
    z = layer(x, w5, b5)                 # bottleneck code (padded to 128 lanes)
    z_ref[...] = z.astype(z_ref.dtype)
    # decoder
    x = layer(z, w6, b6)
    x = layer(x, w7, b7)
    x = layer(x, w8, b8)
    out_ref[...] = layer(x, w9, b9).astype(out_ref.dtype)


# ----------------------------------------------------------------------------
# Parameter construction (shapes match the PyTorch module)
# ----------------------------------------------------------------------------
def make_params(key):
    keys = jax.random.split(key, 64)
    ki = iter(range(64))

    linears = []
    for i in range(9):
        fan_in, fan_out = DIMS[i], DIMS[i + 1]
        bound = 1.0 / jnp.sqrt(fan_in)
        w = jax.random.uniform(keys[next(ki)], (fan_in, fan_out),
                               minval=-bound, maxval=bound, dtype=jnp.float32)
        b = jax.random.uniform(keys[next(ki)], (1, fan_out),
                               minval=-bound, maxval=bound, dtype=jnp.float32)
        linears.append((w, b))

    bns = []
    for n in BN_DIMS:
        g = jax.random.uniform(keys[next(ki)], (1, n), minval=0.5, maxval=1.5,
                               dtype=jnp.float32)
        be = 0.1 * jax.random.normal(keys[next(ki)], (1, n), dtype=jnp.float32)
        m = 0.1 * jax.random.normal(keys[next(ki)], (1, n), dtype=jnp.float32)
        v = jax.random.uniform(keys[next(ki)], (1, n), minval=0.5, maxval=1.5,
                               dtype=jnp.float32)
        bns.append((g, be, m, v))

    return linears, bns


def _fold_and_pad(linears, bns):
    """Fold eval-mode BN into the adjacent Linear, pad to lane multiples, cast W to bf16."""
    flat = []
    for j, (w, b) in enumerate(linears):
        bi = BN_FOR_LINEAR[j]
        if bi is not None:
            g, be, m, v = bns[bi]
            scale = g * jax.lax.rsqrt(v + BN_EPS)          # (1, in)
            shift = be - m * scale                         # (1, in)
            # (a*scale + shift) @ W + b == a @ (scale*W) + (shift @ W + b)
            b = b + shift @ w
            w = w * scale.reshape(-1, 1)
        pin, pout = PDIMS[j], PDIMS[j + 1]
        din, dout = w.shape
        w = jnp.pad(w, ((0, pin - din), (0, pout - dout))).astype(jnp.bfloat16)
        b = jnp.pad(b, ((0, 0), (0, pout - dout))).astype(jnp.float32)
        flat += [w, b]
    return flat


# ----------------------------------------------------------------------------
# Wrapper
# ----------------------------------------------------------------------------
@jax.jit
def deepae_forward(x, linears, bns):
    B = x.shape[0]
    flat_params = _fold_and_pad(linears, bns)

    tile_b = 256 if B >= 256 else _round_up(B, 8)
    b_pad = _round_up(B, tile_b)
    grid = (b_pad // tile_b,)

    xp = jnp.pad(x.astype(jnp.float32), ((0, b_pad - B), (0, IN_PAD - IN)))

    in_specs = [pl.BlockSpec((tile_b, IN_PAD), lambda i: (i, 0))]
    for j in range(9):
        pin, pout = PDIMS[j], PDIMS[j + 1]
        # Constant block index -> weights/biases stay resident across grid steps.
        in_specs.append(pl.BlockSpec((pin, pout), lambda i: (0, 0)))
        in_specs.append(pl.BlockSpec((1, pout), lambda i: (0, 0)))

    out_pad, z_pad = pl.pallas_call(
        deepae_kernel,
        grid=grid,
        in_specs=in_specs,
        out_specs=(pl.BlockSpec((tile_b, OUT_PAD), lambda i: (i, 0)),
                   pl.BlockSpec((tile_b, Z_PAD), lambda i: (i, 0))),
        out_shape=(jax.ShapeDtypeStruct((b_pad, OUT_PAD), jnp.float32),
                   jax.ShapeDtypeStruct((b_pad, Z_PAD), jnp.float32)),
        compiler_params=pltpu.CompilerParams(
            dimension_semantics=("parallel",),
            vmem_limit_bytes=24 * 1024 * 1024),
    )(xp, *flat_params)

    return out_pad[:B, :OUT], z_pad[:B, :H4]


# ----------------------------------------------------------------------------
# Pure-JAX f32 reference (unfolded eval-mode forward) for sanity checking
# ----------------------------------------------------------------------------
def deepae_reference(x, linears, bns):
    def bn(a, p):
        g, be, m, v = p
        return (a - m) * jax.lax.rsqrt(v + BN_EPS) * g + be

    def lin_relu(a, p):
        w, b = p
        return jnp.maximum(a @ w + b, 0.0)

    x = bn(x, bns[0])
    x = lin_relu(x, linears[0]); x = bn(x, bns[1])
    x = lin_relu(x, linears[1]); x = bn(x, bns[2])
    x = lin_relu(x, linears[2]); x = bn(x, bns[3])
    x = lin_relu(x, linears[3]); x = bn(x, bns[4])
    z = lin_relu(x, linears[4])
    x = lin_relu(z, linears[5]); x = bn(x, bns[5])
    x = lin_relu(x, linears[6]); x = bn(x, bns[6])
    x = lin_relu(x, linears[7]); x = bn(x, bns[7])
    x = lin_relu(x, linears[8])
    return x, z


if __name__ == "__main__":
    key = jax.random.PRNGKey(0)
    k_params, k_x = jax.random.split(key)

    B = 8
    x = jax.random.normal(k_x, (B, IN), dtype=jnp.float32)
    linears, bns = make_params(k_params)

    recon, code = deepae_forward(x, linears, bns)
    jax.block_until_ready((recon, code))

    assert recon.shape == (B, OUT) and code.shape == (B, H4)

    # Loose numeric check against the f32 reference (bf16 weights -> small drift).
    ref_recon, ref_code = deepae_reference(x, linears, bns)
    err = max(float(jnp.max(jnp.abs(recon - ref_recon))),
              float(jnp.max(jnp.abs(code - ref_code))))
    assert err < 0.2, f"numeric drift too large: {err}"

    print("KERNEL_OK")
</pallas_src>

<mosaic_0001>
module attributes {stable_mosaic.version = 11 : i64} {
  func.func @deepae_kernel(%arg0: i32, %arg1: memref<8x1152xf32, #tpu.memory_space<vmem>>, %arg2: memref<1152x512xbf16, #tpu.memory_space<vmem>>, %arg3: memref<1x512xf32, #tpu.memory_space<vmem>>, %arg4: memref<512x256xbf16, #tpu.memory_space<vmem>>, %arg5: memref<1x256xf32, #tpu.memory_space<vmem>>, %arg6: memref<256x128xbf16, #tpu.memory_space<vmem>>, %arg7: memref<1x128xf32, #tpu.memory_space<vmem>>, %arg8: memref<128x128xbf16, #tpu.memory_space<vmem>>, %arg9: memref<1x128xf32, #tpu.memory_space<vmem>>, %arg10: memref<128x128xbf16, #tpu.memory_space<vmem>>, %arg11: memref<1x128xf32, #tpu.memory_space<vmem>>, %arg12: memref<128x128xbf16, #tpu.memory_space<vmem>>, %arg13: memref<1x128xf32, #tpu.memory_space<vmem>>, %arg14: memref<128x128xbf16, #tpu.memory_space<vmem>>, %arg15: memref<1x128xf32, #tpu.memory_space<vmem>>, %arg16: memref<128x256xbf16, #tpu.memory_space<vmem>>, %arg17: memref<1x256xf32, #tpu.memory_space<vmem>>, %arg18: memref<256x1152xbf16, #tpu.memory_space<vmem>>, %arg19: memref<1x1152xf32, #tpu.memory_space<vmem>>, %arg20: memref<8x1152xf32, #tpu.memory_space<vmem>>, %arg21: memref<8x128xf32, #tpu.memory_space<vmem>>) attributes {dimension_semantics = [#tpu.dimension_semantics<parallel>], iteration_bounds = array<i64: 1>, scalar_prefetch = 0 : i64, scratch_operands = 0 : i64, tpu.core_type = #tpu.core_type<tc>, window_params = [{transform_indices = @transform_0, window_bounds = array<i64: 8, 1152>}, {pipeline_mode = #tpu.pipeline_mode<synchronous>, transform_indices = @transform_1, window_bounds = array<i64: 1152, 512>}, {pipeline_mode = #tpu.pipeline_mode<synchronous>, transform_indices = @transform_2, window_bounds = array<i64: 1, 512>}, {pipeline_mode = #tpu.pipeline_mode<synchronous>, transform_indices = @transform_3, window_bounds = array<i64: 512, 256>}, {pipeline_mode = #tpu.pipeline_mode<synchronous>, transform_indices = @transform_4, window_bounds = array<i64: 1, 256>}, {pipeline_mode = #tpu.pipeline_mode<synchronous>, transform_indices = @transform_5, window_bounds = array<i64: 256, 128>}, {pipeline_mode = #tpu.pipeline_mode<synchronous>, transform_indices = @transform_6, window_bounds = array<i64: 1, 128>}, {pipeline_mode = #tpu.pipeline_mode<synchronous>, transform_indices = @transform_7, window_bounds = array<i64: 128, 128>}, {pipeline_mode = #tpu.pipeline_mode<synchronous>, transform_indices = @transform_8, window_bounds = array<i64: 1, 128>}, {pipeline_mode = #tpu.pipeline_mode<synchronous>, transform_indices = @transform_9, window_bounds = array<i64: 128, 128>}, {pipeline_mode = #tpu.pipeline_mode<synchronous>, transform_indices = @transform_10, window_bounds = array<i64: 1, 128>}, {pipeline_mode = #tpu.pipeline_mode<synchronous>, transform_indices = @transform_11, window_bounds = array<i64: 128, 128>}, {pipeline_mode = #tpu.pipeline_mode<synchronous>, transform_indices = @transform_12, window_bounds = array<i64: 1, 128>}, {pipeline_mode = #tpu.pipeline_mode<synchronous>, transform_indices = @transform_13, window_bounds = array<i64: 128, 128>}, {pipeline_mode = #tpu.pipeline_mode<synchronous>, transform_indices = @transform_14, window_bounds = array<i64: 1, 128>}, {pipeline_mode = #tpu.pipeline_mode<synchronous>, transform_indices = @transform_15, window_bounds = array<i64: 128, 256>}, {pipeline_mode = #tpu.pipeline_mode<synchronous>, transform_indices = @transform_16, window_bounds = array<i64: 1, 256>}, {pipeline_mode = #tpu.pipeline_mode<synchronous>, transform_indices = @transform_17, window_bounds = array<i64: 256, 1152>}, {pipeline_mode = #tpu.pipeline_mode<synchronous>, transform_indices = @transform_18, window_bounds = array<i64: 1, 1152>}, {transform_indices = @transform_19, window_bounds = array<i64: 8, 1152>}, {transform_indices = @transform_20, window_bounds = array<i64: 8, 128>}]} {
    %c0 = arith.constant 0 : index
    %c0_0 = arith.constant 0 : index
    %0 = vector.load %arg1[%c0, %c0_0] : memref<8x1152xf32, #tpu.memory_space<vmem>>, vector<8x1152xf32>
    %1 = arith.truncf %0 : vector<8x1152xf32> to vector<8x1152xbf16>
    %c0_1 = arith.constant 0 : index
    %c0_2 = arith.constant 0 : index
    %2 = vector.load %arg2[%c0_1, %c0_2] : memref<1152x512xbf16, #tpu.memory_space<vmem>>, vector<1152x512xbf16>
    %cst = arith.constant dense<0.000000e+00> : vector<8x512xf32>
    %3 = tpu.matmul %1, %2, %cst {dimension_numbers = #tpu.dot_dimension_numbers<[1], [0], [0], [1], [0, 0, 1, 1], [], []>} : vector<8x1152xbf16>, vector<1152x512xbf16>, vector<8x512xf32> -> vector<8x512xf32>
    %c0_3 = arith.constant 0 : index
    %c0_4 = arith.constant 0 : index
    %4 = vector.load %arg3[%c0_3, %c0_4] : memref<1x512xf32, #tpu.memory_space<vmem>>, vector<1x512xf32>
    %5 = vector.broadcast %4 : vector<1x512xf32> to vector<8x512xf32>
    %6 = arith.addf %3, %5 : vector<8x512xf32>
    %cst_5 = arith.constant 0.000000e+00 : f32
    %7 = vector.broadcast %cst_5 : f32 to vector<8x512xf32>
    %8 = arith.maximumf %6, %7 : vector<8x512xf32>
    %9 = arith.truncf %8 : vector<8x512xf32> to vector<8x512xbf16>
    %c0_6 = arith.constant 0 : index
    %c0_7 = arith.constant 0 : index
    %10 = vector.load %arg4[%c0_6, %c0_7] : memref<512x256xbf16, #tpu.memory_space<vmem>>, vector<512x256xbf16>
    %cst_8 = arith.constant dense<0.000000e+00> : vector<8x256xf32>
    %11 = tpu.matmul %9, %10, %cst_8 {dimension_numbers = #tpu.dot_dimension_numbers<[1], [0], [0], [1], [0, 0, 1, 1], [], []>} : vector<8x512xbf16>, vector<512x256xbf16>, vector<8x256xf32> -> vector<8x256xf32>
    %c0_9 = arith.constant 0 : index
    %c0_10 = arith.constant 0 : index
    %12 = vector.load %arg5[%c0_9, %c0_10] : memref<1x256xf32, #tpu.memory_space<vmem>>, vector<1x256xf32>
    %13 = vector.broadcast %12 : vector<1x256xf32> to vector<8x256xf32>
    %14 = arith.addf %11, %13 : vector<8x256xf32>
    %cst_11 = arith.constant 0.000000e+00 : f32
    %15 = vector.broadcast %cst_11 : f32 to vector<8x256xf32>
    %16 = arith.maximumf %14, %15 : vector<8x256xf32>
    %17 = arith.truncf %16 : vector<8x256xf32> to vector<8x256xbf16>
    %c0_12 = arith.constant 0 : index
    %c0_13 = arith.constant 0 : index
    %18 = vector.load %arg6[%c0_12, %c0_13] : memref<256x128xbf16, #tpu.memory_space<vmem>>, vector<256x128xbf16>
    %cst_14 = arith.constant dense<0.000000e+00> : vector<8x128xf32>
    %19 = tpu.matmul %17, %18, %cst_14 {dimension_numbers = #tpu.dot_dimension_numbers<[1], [0], [0], [1], [0, 0, 1, 1], [], []>} : vector<8x256xbf16>, vector<256x128xbf16>, vector<8x128xf32> -> vector<8x128xf32>
    %c0_15 = arith.constant 0 : index
    %c0_16 = arith.constant 0 : index
    %20 = vector.load %arg7[%c0_15, %c0_16] : memref<1x128xf32, #tpu.memory_space<vmem>>, vector<1x128xf32>
    %21 = vector.broadcast %20 : vector<1x128xf32> to vector<8x128xf32>
    %22 = arith.addf %19, %21 : vector<8x128xf32>
    %cst_17 = arith.constant 0.000000e+00 : f32
    %23 = vector.broadcast %cst_17 : f32 to vector<8x128xf32>
    %24 = arith.maximumf %22, %23 : vector<8x128xf32>
    %25 = arith.truncf %24 : vector<8x128xf32> to vector<8x128xbf16>
    %c0_18 = arith.constant 0 : index
    %c0_19 = arith.constant 0 : index
    %26 = vector.load %arg8[%c0_18, %c0_19] : memref<128x128xbf16, #tpu.memory_space<vmem>>, vector<128x128xbf16>
    %cst_20 = arith.constant dense<0.000000e+00> : vector<8x128xf32>
    %27 = tpu.matmul %25, %26, %cst_20 {dimension_numbers = #tpu.dot_dimension_numbers<[1], [0], [0], [1], [0, 0, 1, 1], [], []>} : vector<8x128xbf16>, vector<128x128xbf16>, vector<8x128xf32> -> vector<8x128xf32>
    %c0_21 = arith.constant 0 : index
    %c0_22 = arith.constant 0 : index
    %28 = vector.load %arg9[%c0_21, %c0_22] : memref<1x128xf32, #tpu.memory_space<vmem>>, vector<1x128xf32>
    %29 = vector.broadcast %28 : vector<1x128xf32> to vector<8x128xf32>
    %30 = arith.addf %27, %29 : vector<8x128xf32>
    %cst_23 = arith.constant 0.000000e+00 : f32
    %31 = vector.broadcast %cst_23 : f32 to vector<8x128xf32>
    %32 = arith.maximumf %30, %31 : vector<8x128xf32>
    %33 = arith.truncf %32 : vector<8x128xf32> to vector<8x128xbf16>
    %c0_24 = arith.constant 0 : index
    %c0_25 = arith.constant 0 : index
    %34 = vector.load %arg10[%c0_24, %c0_25] : memref<128x128xbf16, #tpu.memory_space<vmem>>, vector<128x128xbf16>
    %cst_26 = arith.constant dense<0.000000e+00> : vector<8x128xf32>
    %35 = tpu.matmul %33, %34, %cst_26 {dimension_numbers = #tpu.dot_dimension_numbers<[1], [0], [0], [1], [0, 0, 1, 1], [], []>} : vector<8x128xbf16>, vector<128x128xbf16>, vector<8x128xf32> -> vector<8x128xf32>
    %c0_27 = arith.constant 0 : index
    %c0_28 = arith.constant 0 : index
    %36 = vector.load %arg11[%c0_27, %c0_28] : memref<1x128xf32, #tpu.memory_space<vmem>>, vector<1x128xf32>
    %37 = vector.broadcast %36 : vector<1x128xf32> to vector<8x128xf32>
    %38 = arith.addf %35, %37 : vector<8x128xf32>
    %cst_29 = arith.constant 0.000000e+00 : f32
    %39 = vector.broadcast %cst_29 : f32 to vector<8x128xf32>
    %40 = arith.maximumf %38, %39 : vector<8x128xf32>
    %c0_30 = arith.constant 0 : index
    %c0_31 = arith.constant 0 : index
    %41 = vector.load %arg21[%c0_30, %c0_31] : memref<8x128xf32, #tpu.memory_space<vmem>>, vector<8x128xf32>
    tpu.vector_store %arg21[%c0_30, %c0_31], %40 {strides = array<i32>} : memref<8x128xf32, #tpu.memory_space<vmem>>, vector<8x128xf32>,
    %42 = arith.truncf %40 : vector<8x128xf32> to vector<8x128xbf16>
    %c0_32 = arith.constant 0 : index
    %c0_33 = arith.constant 0 : index
    %43 = vector.load %arg12[%c0_32, %c0_33] : memref<128x128xbf16, #tpu.memory_space<vmem>>, vector<128x128xbf16>
    %cst_34 = arith.constant dense<0.000000e+00> : vector<8x128xf32>
    %44 = tpu.matmul %42, %43, %cst_34 {dimension_numbers = #tpu.dot_dimension_numbers<[1], [0], [0], [1], [0, 0, 1, 1], [], []>} : vector<8x128xbf16>, vector<128x128xbf16>, vector<8x128xf32> -> vector<8x128xf32>
    %c0_35 = arith.constant 0 : index
    %c0_36 = arith.constant 0 : index
    %45 = vector.load %arg13[%c0_35, %c0_36] : memref<1x128xf32, #tpu.memory_space<vmem>>, vector<1x128xf32>
    %46 = vector.broadcast %45 : vector<1x128xf32> to vector<8x128xf32>
    %47 = arith.addf %44, %46 : vector<8x128xf32>
    %cst_37 = arith.constant 0.000000e+00 : f32
    %48 = vector.broadcast %cst_37 : f32 to vector<8x128xf32>
    %49 = arith.maximumf %47, %48 : vector<8x128xf32>
    %50 = arith.truncf %49 : vector<8x128xf32> to vector<8x128xbf16>
    %c0_38 = arith.constant 0 : index
    %c0_39 = arith.constant 0 : index
    %51 = vector.load %arg14[%c0_38, %c0_39] : memref<128x128xbf16, #tpu.memory_space<vmem>>, vector<128x128xbf16>
    %cst_40 = arith.constant dense<0.000000e+00> : vector<8x128xf32>
    %52 = tpu.matmul %50, %51, %cst_40 {dimension_numbers = #tpu.dot_dimension_numbers<[1], [0], [0], [1], [0, 0, 1, 1], [], []>} : vector<8x128xbf16>, vector<128x128xbf16>, vector<8x128xf32> -> vector<8x128xf32>
    %c0_41 = arith.constant 0 : index
    %c0_42 = arith.constant 0 : index
    %53 = vector.load %arg15[%c0_41, %c0_42] : memref<1x128xf32, #tpu.memory_space<vmem>>, vector<1x128xf32>
    %54 = vector.broadcast %53 : vector<1x128xf32> to vector<8x128xf32>
    %55 = arith.addf %52, %54 : vector<8x128xf32>
    %cst_43 = arith.constant 0.000000e+00 : f32
    %56 = vector.broadcast %cst_43 : f32 to vector<8x128xf32>
    %57 = arith.maximumf %55, %56 : vector<8x128xf32>
    %58 = arith.truncf %57 : vector<8x128xf32> to vector<8x128xbf16>
    %c0_44 = arith.constant 0 : index
    %c0_45 = arith.constant 0 : index
    %59 = vector.load %arg16[%c0_44, %c0_45] : memref<128x256xbf16, #tpu.memory_space<vmem>>, vector<128x256xbf16>
    %cst_46 = arith.constant dense<0.000000e+00> : vector<8x256xf32>
    %60 = tpu.matmul %58, %59, %cst_46 {dimension_numbers = #tpu.dot_dimension_numbers<[1], [0], [0], [1], [0, 0, 1, 1], [], []>} : vector<8x128xbf16>, vector<128x256xbf16>, vector<8x256xf32> -> vector<8x256xf32>
    %c0_47 = arith.constant 0 : index
    %c0_48 = arith.constant 0 : index
    %61 = vector.load %arg17[%c0_47, %c0_48] : memref<1x256xf32, #tpu.memory_space<vmem>>, vector<1x256xf32>
    %62 = vector.broadcast %61 : vector<1x256xf32> to vector<8x256xf32>
    %63 = arith.addf %60, %62 : vector<8x256xf32>
    %cst_49 = arith.constant 0.000000e+00 : f32
    %64 = vector.broadcast %cst_49 : f32 to vector<8x256xf32>
    %65 = arith.maximumf %63, %64 : vector<8x256xf32>
    %66 = arith.truncf %65 : vector<8x256xf32> to vector<8x256xbf16>
    %c0_50 = arith.constant 0 : index
    %c0_51 = arith.constant 0 : index
    %67 = vector.load %arg18[%c0_50, %c0_51] : memref<256x1152xbf16, #tpu.memory_space<vmem>>, vector<256x1152xbf16>
    %cst_52 = arith.constant dense<0.000000e+00> : vector<8x1152xf32>
    %68 = tpu.matmul %66, %67, %cst_52 {dimension_numbers = #tpu.dot_dimension_numbers<[1], [0], [0], [1], [0, 0, 1, 1], [], []>} : vector<8x256xbf16>, vector<256x1152xbf16>, vector<8x1152xf32> -> vector<8x1152xf32>
    %c0_53 = arith.constant 0 : index
    %c0_54 = arith.constant 0 : index
    %69 = vector.load %arg19[%c0_53, %c0_54] : memref<1x1152xf32, #tpu.memory_space<vmem>>, vector<1x1152xf32>
    %70 = vector.broadcast %69 : vector<1x1152xf32> to vector<8x1152xf32>
    %71 = arith.addf %68, %70 : vector<8x1152xf32>
    %cst_55 = arith.constant 0.000000e+00 : f32
    %72 = vector.broadcast %cst_55 : f32 to vector<8x1152xf32>
    %73 = arith.maximumf %71, %72 : vector<8x1152xf32>
    %c0_56 = arith.constant 0 : index
    %c0_57 = arith.constant 0 : index
    %74 = vector.load %arg20[%c0_56, %c0_57] : memref<8x1152xf32, #tpu.memory_space<vmem>>, vector<8x1152xf32>
    tpu.vector_store %arg20[%c0_56, %c0_57], %73 {strides = array<i32>} : memref<8x1152xf32, #tpu.memory_space<vmem>>, vector<8x1152xf32>,
    return
  }
  func.func @transform_0(%arg0: i32) -> (i32, i32) {
    %c0_i32 = arith.constant 0 : i32
    %c0_i32_0 = arith.constant 0 : i32
    return %arg0, %c0_i32 : i32, i32
  }
  func.func @transform_1(%arg0: i32) -> (i32, i32) {
    %c0_i32 = arith.constant 0 : i32
    %c0_i32_0 = arith.constant 0 : i32
    %c0_i32_1 = arith.constant 0 : i32
    return %c0_i32, %c0_i32_0 : i32, i32
  }
  func.func @transform_2(%arg0: i32) -> (i32, i32) {
    %c0_i32 = arith.constant 0 : i32
    %c0_i32_0 = arith.constant 0 : i32
    %c0_i32_1 = arith.constant 0 : i32
    return %c0_i32, %c0_i32_0 : i32, i32
  }
  func.func @transform_3(%arg0: i32) -> (i32, i32) {
    %c0_i32 = arith.constant 0 : i32
    %c0_i32_0 = arith.constant 0 : i32
    %c0_i32_1 = arith.constant 0 : i32
    return %c0_i32, %c0_i32_0 : i32, i32
  }
  func.func @transform_4(%arg0: i32) -> (i32, i32) {
    %c0_i32 = arith.constant 0 : i32
    %c0_i32_0 = arith.constant 0 : i32
    %c0_i32_1 = arith.constant 0 : i32
    return %c0_i32, %c0_i32_0 : i32, i32
  }
  func.func @transform_5(%arg0: i32) -> (i32, i32) {
    %c0_i32 = arith.constant 0 : i32
    %c0_i32_0 = arith.constant 0 : i32
    %c0_i32_1 = arith.constant 0 : i32
    return %c0_i32, %c0_i32_0 : i32, i32
  }
  func.func @transform_6(%arg0: i32) -> (i32, i32) {
    %c0_i32 = arith.constant 0 : i32
    %c0_i32_0 = arith.constant 0 : i32
    %c0_i32_1 = arith.constant 0 : i32
    return %c0_i32, %c0_i32_0 : i32, i32
  }
  func.func @transform_7(%arg0: i32) -> (i32, i32) {
    %c0_i32 = arith.constant 0 : i32
    %c0_i32_0 = arith.constant 0 : i32
    %c0_i32_1 = arith.constant 0 : i32
    return %c0_i32, %c0_i32_0 : i32, i32
  }
  func.func @transform_8(%arg0: i32) -> (i32, i32) {
    %c0_i32 = arith.constant 0 : i32
    %c0_i32_0 = arith.constant 0 : i32
    %c0_i32_1 = arith.constant 0 : i32
    return %c0_i32, %c0_i32_0 : i32, i32
  }
  func.func @transform_9(%arg0: i32) -> (i32, i32) {
    %c0_i32 = arith.constant 0 : i32
    %c0_i32_0 = arith.constant 0 : i32
    %c0_i32_1 = arith.constant 0 : i32
    return %c0_i32, %c0_i32_0 : i32, i32
  }
  func.func @transform_10(%arg0: i32) -> (i32, i32) {
    %c0_i32 = arith.constant 0 : i32
    %c0_i32_0 = arith.constant 0 : i32
    %c0_i32_1 = arith.constant 0 : i32
    return %c0_i32, %c0_i32_0 : i32, i32
  }
  func.func @transform_11(%arg0: i32) -> (i32, i32) {
    %c0_i32 = arith.constant 0 : i32
    %c0_i32_0 = arith.constant 0 : i32
    %c0_i32_1 = arith.constant 0 : i32
    return %c0_i32, %c0_i32_0 : i32, i32
  }
  func.func @transform_12(%arg0: i32) -> (i32, i32) {
    %c0_i32 = arith.constant 0 : i32
    %c0_i32_0 = arith.constant 0 : i32
    %c0_i32_1 = arith.constant 0 : i32
    return %c0_i32, %c0_i32_0 : i32, i32
  }
  func.func @transform_13(%arg0: i32) -> (i32, i32) {
    %c0_i32 = arith.constant 0 : i32
    %c0_i32_0 = arith.constant 0 : i32
    %c0_i32_1 = arith.constant 0 : i32
    return %c0_i32, %c0_i32_0 : i32, i32
  }
  func.func @transform_14(%arg0: i32) -> (i32, i32) {
    %c0_i32 = arith.constant 0 : i32
    %c0_i32_0 = arith.constant 0 : i32
    %c0_i32_1 = arith.constant 0 : i32
    return %c0_i32, %c0_i32_0 : i32, i32
  }
  func.func @transform_15(%arg0: i32) -> (i32, i32) {
    %c0_i32 = arith.constant 0 : i32
    %c0_i32_0 = arith.constant 0 : i32
    %c0_i32_1 = arith.constant 0 : i32
    return %c0_i32, %c0_i32_0 : i32, i32
  }
  func.func @transform_16(%arg0: i32) -> (i32, i32) {
    %c0_i32 = arith.constant 0 : i32
    %c0_i32_0 = arith.constant 0 : i32
    %c0_i32_1 = arith.constant 0 : i32
    return %c0_i32, %c0_i32_0 : i32, i32
  }
  func.func @transform_17(%arg0: i32) -> (i32, i32) {
    %c0_i32 = arith.constant 0 : i32
    %c0_i32_0 = arith.constant 0 : i32
    %c0_i32_1 = arith.constant 0 : i32
    return %c0_i32, %c0_i32_0 : i32, i32
  }
  func.func @transform_18(%arg0: i32) -> (i32, i32) {
    %c0_i32 = arith.constant 0 : i32
    %c0_i32_0 = arith.constant 0 : i32
    %c0_i32_1 = arith.constant 0 : i32
    return %c0_i32, %c0_i32_0 : i32, i32
  }
  func.func @transform_19(%arg0: i32) -> (i32, i32) {
    %c0_i32 = arith.constant 0 : i32
    %c0_i32_0 = arith.constant 0 : i32
    return %arg0, %c0_i32 : i32, i32
  }
  func.func @transform_20(%arg0: i32) -> (i32, i32) {
    %c0_i32 = arith.constant 0 : i32
    %c0_i32_0 = arith.constant 0 : i32
    return %arg0, %c0_i32 : i32, i32
  }
}

</mosaic_0001>

<llo_original>
// kernel: deepae_forward.1
$region0: #{deepae_forward.1}
  #allocation0 [shape = 'u32[]', space=smem, size = 0x4, offset = 0x4, fixed_abs, tag = 'smem constant byte address 0x4 - core index']
  #allocation1 [shape = 'u32[72,128]{1,0:T(1,128)}', space=vmem, size = 0x9000, scoped, tag = 'internal scratch']
  %s0 = inlined_call_operand.vmem [shape: f32[8,1152], index: 0, kind: input, shape index: {}]
  %s1 = inlined_call_operand.vmem [shape: bf16[1152,512], index: 1, kind: input, shape index: {}]
  %s2 = inlined_call_operand.vmem [shape: f32[1,512], index: 2, kind: input, shape index: {}]
  %s3 = inlined_call_operand.vmem [shape: bf16[512,256], index: 3, kind: input, shape index: {}]
  %s4 = inlined_call_operand.vmem [shape: f32[1,256], index: 4, kind: input, shape index: {}]
  %s5 = inlined_call_operand.vmem [shape: bf16[256,128], index: 5, kind: input, shape index: {}]
  %s6 = inlined_call_operand.vmem [shape: f32[1,128], index: 6, kind: input, shape index: {}]
  %s7 = inlined_call_operand.vmem [shape: bf16[128,128], index: 7, kind: input, shape index: {}]
  %s8 = inlined_call_operand.vmem [shape: f32[1,128], index: 8, kind: input, shape index: {}]
  %s9 = inlined_call_operand.vmem [shape: bf16[128,128], index: 9, kind: input, shape index: {}]
  %s10 = inlined_call_operand.vmem [shape: f32[1,128], index: 10, kind: input, shape index: {}]
  %s11 = inlined_call_operand.vmem [shape: bf16[128,128], index: 11, kind: input, shape index: {}]
  %s12 = inlined_call_operand.vmem [shape: f32[1,128], index: 12, kind: input, shape index: {}]
  %s13 = inlined_call_operand.vmem [shape: bf16[128,128], index: 13, kind: input, shape index: {}]
  %s14 = inlined_call_operand.vmem [shape: f32[1,128], index: 14, kind: input, shape index: {}]
  %s15 = inlined_call_operand.vmem [shape: bf16[128,256], index: 15, kind: input, shape index: {}]
  %s16 = inlined_call_operand.vmem [shape: f32[1,256], index: 16, kind: input, shape index: {}]
  %s17 = inlined_call_operand.vmem [shape: bf16[256,1152], index: 17, kind: input, shape index: {}]
  %s18 = inlined_call_operand.vmem [shape: f32[1,1152], index: 18, kind: input, shape index: {}]
  %s19 = inlined_call_operand.hbm [shape: f32[8,1152], index: 19, kind: output, shape index: {0}]
  %s20 = inlined_call_operand.hbm [shape: f32[8,128], index: 20, kind: output, shape index: {1}]
  %21 = xla_tuple %s19, %s20
  %s22 = sld [smem:[#allocation0]]
  $region94: #{deepae_forward.1} parent=0
    _
  %s24 = ssub.s32 1, %s22
  %s25 = scalar_select 0, %s24, %s22
  $region1: #{deepae_forward.1} parent=0
    #allocation2 [shape = 'u8[36864]{0}', space=vmem, size = 0x9000, scoped, tag = 'output window, operand 0, single buffered']
    #allocation3 [shape = 's32[1]{0}', space=sflag, size = 0x4, scoped, tag = 'scoped memory for deepae_forward.1']
    #allocation4 [shape = 'u8[4096]{0}', space=vmem, size = 0x1000, scoped, tag = 'output window, operand 1, single buffered']
    #allocation5 [shape = 's32[1]{0}', space=sflag, size = 0x4, scoped, tag = 'scoped memory for deepae_forward.1']
    %26 = vsyncpa [#allocation3], 0
    %27 = vsyncpa [#allocation5], 0
    // Predicated region
    $region2: #{deepae_forward.1} parent=1 // pred_check
      _
    $region3: #{deepae_forward.1} parent=1 // pred_check_branch
      %29 = sbr.rel (0) target = $region5
    $region4: #{deepae_forward.1} parent=1 // pred_region
      _
    $region5: #{deepae_forward.1} parent=1 // pred_fallthru
      _
    // Predicated region
    $region6: #{deepae_forward.1} parent=1 // pred_check
      _
    $region7: #{deepae_forward.1} parent=1 // pred_check_branch
      %31 = sbr.rel (0) target = $region9
    $region8: #{deepae_forward.1} parent=1 // pred_region
      _
    $region9: #{deepae_forward.1} parent=1 // pred_fallthru
      _
    // Predicated region
    $region10: #{deepae_forward.1} parent=1 // pred_check
      _
    $region11: #{deepae_forward.1} parent=1 // pred_check_branch
      %33 = sbr.rel (0) target = $region13
    $region12: #{deepae_forward.1} parent=1 // pred_region
      _
    $region13: #{deepae_forward.1} parent=1 // pred_fallthru
      _
    // Predicated region
    $region14: #{deepae_forward.1} parent=1 // pred_check
      _
    $region15: #{deepae_forward.1} parent=1 // pred_check_branch
      %35 = sbr.rel (0) target = $region17
    $region16: #{deepae_forward.1} parent=1 // pred_region
      _
    $region17: #{deepae_forward.1} parent=1 // pred_fallthru
      _
    // Predicated region
    $region18: #{deepae_forward.1} parent=1 // pred_check
      _
    $region19: #{deepae_forward.1} parent=1 // pred_check_branch
      %37 = sbr.rel (0) target = $region21
    $region20: #{deepae_forward.1} parent=1 // pred_region
      _
    $region21: #{deepae_forward.1} parent=1 // pred_fallthru
      _
    // Predicated region
    $region22: #{deepae_forward.1} parent=1 // pred_check
      _
    $region23: #{deepae_forward.1} parent=1 // pred_check_branch
      %39 = sbr.rel (0) target = $region25
    $region24: #{deepae_forward.1} parent=1 // pred_region
      _
    $region25: #{deepae_forward.1} parent=1 // pred_fallthru
      _
    // Predicated region
    $region26: #{deepae_forward.1} parent=1 // pred_check
      _
    $region27: #{deepae_forward.1} parent=1 // pred_check_branch
      %41 = sbr.rel (0) target = $region29
    $region28: #{deepae_forward.1} parent=1 // pred_region
      _
    $region29: #{deepae_forward.1} parent=1 // pred_fallthru
      _
    // Predicated region
    $region30: #{deepae_forward.1} parent=1 // pred_check
      _
    $region31: #{deepae_forward.1} parent=1 // pred_check_branch
      %43 = sbr.rel (0) target = $region33
    $region32: #{deepae_forward.1} parent=1 // pred_region
      _
    $region33: #{deepae_forward.1} parent=1 // pred_fallthru
      _
    // Predicated region
    $region34: #{deepae_forward.1} parent=1 // pred_check
      _
    $region35: #{deepae_forward.1} parent=1 // pred_check_branch
      %45 = sbr.rel (0) target = $region37
    $region36: #{deepae_forward.1} parent=1 // pred_region
      _
    $region37: #{deepae_forward.1} parent=1 // pred_fallthru
      _
    // Predicated region
    $region38: #{deepae_forward.1} parent=1 // pred_check
      _
    $region39: #{deepae_forward.1} parent=1 // pred_check_branch
      %47 = sbr.rel (0) target = $region41
    $region40: #{deepae_forward.1} parent=1 // pred_region
      _
    $region41: #{deepae_forward.1} parent=1 // pred_fallthru
      _
    // Predicated region
    $region42: #{deepae_forward.1} parent=1 // pred_check
      _
    $region43: #{deepae_forward.1} parent=1 // pred_check_branch
      %49 = sbr.rel (0) target = $region45
    $region44: #{deepae_forward.1} parent=1 // pred_region
      _
    $region45: #{deepae_forward.1} parent=1 // pred_fallthru
      _
    // Predicated region
    $region46: #{deepae_forward.1} parent=1 // pred_check
      _
    $region47: #{deepae_forward.1} parent=1 // pred_check_branch
      %51 = sbr.rel (0) target = $region49
    $region48: #{deepae_forward.1} parent=1 // pred_region
      _
    $region49: #{deepae_forward.1} parent=1 // pred_fallthru
      _
    // Predicated region
    $region50: #{deepae_forward.1} parent=1 // pred_check
      _
    $region51: #{deepae_forward.1} parent=1 // pred_check_branch
      %53 = sbr.rel (0) target = $region53
    $region52: #{deepae_forward.1} parent=1 // pred_region
      _
    $region53: #{deepae_forward.1} parent=1 // pred_fallthru
      _
    // Predicated region
    $region54: #{deepae_forward.1} parent=1 // pred_check
      _
    $region55: #{deepae_forward.1} parent=1 // pred_check_branch
      %55 = sbr.rel (0) target = $region57
    $region56: #{deepae_forward.1} parent=1 // pred_region
      _
    $region57: #{deepae_forward.1} parent=1 // pred_fallthru
      _
    // Predicated region
    $region58: #{deepae_forward.1} parent=1 // pred_check
      _
    $region59: #{deepae_forward.1} parent=1 // pred_check_branch
      %57 = sbr.rel (0) target = $region61
    $region60: #{deepae_forward.1} parent=1 // pred_region
      _
    $region61: #{deepae_forward.1} parent=1 // pred_fallthru
      _
    // Predicated region
    $region62: #{deepae_forward.1} parent=1 // pred_check
      _
    $region63: #{deepae_forward.1} parent=1 // pred_check_branch
      %59 = sbr.rel (0) target = $region65
    $region64: #{deepae_forward.1} parent=1 // pred_region
      _
    $region65: #{deepae_forward.1} parent=1 // pred_fallthru
      _
    // Predicated region
    $region66: #{deepae_forward.1} parent=1 // pred_check
      _
    $region67: #{deepae_forward.1} parent=1 // pred_check_branch
      %61 = sbr.rel (0) target = $region69
    $region68: #{deepae_forward.1} parent=1 // pred_region
      _
    $region69: #{deepae_forward.1} parent=1 // pred_fallthru
      _
    // Predicated region
    $region70: #{deepae_forward.1} parent=1 // pred_check
      _
    $region71: #{deepae_forward.1} parent=1 // pred_check_branch
      %63 = sbr.rel (0) target = $region73
    $region72: #{deepae_forward.1} parent=1 // pred_region
      _
    $region73: #{deepae_forward.1} parent=1 // pred_fallthru
      _
    // Predicated region
    $region74: #{deepae_forward.1} parent=1 // pred_check
      _
    $region75: #{deepae_forward.1} parent=1 // pred_check_branch
      %65 = sbr.rel (0) target = $region77
    $region76: #{deepae_forward.1} parent=1 // pred_region
      _
    $region77: #{deepae_forward.1} parent=1 // pred_fallthru
      _
    %v66 = vld [vmem:[%s0] sm:$0xff]
    %v67 = vld [vmem:[%s0 + $0x8] sm:$0xff]
    %v68 = vld [vmem:[%s0 + $0x10] sm:$0xff]
    %v69 = vld [vmem:[%s0 + $0x18] sm:$0xff]
    %v70 = vld [vmem:[%s0 + $0x20] sm:$0xff]
    %v71 = vld [vmem:[%s0 + $0x28] sm:$0xff]
    %v72 = vld [vmem:[%s0 + $0x30] sm:$0xff]
    %v73 = vld [vmem:[%s0 + $0x38] sm:$0xff]
    %v74 = vld [vmem:[%s0 + $0x40] sm:$0xff]
    %v75 = vpack.c.bf16 %v66, %v66
    %v76 = vpack.c.bf16 %v67, %v67
    %v77 = vpack.c.bf16 %v68, %v68
    %v78 = vpack.c.bf16 %v69, %v69
    %v79 = vpack.c.bf16 %v70, %v70
    %v80 = vpack.c.bf16 %v71, %v71
    %v81 = vpack.c.bf16 %v72, %v72
    %v82 = vpack.c.bf16 %v73, %v73
    %v83 = vpack.c.bf16 %v74, %v74
    %v84 = vld [vmem:[%s1] sm:$0xff]
    %v85 = vld [vmem:[%s1 + $0x8] sm:$0xff]
    %v86 = vld [vmem:[%s1 + $0x10] sm:$0xff]
    %v87 = vld [vmem:[%s1 + $0x18] sm:$0xff]
    %v88 = vld [vmem:[%s1 + $0x20] sm:$0xff]
    %v89 = vld [vmem:[%s1 + $0x28] sm:$0xff]
    %v90 = vld [vmem:[%s1 + $0x30] sm:$0xff]
    %v91 = vld [vmem:[%s1 + $0x38] sm:$0xff]
    %v92 = vld [vmem:[%s1 + $0x40] sm:$0xff]
    %v93 = vld [vmem:[%s1 + $0x48] sm:$0xff]
    %v94 = vld [vmem:[%s1 + $0x50] sm:$0xff]
    %v95 = vld [vmem:[%s1 + $0x58] sm:$0xff]
    %v96 = vld [vmem:[%s1 + $0x60] sm:$0xff]
    %v97 = vld [vmem:[%s1 + $0x68] sm:$0xff]
    %v98 = vld [vmem:[%s1 + $0x70] sm:$0xff]
    %v99 = vld [vmem:[%s1 + $0x78] sm:$0xff]
    %v100 = vld [vmem:[%s1 + $0x80] sm:$0xff]
    %v101 = vld [vmem:[%s1 + $0x88] sm:$0xff]
    %v102 = vld [vmem:[%s1 + $0x90] sm:$0xff]
    %v103 = vld [vmem:[%s1 + $0x98] sm:$0xff]
    %v104 = vld [vmem:[%s1 + $0xa0] sm:$0xff]
    %v105 = vld [vmem:[%s1 + $0xa8] sm:$0xff]
    %v106 = vld [vmem:[%s1 + $0xb0] sm:$0xff]
    %v107 = vld [vmem:[%s1 + $0xb8] sm:$0xff]
    %v108 = vld [vmem:[%s1 + $0xc0] sm:$0xff]
    %v109 = vld [vmem:[%s1 + $0xc8] sm:$0xff]
    %v110 = vld [vmem:[%s1 + $0xd0] sm:$0xff]
    %v111 = vld [vmem:[%s1 + $0xd8] sm:$0xff]
    %v112 = vld [vmem:[%s1 + $0xe0] sm:$0xff]
    %v113 = vld [vmem:[%s1 + $0xe8] sm:$0xff]
    %v114 = vld [vmem:[%s1 + $0xf0] sm:$0xff]
    %v115 = vld [vmem:[%s1 + $0xf8] sm:$0xff]
    %v116 = vld [vmem:[%s1 + $0x100] sm:$0xff]
    %v117 = vld [vmem:[%s1 + $0x108] sm:$0xff]
    %v118 = vld [vmem:[%s1 + $0x110] sm:$0xff]
    %v119 = vld [vmem:[%s1 + $0x118] sm:$0xff]
    %v120 = vld [vmem:[%s1 + $0x120] sm:$0xff]
    %v121 = vld [vmem:[%s1 + $0x128] sm:$0xff]
    %v122 = vld [vmem:[%s1 + $0x130] sm:$0xff]
    %v123 = vld [vmem:[%s1 + $0x138] sm:$0xff]
    %v124 = vld [vmem:[%s1 + $0x140] sm:$0xff]
    %v125 = vld [vmem:[%s1 + $0x148] sm:$0xff]
    %v126 = vld [vmem:[%s1 + $0x150] sm:$0xff]
    %v127 = vld [vmem:[%s1 + $0x158] sm:$0xff]
    %v128 = vld [vmem:[%s1 + $0x160] sm:$0xff]
    %v129 = vld [vmem:[%s1 + $0x168] sm:$0xff]
    %v130 = vld [vmem:[%s1 + $0x170] sm:$0xff]
    %v131 = vld [vmem:[%s1 + $0x178] sm:$0xff]
    %v132 = vld [vmem:[%s1 + $0x180] sm:$0xff]
    %v133 = vld [vmem:[%s1 + $0x188] sm:$0xff]
    %v134 = vld [vmem:[%s1 + $0x190] sm:$0xff]
    %v135 = vld [vmem:[%s1 + $0x198] sm:$0xff]
    %v136 = vld [vmem:[%s1 + $0x1a0] sm:$0xff]
    %v137 = vld [vmem:[%s1 + $0x1a8] sm:$0xff]
    %v138 = vld [vmem:[%s1 + $0x1b0] sm:$0xff]
    %v139 = vld [vmem:[%s1 + $0x1b8] sm:$0xff]
    %v140 = vld [vmem:[%s1 + $0x1c0] sm:$0xff]
    %v141 = vld [vmem:[%s1 + $0x1c8] sm:$0xff]
    %v142 = vld [vmem:[%s1 + $0x1d0] sm:$0xff]
    %v143 = vld [vmem:[%s1 + $0x1d8] sm:$0xff]
    %v144 = vld [vmem:[%s1 + $0x1e0] sm:$0xff]
    %v145 = vld [vmem:[%s1 + $0x1e8] sm:$0xff]
    %v146 = vld [vmem:[%s1 + $0x1f0] sm:$0xff]
    %v147 = vld [vmem:[%s1 + $0x1f8] sm:$0xff]
    %v148 = vld [vmem:[%s1 + $0x200] sm:$0xff]
    %v149 = vld [vmem:[%s1 + $0x208] sm:$0xff]
    %v150 = vld [vmem:[%s1 + $0x210] sm:$0xff]
    %v151 = vld [vmem:[%s1 + $0x218] sm:$0xff]
    %v152 = vld [vmem:[%s1 + $0x220] sm:$0xff]
    %v153 = vld [vmem:[%s1 + $0x228] sm:$0xff]
    %v154 = vld [vmem:[%s1 + $0x230] sm:$0xff]
    %v155 = vld [vmem:[%s1 + $0x238] sm:$0xff]
    %v156 = vld [vmem:[%s1 + $0x240] sm:$0xff]
    %v157 = vld [vmem:[%s1 + $0x248] sm:$0xff]
    %v158 = vld [vmem:[%s1 + $0x250] sm:$0xff]
    %v159 = vld [vmem:[%s1 + $0x258] sm:$0xff]
    %v160 = vld [vmem:[%s1 + $0x260] sm:$0xff]
    %v161 = vld [vmem:[%s1 + $0x268] sm:$0xff]
    %v162 = vld [vmem:[%s1 + $0x270] sm:$0xff]
    %v163 = vld [vmem:[%s1 + $0x278] sm:$0xff]
    %v164 = vld [vmem:[%s1 + $0x280] sm:$0xff]
    %v165 = vld [vmem:[%s1 + $0x288] sm:$0xff]
    %v166 = vld [vmem:[%s1 + $0x290] sm:$0xff]
    %v167 = vld [vmem:[%s1 + $0x298] sm:$0xff]
    %v168 = vld [vmem:[%s1 + $0x2a0] sm:$0xff]
    %v169 = vld [vmem:[%s1 + $0x2a8] sm:$0xff]
    %v170 = vld [vmem:[%s1 + $0x2b0] sm:$0xff]
    %v171 = vld [vmem:[%s1 + $0x2b8] sm:$0xff]
    %v172 = vld [vmem:[%s1 + $0x2c0] sm:$0xff]
    %v173 = vld [vmem:[%s1 + $0x2c8] sm:$0xff]
    %v174 = vld [vmem:[%s1 + $0x2d0] sm:$0xff]
    %v175 = vld [vmem:[%s1 + $0x2d8] sm:$0xff]
    %v176 = vld [vmem:[%s1 + $0x2e0] sm:$0xff]
    %v177 = vld [vmem:[%s1 + $0x2e8] sm:$0xff]
    %v178 = vld [vmem:[%s1 + $0x2f0] sm:$0xff]
    %v179 = vld [vmem:[%s1 + $0x2f8] sm:$0xff]
    %v180 = vld [vmem:[%s1 + $0x300] sm:$0xff]
    %v181 = vld [vmem:[%s1 + $0x308] sm:$0xff]
    %v182 = vld [vmem:[%s1 + $0x310] sm:$0xff]
    %v183 = vld [vmem:[%s1 + $0x318] sm:$0xff]
    %v184 = vld [vmem:[%s1 + $0x320] sm:$0xff]
    %v185 = vld [vmem:[%s1 + $0x328] sm:$0xff]
    %v186 = vld [vmem:[%s1 + $0x330] sm:$0xff]
    %v187 = vld [vmem:[%s1 + $0x338] sm:$0xff]
    %v188 = vld [vmem:[%s1 + $0x340] sm:$0xff]
    %v189 = vld [vmem:[%s1 + $0x348] sm:$0xff]
    %v190 = vld [vmem:[%s1 + $0x350] sm:$0xff]
    %v191 = vld [vmem:[%s1 + $0x358] sm:$0xff]
    %v192 = vld [vmem:[%s1 + $0x360] sm:$0xff]
    %v193 = vld [vmem:[%s1 + $0x368] sm:$0xff]
    %v194 = vld [vmem:[%s1 + $0x370] sm:$0xff]
    %v195 = vld [vmem:[%s1 + $0x378] sm:$0xff]
    %v196 = vld [vmem:[%s1 + $0x380] sm:$0xff]
    %v197 = vld [vmem:[%s1 + $0x388] sm:$0xff]
    %v198 = vld [vmem:[%s1 + $0x390] sm:$0xff]
    %v199 = vld [vmem:[%s1 + $0x398] sm:$0xff]
    %v200 = vld [vmem:[%s1 + $0x3a0] sm:$0xff]
    %v201 = vld [vmem:[%s1 + $0x3a8] sm:$0xff]
    %v202 = vld [vmem:[%s1 + $0x3b0] sm:$0xff]
    %v203 = vld [vmem:[%s1 + $0x3b8] sm:$0xff]
    %v204 = vld [vmem:[%s1 + $0x3c0] sm:$0xff]
    %v205 = vld [vmem:[%s1 + $0x3c8] sm:$0xff]
    %v206 = vld [vmem:[%s1 + $0x3d0] sm:$0xff]
    %v207 = vld [vmem:[%s1 + $0x3d8] sm:$0xff]
    %v208 = vld [vmem:[%s1 + $0x3e0] sm:$0xff]
    %v209 = vld [vmem:[%s1 + $0x3e8] sm:$0xff]
    %v210 = vld [vmem:[%s1 + $0x3f0] sm:$0xff]
    %v211 = vld [vmem:[%s1 + $0x3f8] sm:$0xff]
    %v212 = vld [vmem:[%s1 + $0x400] sm:$0xff]
    %v213 = vld [vmem:[%s1 + $0x408] sm:$0xff]
    %v214 = vld [vmem:[%s1 + $0x410] sm:$0xff]
    %v215 = vld [vmem:[%s1 + $0x418] sm:$0xff]
    %v216 = vld [vmem:[%s1 + $0x420] sm:$0xff]
    %v217 = vld [vmem:[%s1 + $0x428] sm:$0xff]
    %v218 = vld [vmem:[%s1 + $0x430] sm:$0xff]
    %v219 = vld [vmem:[%s1 + $0x438] sm:$0xff]
    %v220 = vld [vmem:[%s1 + $0x440] sm:$0xff]
    %v221 = vld [vmem:[%s1 + $0x448] sm:$0xff]
    %v222 = vld [vmem:[%s1 + $0x450] sm:$0xff]
    %v223 = vld [vmem:[%s1 + $0x458] sm:$0xff]
    %v224 = vld [vmem:[%s1 + $0x460] sm:$0xff]
    %v225 = vld [vmem:[%s1 + $0x468] sm:$0xff]
    %v226 = vld [vmem:[%s1 + $0x470] sm:$0xff]
    %v227 = vld [vmem:[%s1 + $0x478] sm:$0xff]
    %v228 = vld [vmem:[%s1 + $0x480] sm:$0xff]
    %v229 = vld [vmem:[%s1 + $0x488] sm:$0xff]
    %v230 = vld [vmem:[%s1 + $0x490] sm:$0xff]
    %v231 = vld [vmem:[%s1 + $0x498] sm:$0xff]
    %v232 = vld [vmem:[%s1 + $0x4a0] sm:$0xff]
    %v233 = vld [vmem:[%s1 + $0x4a8] sm:$0xff]
    %v234 = vld [vmem:[%s1 + $0x4b0] sm:$0xff]
    %v235 = vld [vmem:[%s1 + $0x4b8] sm:$0xff]
    %v236 = vld [vmem:[%s1 + $0x4c0] sm:$0xff]
    %v237 = vld [vmem:[%s1 + $0x4c8] sm:$0xff]
    %v238 = vld [vmem:[%s1 + $0x4d0] sm:$0xff]
    %v239 = vld [vmem:[%s1 + $0x4d8] sm:$0xff]
    %v240 = vld [vmem:[%s1 + $0x4e0] sm:$0xff]
    %v241 = vld [vmem:[%s1 + $0x4e8] sm:$0xff]
    %v242 = vld [vmem:[%s1 + $0x4f0] sm:$0xff]
    %v243 = vld [vmem:[%s1 + $0x4f8] sm:$0xff]
    %v244 = vld [vmem:[%s1 + $0x500] sm:$0xff]
    %v245 = vld [vmem:[%s1 + $0x508] sm:$0xff]
    %v246 = vld [vmem:[%s1 + $0x510] sm:$0xff]
    %v247 = vld [vmem:[%s1 + $0x518] sm:$0xff]
    %v248 = vld [vmem:[%s1 + $0x520] sm:$0xff]
    %v249 = vld [vmem:[%s1 + $0x528] sm:$0xff]
    %v250 = vld [vmem:[%s1 + $0x530] sm:$0xff]
    %v251 = vld [vmem:[%s1 + $0x538] sm:$0xff]
    %v252 = vld [vmem:[%s1 + $0x540] sm:$0xff]
    %v253 = vld [vmem:[%s1 + $0x548] sm:$0xff]
    %v254 = vld [vmem:[%s1 + $0x550] sm:$0xff]
    %v255 = vld [vmem:[%s1 + $0x558] sm:$0xff]
    %v256 = vld [vmem:[%s1 + $0x560] sm:$0xff]
    %v257 = vld [vmem:[%s1 + $0x568] sm:$0xff]
    %v258 = vld [vmem:[%s1 + $0x570] sm:$0xff]
    %v259 = vld [vmem:[%s1 + $0x578] sm:$0xff]
    %v260 = vld [vmem:[%s1 + $0x580] sm:$0xff]
    %v261 = vld [vmem:[%s1 + $0x588] sm:$0xff]
    %v262 = vld [vmem:[%s1 + $0x590] sm:$0xff]
    %v263 = vld [vmem:[%s1 + $0x598] sm:$0xff]
    %v264 = vld [vmem:[%s1 + $0x5a0] sm:$0xff]
    %v265 = vld [vmem:[%s1 + $0x5a8] sm:$0xff]
    %v266 = vld [vmem:[%s1 + $0x5b0] sm:$0xff]
    %v267 = vld [vmem:[%s1 + $0x5b8] sm:$0xff]
    %v268 = vld [vmem:[%s1 + $0x5c0] sm:$0xff]
    %v269 = vld [vmem:[%s1 + $0x5c8] sm:$0xff]
    %v270 = vld [vmem:[%s1 + $0x5d0] sm:$0xff]
    %v271 = vld [vmem:[%s1 + $0x5d8] sm:$0xff]
    %v272 = vld [vmem:[%s1 + $0x5e0] sm:$0xff]
    %v273 = vld [vmem:[%s1 + $0x5e8] sm:$0xff]
    %v274 = vld [vmem:[%s1 + $0x5f0] sm:$0xff]
    %v275 = vld [vmem:[%s1 + $0x5f8] sm:$0xff]
    %v276 = vld [vmem:[%s1 + $0x600] sm:$0xff]
    %v277 = vld [vmem:[%s1 + $0x608] sm:$0xff]
    %v278 = vld [vmem:[%s1 + $0x610] sm:$0xff]
    %v279 = vld [vmem:[%s1 + $0x618] sm:$0xff]
    %v280 = vld [vmem:[%s1 + $0x620] sm:$0xff]
    %v281 = vld [vmem:[%s1 + $0x628] sm:$0xff]
    %v282 = vld [vmem:[%s1 + $0x630] sm:$0xff]
    %v283 = vld [vmem:[%s1 + $0x638] sm:$0xff]
    %v284 = vld [vmem:[%s1 + $0x640] sm:$0xff]
    %v285 = vld [vmem:[%s1 + $0x648] sm:$0xff]
    %v286 = vld [vmem:[%s1 + $0x650] sm:$0xff]
    %v287 = vld [vmem:[%s1 + $0x658] sm:$0xff]
    %v288 = vld [vmem:[%s1 + $0x660] sm:$0xff]
    %v289 = vld [vmem:[%s1 + $0x668] sm:$0xff]
    %v290 = vld [vmem:[%s1 + $0x670] sm:$0xff]
    %v291 = vld [vmem:[%s1 + $0x678] sm:$0xff]
    %v292 = vld [vmem:[%s1 + $0x680] sm:$0xff]
    %v293 = vld [vmem:[%s1 + $0x688] sm:$0xff]
    %v294 = vld [vmem:[%s1 + $0x690] sm:$0xff]
    %v295 = vld [vmem:[%s1 + $0x698] sm:$0xff]
    %v296 = vld [vmem:[%s1 + $0x6a0] sm:$0xff]
    %v297 = vld [vmem:[%s1 + $0x6a8] sm:$0xff]
    %v298 = vld [vmem:[%s1 + $0x6b0] sm:$0xff]
    %v299 = vld [vmem:[%s1 + $0x6b8] sm:$0xff]
    %v300 = vld [vmem:[%s1 + $0x6c0] sm:$0xff]
    %v301 = vld [vmem:[%s1 + $0x6c8] sm:$0xff]
    %v302 = vld [vmem:[%s1 + $0x6d0] sm:$0xff]
    %v303 = vld [vmem:[%s1 + $0x6d8] sm:$0xff]
    %v304 = vld [vmem:[%s1 + $0x6e0] sm:$0xff]
    %v305 = vld [vmem:[%s1 + $0x6e8] sm:$0xff]
    %v306 = vld [vmem:[%s1 + $0x6f0] sm:$0xff]
    %v307 = vld [vmem:[%s1 + $0x6f8] sm:$0xff]
    %v308 = vld [vmem:[%s1 + $0x700] sm:$0xff]
    %v309 = vld [vmem:[%s1 + $0x708] sm:$0xff]
    %v310 = vld [vmem:[%s1 + $0x710] sm:$0xff]
    %v311 = vld [vmem:[%s1 + $0x718] sm:$0xff]
    %v312 = vld [vmem:[%s1 + $0x720] sm:$0xff]
    %v313 = vld [vmem:[%s1 + $0x728] sm:$0xff]
    %v314 = vld [vmem:[%s1 + $0x730] sm:$0xff]
    %v315 = vld [vmem:[%s1 + $0x738] sm:$0xff]
    %v316 = vld [vmem:[%s1 + $0x740] sm:$0xff]
    %v317 = vld [vmem:[%s1 + $0x748] sm:$0xff]
    %v318 = vld [vmem:[%s1 + $0x750] sm:$0xff]
    %v319 = vld [vmem:[%s1 + $0x758] sm:$0xff]
    %v320 = vld [vmem:[%s1 + $0x760] sm:$0xff]
    %v321 = vld [vmem:[%s1 + $0x768] sm:$0xff]
    %v322 = vld [vmem:[%s1 + $0x770] sm:$0xff]
    %v323 = vld [vmem:[%s1 + $0x778] sm:$0xff]
    %v324 = vld [vmem:[%s1 + $0x780] sm:$0xff]
    %v325 = vld [vmem:[%s1 + $0x788] sm:$0xff]
    %v326 = vld [vmem:[%s1 + $0x790] sm:$0xff]
    %v327 = vld [vmem:[%s1 + $0x798] sm:$0xff]
    %v328 = vld [vmem:[%s1 + $0x7a0] sm:$0xff]
    %v329 = vld [vmem:[%s1 + $0x7a8] sm:$0xff]
    %v330 = vld [vmem:[%s1 + $0x7b0] sm:$0xff]
    %v331 = vld [vmem:[%s1 + $0x7b8] sm:$0xff]
    %v332 = vld [vmem:[%s1 + $0x7c0] sm:$0xff]
    %v333 = vld [vmem:[%s1 + $0x7c8] sm:$0xff]
    %v334 = vld [vmem:[%s1 + $0x7d0] sm:$0xff]
    %v335 = vld [vmem:[%s1 + $0x7d8] sm:$0xff]
    %v336 = vld [vmem:[%s1 + $0x7e0] sm:$0xff]
    %v337 = vld [vmem:[%s1 + $0x7e8] sm:$0xff]
    %v338 = vld [vmem:[%s1 + $0x7f0] sm:$0xff]
    %v339 = vld [vmem:[%s1 + $0x7f8] sm:$0xff]
    %v340 = vld [vmem:[%s1 + $0x800] sm:$0xff]
    %v341 = vld [vmem:[%s1 + $0x808] sm:$0xff]
    %v342 = vld [vmem:[%s1 + $0x810] sm:$0xff]
    %v343 = vld [vmem:[%s1 + $0x818] sm:$0xff]
    %v344 = vld [vmem:[%s1 + $0x820] sm:$0xff]
    %v345 = vld [vmem:[%s1 + $0x828] sm:$0xff]
    %v346 = vld [vmem:[%s1 + $0x830] sm:$0xff]
    %v347 = vld [vmem:[%s1 + $0x838] sm:$0xff]
    %v348 = vld [vmem:[%s1 + $0x840] sm:$0xff]
    %v349 = vld [vmem:[%s1 + $0x848] sm:$0xff]
    %v350 = vld [vmem:[%s1 + $0x850] sm:$0xff]
    %v351 = vld [vmem:[%s1 + $0x858] sm:$0xff]
    %v352 = vld [vmem:[%s1 + $0x860] sm:$0xff]
    %v353 = vld [vmem:[%s1 + $0x868] sm:$0xff]
    %v354 = vld [vmem:[%s1 + $0x870] sm:$0xff]
    %v355 = vld [vmem:[%s1 + $0x878] sm:$0xff]
    %v356 = vld [vmem:[%s1 + $0x880] sm:$0xff]
    %v357 = vld [vmem:[%s1 + $0x888] sm:$0xff]
    %v358 = vld [vmem:[%s1 + $0x890] sm:$0xff]
    %v359 = vld [vmem:[%s1 + $0x898] sm:$0xff]
    %v360 = vld [vmem:[%s1 + $0x8a0] sm:$0xff]
    %v361 = vld [vmem:[%s1 + $0x8a8] sm:$0xff]
    %v362 = vld [vmem:[%s1 + $0x8b0] sm:$0xff]
    %v363 = vld [vmem:[%s1 + $0x8b8] sm:$0xff]
    %v364 = vld [vmem:[%s1 + $0x8c0] sm:$0xff]
    %v365 = vld [vmem:[%s1 + $0x8c8] sm:$0xff]
    %v366 = vld [vmem:[%s1 + $0x8d0] sm:$0xff]
    %v367 = vld [vmem:[%s1 + $0x8d8] sm:$0xff]
    %v368 = vld [vmem:[%s1 + $0x8e0] sm:$0xff]
    %v369 = vld [vmem:[%s1 + $0x8e8] sm:$0xff]
    %v370 = vld [vmem:[%s1 + $0x8f0] sm:$0xff]
    %v371 = vld [vmem:[%s1 + $0x8f8] sm:$0xff]
    %v372 = vld [vmem:[%s2] sm:$0xf]
    %v374 = vperm.slane %v372, 0
    %v375 = vperm.slane %v372, 1
    %v376 = vperm.slane %v372, 2
    %v377 = vperm.slane %v372, 3
    %v670 = vunpack.c.l.b16 %v84
    %v671 = vunpack.c.h.b16 %v84
    %v672 = vunpack.c.l.b16 %v85
    %v673 = vunpack.c.h.b16 %v85
    %v674 = vunpack.c.l.b16 %v86
    %v675 = vunpack.c.h.b16 %v86
    %v676 = vunpack.c.l.b16 %v87
    %v677 = vunpack.c.h.b16 %v87
    %v678 = vunpack.c.l.b16 %v88
    %v679 = vunpack.c.h.b16 %v88
    %v680 = vunpack.c.l.b16 %v89
    %v681 = vunpack.c.h.b16 %v89
    %v682 = vunpack.c.l.b16 %v90
    %v683 = vunpack.c.h.b16 %v90
    %v684 = vunpack.c.l.b16 %v91
    %v685 = vunpack.c.h.b16 %v91
    %v686 = vunpack.c.l.b16 %v92
    %v687 = vunpack.c.h.b16 %v92
    %v688 = vunpack.c.l.b16 %v93
    %v689 = vunpack.c.h.b16 %v93
    %v690 = vunpack.c.l.b16 %v94
    %v691 = vunpack.c.h.b16 %v94
    %v692 = vunpack.c.l.b16 %v95
    %v693 = vunpack.c.h.b16 %v95
    %v694 = vunpack.c.l.b16 %v96
    %v695 = vunpack.c.h.b16 %v96
    %v696 = vunpack.c.l.b16 %v97
    %v697 = vunpack.c.h.b16 %v97
    %v698 = vunpack.c.l.b16 %v98
    %v699 = vunpack.c.h.b16 %v98
    %v700 = vunpack.c.l.b16 %v99
    %v701 = vunpack.c.h.b16 %v99
    %v702 = vunpack.c.l.b16 %v100
    %v703 = vunpack.c.h.b16 %v100
    %v704 = vunpack.c.l.b16 %v101
    %v705 = vunpack.c.h.b16 %v101
    %v706 = vunpack.c.l.b16 %v102
    %v707 = vunpack.c.h.b16 %v102
    %v708 = vunpack.c.l.b16 %v103
    %v709 = vunpack.c.h.b16 %v103
    %v710 = vunpack.c.l.b16 %v104
    %v711 = vunpack.c.h.b16 %v104
    %v712 = vunpack.c.l.b16 %v105
    %v713 = vunpack.c.h.b16 %v105
    %v714 = vunpack.c.l.b16 %v106
    %v715 = vunpack.c.h.b16 %v106
    %v716 = vunpack.c.l.b16 %v107
    %v717 = vunpack.c.h.b16 %v107
    %v718 = vunpack.c.l.b16 %v108
    %v719 = vunpack.c.h.b16 %v108
    %v720 = vunpack.c.l.b16 %v109
    %v721 = vunpack.c.h.b16 %v109
    %v722 = vunpack.c.l.b16 %v110
    %v723 = vunpack.c.h.b16 %v110
    %v724 = vunpack.c.l.b16 %v111
    %v725 = vunpack.c.h.b16 %v111
    %v726 = vunpack.c.l.b16 %v112
    %v727 = vunpack.c.h.b16 %v112
    %v728 = vunpack.c.l.b16 %v113
    %v729 = vunpack.c.h.b16 %v113
    %v730 = vunpack.c.l.b16 %v114
    %v731 = vunpack.c.h.b16 %v114
    %v732 = vunpack.c.l.b16 %v115
    %v733 = vunpack.c.h.b16 %v115
    %v734 = vunpack.c.l.b16 %v116
    %v735 = vunpack.c.h.b16 %v116
    %v736 = vunpack.c.l.b16 %v117
    %v737 = vunpack.c.h.b16 %v117
    %v738 = vunpack.c.l.b16 %v118
    %v739 = vunpack.c.h.b16 %v118
    %v740 = vunpack.c.l.b16 %v119
    %v741 = vunpack.c.h.b16 %v119
    %v742 = vunpack.c.l.b16 %v120
    %v743 = vunpack.c.h.b16 %v120
    %v744 = vunpack.c.l.b16 %v121
    %v745 = vunpack.c.h.b16 %v121
    %v746 = vunpack.c.l.b16 %v122
    %v747 = vunpack.c.h.b16 %v122
    %v748 = vunpack.c.l.b16 %v123
    %v749 = vunpack.c.h.b16 %v123
    %v750 = vunpack.c.l.b16 %v124
    %v751 = vunpack.c.h.b16 %v124
    %v752 = vunpack.c.l.b16 %v125
    %v753 = vunpack.c.h.b16 %v125
    %v754 = vunpack.c.l.b16 %v126
    %v755 = vunpack.c.h.b16 %v126
    %v756 = vunpack.c.l.b16 %v127
    %v757 = vunpack.c.h.b16 %v127
    %v758 = vunpack.c.l.b16 %v128
    %v759 = vunpack.c.h.b16 %v128
    %v760 = vunpack.c.l.b16 %v129
    %v761 = vunpack.c.h.b16 %v129
    %v762 = vunpack.c.l.b16 %v130
    %v763 = vunpack.c.h.b16 %v130
    %v764 = vunpack.c.l.b16 %v131
    %v765 = vunpack.c.h.b16 %v131
    %v766 = vunpack.c.l.b16 %v132
    %v767 = vunpack.c.h.b16 %v132
    %v768 = vunpack.c.l.b16 %v133
    %v769 = vunpack.c.h.b16 %v133
    %v770 = vunpack.c.l.b16 %v134
    %v771 = vunpack.c.h.b16 %v134
    %v772 = vunpack.c.l.b16 %v135
    %v773 = vunpack.c.h.b16 %v135
    %v774 = vunpack.c.l.b16 %v136
    %v775 = vunpack.c.h.b16 %v136
    %v776 = vunpack.c.l.b16 %v137
    %v777 = vunpack.c.h.b16 %v137
    %v778 = vunpack.c.l.b16 %v138
    %v779 = vunpack.c.h.b16 %v138
    %v780 = vunpack.c.l.b16 %v139
    %v781 = vunpack.c.h.b16 %v139
    %v782 = vunpack.c.l.b16 %v140
    %v783 = vunpack.c.h.b16 %v140
    %v784 = vunpack.c.l.b16 %v141
    %v785 = vunpack.c.h.b16 %v141
    %v786 = vunpack.c.l.b16 %v142
    %v787 = vunpack.c.h.b16 %v142
    %v788 = vunpack.c.l.b16 %v143
    %v789 = vunpack.c.h.b16 %v143
    %v790 = vunpack.c.l.b16 %v144
    %v791 = vunpack.c.h.b16 %v144
    %v792 = vunpack.c.l.b16 %v145
    %v793 = vunpack.c.h.b16 %v145
    %v794 = vunpack.c.l.b16 %v146
    %v795 = vunpack.c.h.b16 %v146
    %v796 = vunpack.c.l.b16 %v147
    %v797 = vunpack.c.h.b16 %v147
    %v798 = vunpack.c.l.b16 %v148
    %v799 = vunpack.c.h.b16 %v148
    %v800 = vunpack.c.l.b16 %v149
    %v801 = vunpack.c.h.b16 %v149
    %v802 = vunpack.c.l.b16 %v150
    %v803 = vunpack.c.h.b16 %v150
    %v804 = vunpack.c.l.b16 %v151
    %v805 = vunpack.c.h.b16 %v151
    %v806 = vunpack.c.l.b16 %v152
    %v807 = vunpack.c.h.b16 %v152
    %v808 = vunpack.c.l.b16 %v153
    %v809 = vunpack.c.h.b16 %v153
    %v810 = vunpack.c.l.b16 %v154
    %v811 = vunpack.c.h.b16 %v154
    %v812 = vunpack.c.l.b16 %v155
    %v813 = vunpack.c.h.b16 %v155
    %v814 = vunpack.c.l.b16 %v156
    %v815 = vunpack.c.h.b16 %v156
    %v816 = vunpack.c.l.b16 %v157
    %v817 = vunpack.c.h.b16 %v157
    %v818 = vunpack.c.l.b16 %v158
    %v819 = vunpack.c.h.b16 %v158
    %v820 = vunpack.c.l.b16 %v159
    %v821 = vunpack.c.h.b16 %v159
    %v822 = vunpack.c.l.b16 %v160
    %v823 = vunpack.c.h.b16 %v160
    %v824 = vunpack.c.l.b16 %v161
    %v825 = vunpack.c.h.b16 %v161
    %v826 = vunpack.c.l.b16 %v162
    %v827 = vunpack.c.h.b16 %v162
    %v828 = vunpack.c.l.b16 %v163
    %v829 = vunpack.c.h.b16 %v163
    %v830 = vunpack.c.l.b16 %v164
    %v831 = vunpack.c.h.b16 %v164
    %v832 = vunpack.c.l.b16 %v165
    %v833 = vunpack.c.h.b16 %v165
    %v834 = vunpack.c.l.b16 %v166
    %v835 = vunpack.c.h.b16 %v166
    %v836 = vunpack.c.l.b16 %v167
    %v837 = vunpack.c.h.b16 %v167
    %v838 = vunpack.c.l.b16 %v168
    %v839 = vunpack.c.h.b16 %v168
    %v840 = vunpack.c.l.b16 %v169
    %v841 = vunpack.c.h.b16 %v169
    %v842 = vunpack.c.l.b16 %v170
    %v843 = vunpack.c.h.b16 %v170
    %v844 = vunpack.c.l.b16 %v171
    %v845 = vunpack.c.h.b16 %v171
    %v846 = vunpack.c.l.b16 %v172
    %v847 = vunpack.c.h.b16 %v172
    %v848 = vunpack.c.l.b16 %v173
    %v849 = vunpack.c.h.b16 %v173
    %v850 = vunpack.c.l.b16 %v174
    %v851 = vunpack.c.h.b16 %v174
    %v852 = vunpack.c.l.b16 %v175
    %v853 = vunpack.c.h.b16 %v175
    %v854 = vunpack.c.l.b16 %v176
    %v855 = vunpack.c.h.b16 %v176
    %v856 = vunpack.c.l.b16 %v177
    %v857 = vunpack.c.h.b16 %v177
    %v858 = vunpack.c.l.b16 %v178
    %v859 = vunpack.c.h.b16 %v178
    %v860 = vunpack.c.l.b16 %v179
    %v861 = vunpack.c.h.b16 %v179
    %v862 = vunpack.c.l.b16 %v180
    %v863 = vunpack.c.h.b16 %v180
    %v864 = vunpack.c.l.b16 %v181
    %v865 = vunpack.c.h.b16 %v181
    %v866 = vunpack.c.l.b16 %v182
    %v867 = vunpack.c.h.b16 %v182
    %v868 = vunpack.c.l.b16 %v183
    %v869 = vunpack.c.h.b16 %v183
    %v870 = vunpack.c.l.b16 %v184
    %v871 = vunpack.c.h.b16 %v184
    %v872 = vunpack.c.l.b16 %v185
    %v873 = vunpack.c.h.b16 %v185
    %v874 = vunpack.c.l.b16 %v186
    %v875 = vunpack.c.h.b16 %v186
    %v876 = vunpack.c.l.b16 %v187
    %v877 = vunpack.c.h.b16 %v187
    %v878 = vunpack.c.l.b16 %v188
    %v879 = vunpack.c.h.b16 %v188
    %v880 = vunpack.c.l.b16 %v189
    %v881 = vunpack.c.h.b16 %v189
    %v882 = vunpack.c.l.b16 %v190
    %v883 = vunpack.c.h.b16 %v190
    %v884 = vunpack.c.l.b16 %v191
    %v885 = vunpack.c.h.b16 %v191
    %v886 = vunpack.c.l.b16 %v192
    %v887 = vunpack.c.h.b16 %v192
    %v888 = vunpack.c.l.b16 %v193
    %v889 = vunpack.c.h.b16 %v193
    %v890 = vunpack.c.l.b16 %v194
    %v891 = vunpack.c.h.b16 %v194
    %v892 = vunpack.c.l.b16 %v195
    %v893 = vunpack.c.h.b16 %v195
    %v894 = vunpack.c.l.b16 %v196
    %v895 = vunpack.c.h.b16 %v196
    %v896 = vunpack.c.l.b16 %v197
    %v897 = vunpack.c.h.b16 %v197
    %v898 = vunpack.c.l.b16 %v198
    %v899 = vunpack.c.h.b16 %v198
    %v900 = vunpack.c.l.b16 %v199
    %v901 = vunpack.c.h.b16 %v199
    %v902 = vunpack.c.l.b16 %v200
    %v903 = vunpack.c.h.b16 %v200
    %v904 = vunpack.c.l.b16 %v201
    %v905 = vunpack.c.h.b16 %v201
    %v906 = vunpack.c.l.b16 %v202
    %v907 = vunpack.c.h.b16 %v202
    %v908 = vunpack.c.l.b16 %v203
    %v909 = vunpack.c.h.b16 %v203
    %v910 = vunpack.c.l.b16 %v204
    %v911 = vunpack.c.h.b16 %v204
    %v912 = vunpack.c.l.b16 %v205
    %v913 = vunpack.c.h.b16 %v205
    %v914 = vunpack.c.l.b16 %v206
    %v915 = vunpack.c.h.b16 %v206
    %v916 = vunpack.c.l.b16 %v207
    %v917 = vunpack.c.h.b16 %v207
    %v918 = vunpack.c.l.b16 %v208
    %v919 = vunpack.c.h.b16 %v208
    %v920 = vunpack.c.l.b16 %v209
    %v921 = vunpack.c.h.b16 %v209
    %v922 = vunpack.c.l.b16 %v210
    %v923 = vunpack.c.h.b16 %v210
    %v924 = vunpack.c.l.b16 %v211
    %v925 = vunpack.c.h.b16 %v211
    %v926 = vunpack.c.l.b16 %v212
    %v927 = vunpack.c.h.b16 %v212
    %v928 = vunpack.c.l.b16 %v213
    %v929 = vunpack.c.h.b16 %v213
    %v930 = vunpack.c.l.b16 %v214
    %v931 = vunpack.c.h.b16 %v214
    %v932 = vunpack.c.l.b16 %v215
    %v933 = vunpack.c.h.b16 %v215
    %v934 = vunpack.c.l.b16 %v216
    %v935 = vunpack.c.h.b16 %v216
    %v936 = vunpack.c.l.b16 %v217
    %v937 = vunpack.c.h.b16 %v217
    %v938 = vunpack.c.l.b16 %v218
    %v939 = vunpack.c.h.b16 %v218
    %v940 = vunpack.c.l.b16 %v219
    %v941 = vunpack.c.h.b16 %v219
    %v942 = vunpack.c.l.b16 %v220
    %v943 = vunpack.c.h.b16 %v220
    %v944 = vunpack.c.l.b16 %v221
    %v945 = vunpack.c.h.b16 %v221
    %v946 = vunpack.c.l.b16 %v222
    %v947 = vunpack.c.h.b16 %v222
    %v948 = vunpack.c.l.b16 %v223
    %v949 = vunpack.c.h.b16 %v223
    %v950 = vunpack.c.l.b16 %v224
    %v951 = vunpack.c.h.b16 %v224
    %v952 = vunpack.c.l.b16 %v225
    %v953 = vunpack.c.h.b16 %v225
    %v954 = vunpack.c.l.b16 %v226
    %v955 = vunpack.c.h.b16 %v226
    %v956 = vunpack.c.l.b16 %v227
    %v957 = vunpack.c.h.b16 %v227
    %v958 = vunpack.c.l.b16 %v228
    %v959 = vunpack.c.h.b16 %v228
    %v960 = vunpack.c.l.b16 %v229
    %v961 = vunpack.c.h.b16 %v229
    %v962 = vunpack.c.l.b16 %v230
    %v963 = vunpack.c.h.b16 %v230
    %v964 = vunpack.c.l.b16 %v231
    %v965 = vunpack.c.h.b16 %v231
    %v966 = vunpack.c.l.b16 %v232
    %v967 = vunpack.c.h.b16 %v232
    %v968 = vunpack.c.l.b16 %v233
    %v969 = vunpack.c.h.b16 %v233
    %v970 = vunpack.c.l.b16 %v234
    %v971 = vunpack.c.h.b16 %v234
    %v972 = vunpack.c.l.b16 %v235
    %v973 = vunpack.c.h.b16 %v235
    %v974 = vunpack.c.l.b16 %v236
    %v975 = vunpack.c.h.b16 %v236
    %v976 = vunpack.c.l.b16 %v237
    %v977 = vunpack.c.h.b16 %v237
    %v978 = vunpack.c.l.b16 %v238
    %v979 = vunpack.c.h.b16 %v238
    %v980 = vunpack.c.l.b16 %v239
    %v981 = vunpack.c.h.b16 %v239
    %v982 = vunpack.c.l.b16 %v240
    %v983 = vunpack.c.h.b16 %v240
    %v984 = vunpack.c.l.b16 %v241
    %v985 = vunpack.c.h.b16 %v241
    %v986 = vunpack.c.l.b16 %v242
    %v987 = vunpack.c.h.b16 %v242
    %v988 = vunpack.c.l.b16 %v243
    %v989 = vunpack.c.h.b16 %v243
    %v990 = vunpack.c.l.b16 %v244
    %v991 = vunpack.c.h.b16 %v244
    %v992 = vunpack.c.l.b16 %v245
    %v993 = vunpack.c.h.b16 %v245
    %v994 = vunpack.c.l.b16 %v246
    %v995 = vunpack.c.h.b16 %v246
    %v996 = vunpack.c.l.b16 %v247
    %v997 = vunpack.c.h.b16 %v247
    %v998 = vunpack.c.l.b16 %v248
    %v999 = vunpack.c.h.b16 %v248
    %v1000 = vunpack.c.l.b16 %v249
    %v1001 = vunpack.c.h.b16 %v249
    %v1002 = vunpack.c.l.b16 %v250
    %v1003 = vunpack.c.h.b16 %v250
    %v1004 = vunpack.c.l.b16 %v251
    %v1005 = vunpack.c.h.b16 %v251
    %v1006 = vunpack.c.l.b16 %v252
    %v1007 = vunpack.c.h.b16 %v252
    %v1008 = vunpack.c.l.b16 %v253
    %v1009 = vunpack.c.h.b16 %v253
    %v1010 = vunpack.c.l.b16 %v254
    %v1011 = vunpack.c.h.b16 %v254
    %v1012 = vunpack.c.l.b16 %v255
    %v1013 = vunpack.c.h.b16 %v255
    %v1014 = vunpack.c.l.b16 %v256
    %v1015 = vunpack.c.h.b16 %v256
    %v1016 = vunpack.c.l.b16 %v257
    %v1017 = vunpack.c.h.b16 %v257
    %v1018 = vunpack.c.l.b16 %v258
    %v1019 = vunpack.c.h.b16 %v258
    %v1020 = vunpack.c.l.b16 %v259
    %v1021 = vunpack.c.h.b16 %v259
    %v1022 = vunpack.c.l.b16 %v260
    %v1023 = vunpack.c.h.b16 %v260
    %v1024 = vunpack.c.l.b16 %v261
    %v1025 = vunpack.c.h.b16 %v261
    %v1026 = vunpack.c.l.b16 %v262
    %v1027 = vunpack.c.h.b16 %v262
    %v1028 = vunpack.c.l.b16 %v263
    %v1029 = vunpack.c.h.b16 %v263
    %v1030 = vunpack.c.l.b16 %v264
    %v1031 = vunpack.c.h.b16 %v264
    %v1032 = vunpack.c.l.b16 %v265
    %v1033 = vunpack.c.h.b16 %v265
    %v1034 = vunpack.c.l.b16 %v266
    %v1035 = vunpack.c.h.b16 %v266
    %v1036 = vunpack.c.l.b16 %v267
    %v1037 = vunpack.c.h.b16 %v267
    %v1038 = vunpack.c.l.b16 %v268
    %v1039 = vunpack.c.h.b16 %v268
    %v1040 = vunpack.c.l.b16 %v269
    %v1041 = vunpack.c.h.b16 %v269
    %v1042 = vunpack.c.l.b16 %v270
    %v1043 = vunpack.c.h.b16 %v270
    %v1044 = vunpack.c.l.b16 %v271
    %v1045 = vunpack.c.h.b16 %v271
    %v1046 = vunpack.c.l.b16 %v272
    %v1047 = vunpack.c.h.b16 %v272
    %v1048 = vunpack.c.l.b16 %v273
    %v1049 = vunpack.c.h.b16 %v273
    %v1050 = vunpack.c.l.b16 %v274
    %v1051 = vunpack.c.h.b16 %v274
    %v1052 = vunpack.c.l.b16 %v275
    %v1053 = vunpack.c.h.b16 %v275
    %v1054 = vunpack.c.l.b16 %v276
    %v1055 = vunpack.c.h.b16 %v276
    %v1056 = vunpack.c.l.b16 %v277
    %v1057 = vunpack.c.h.b16 %v277
    %v1058 = vunpack.c.l.b16 %v278
    %v1059 = vunpack.c.h.b16 %v278
    %v1060 = vunpack.c.l.b16 %v279
    %v1061 = vunpack.c.h.b16 %v279
    %v1062 = vunpack.c.l.b16 %v280
    %v1063 = vunpack.c.h.b16 %v280
    %v1064 = vunpack.c.l.b16 %v281
    %v1065 = vunpack.c.h.b16 %v281
    %v1066 = vunpack.c.l.b16 %v282
    %v1067 = vunpack.c.h.b16 %v282
    %v1068 = vunpack.c.l.b16 %v283
    %v1069 = vunpack.c.h.b16 %v283
    %v1070 = vunpack.c.l.b16 %v284
    %v1071 = vunpack.c.h.b16 %v284
    %v1072 = vunpack.c.l.b16 %v285
    %v1073 = vunpack.c.h.b16 %v285
    %v1074 = vunpack.c.l.b16 %v286
    %v1075 = vunpack.c.h.b16 %v286
    %v1076 = vunpack.c.l.b16 %v287
    %v1077 = vunpack.c.h.b16 %v287
    %v1078 = vunpack.c.l.b16 %v288
    %v1079 = vunpack.c.h.b16 %v288
    %v1080 = vunpack.c.l.b16 %v289
    %v1081 = vunpack.c.h.b16 %v289
    %v1082 = vunpack.c.l.b16 %v290
    %v1083 = vunpack.c.h.b16 %v290
    %v1084 = vunpack.c.l.b16 %v291
    %v1085 = vunpack.c.h.b16 %v291
    %v1086 = vunpack.c.l.b16 %v292
    %v1087 = vunpack.c.h.b16 %v292
    %v1088 = vunpack.c.l.b16 %v293
    %v1089 = vunpack.c.h.b16 %v293
    %v1090 = vunpack.c.l.b16 %v294
    %v1091 = vunpack.c.h.b16 %v294
    %v1092 = vunpack.c.l.b16 %v295
    %v1093 = vunpack.c.h.b16 %v295
    %v1094 = vunpack.c.l.b16 %v296
    %v1095 = vunpack.c.h.b16 %v296
    %v1096 = vunpack.c.l.b16 %v297
    %v1097 = vunpack.c.h.b16 %v297
    %v1098 = vunpack.c.l.b16 %v298
    %v1099 = vunpack.c.h.b16 %v298
    %v1100 = vunpack.c.l.b16 %v299
    %v1101 = vunpack.c.h.b16 %v299
    %v1102 = vunpack.c.l.b16 %v300
    %v1103 = vunpack.c.h.b16 %v300
    %v1104 = vunpack.c.l.b16 %v301
    %v1105 = vunpack.c.h.b16 %v301
    %v1106 = vunpack.c.l.b16 %v302
    %v1107 = vunpack.c.h.b16 %v302
    %v1108 = vunpack.c.l.b16 %v303
    %v1109 = vunpack.c.h.b16 %v303
    %v1110 = vunpack.c.l.b16 %v304
    %v1111 = vunpack.c.h.b16 %v304
    %v1112 = vunpack.c.l.b16 %v305
    %v1113 = vunpack.c.h.b16 %v305
    %v1114 = vunpack.c.l.b16 %v306
    %v1115 = vunpack.c.h.b16 %v306
    %v1116 = vunpack.c.l.b16 %v307
    %v1117 = vunpack.c.h.b16 %v307
    %v1118 = vunpack.c.l.b16 %v308
    %v1119 = vunpack.c.h.b16 %v308
    %v1120 = vunpack.c.l.b16 %v309
    %v1121 = vunpack.c.h.b16 %v309
    %v1122 = vunpack.c.l.b16 %v310
    %v1123 = vunpack.c.h.b16 %v310
    %v1124 = vunpack.c.l.b16 %v311
    %v1125 = vunpack.c.h.b16 %v311
    %v1126 = vunpack.c.l.b16 %v312
    %v1127 = vunpack.c.h.b16 %v312
    %v1128 = vunpack.c.l.b16 %v313
    %v1129 = vunpack.c.h.b16 %v313
    %v1130 = vunpack.c.l.b16 %v314
    %v1131 = vunpack.c.h.b16 %v314
    %v1132 = vunpack.c.l.b16 %v315
    %v1133 = vunpack.c.h.b16 %v315
    %v1134 = vunpack.c.l.b16 %v316
    %v1135 = vunpack.c.h.b16 %v316
    %v1136 = vunpack.c.l.b16 %v317
    %v1137 = vunpack.c.h.b16 %v317
    %v1138 = vunpack.c.l.b16 %v318
    %v1139 = vunpack.c.h.b16 %v318
    %v1140 = vunpack.c.l.b16 %v319
    %v1141 = vunpack.c.h.b16 %v319
    %v1142 = vunpack.c.l.b16 %v320
    %v1143 = vunpack.c.h.b16 %v320
    %v1144 = vunpack.c.l.b16 %v321
    %v1145 = vunpack.c.h.b16 %v321
    %v1146 = vunpack.c.l.b16 %v322
    %v1147 = vunpack.c.h.b16 %v322
    %v1148 = vunpack.c.l.b16 %v323
    %v1149 = vunpack.c.h.b16 %v323
    %v1150 = vunpack.c.l.b16 %v324
    %v1151 = vunpack.c.h.b16 %v324
    %v1152 = vunpack.c.l.b16 %v325
    %v1153 = vunpack.c.h.b16 %v325
    %v1154 = vunpack.c.l.b16 %v326
    %v1155 = vunpack.c.h.b16 %v326
    %v1156 = vunpack.c.l.b16 %v327
    %v1157 = vunpack.c.h.b16 %v327
    %v1158 = vunpack.c.l.b16 %v328
    %v1159 = vunpack.c.h.b16 %v328
    %v1160 = vunpack.c.l.b16 %v329
    %v1161 = vunpack.c.h.b16 %v329
    %v1162 = vunpack.c.l.b16 %v330
    %v1163 = vunpack.c.h.b16 %v330
    %v1164 = vunpack.c.l.b16 %v331
    %v1165 = vunpack.c.h.b16 %v331
    %v1166 = vunpack.c.l.b16 %v332
    %v1167 = vunpack.c.h.b16 %v332
    %v1168 = vunpack.c.l.b16 %v333
    %v1169 = vunpack.c.h.b16 %v333
    %v1170 = vunpack.c.l.b16 %v334
    %v1171 = vunpack.c.h.b16 %v334
    %v1172 = vunpack.c.l.b16 %v335
    %v1173 = vunpack.c.h.b16 %v335
    %v1174 = vunpack.c.l.b16 %v336
    %v1175 = vunpack.c.h.b16 %v336
    %v1176 = vunpack.c.l.b16 %v337
    %v1177 = vunpack.c.h.b16 %v337
    %v1178 = vunpack.c.l.b16 %v338
    %v1179 = vunpack.c.h.b16 %v338
    %v1180 = vunpack.c.l.b16 %v339
    %v1181 = vunpack.c.h.b16 %v339
    %v1182 = vunpack.c.l.b16 %v340
    %v1183 = vunpack.c.h.b16 %v340
    %v1184 = vunpack.c.l.b16 %v341
    %v1185 = vunpack.c.h.b16 %v341
    %v1186 = vunpack.c.l.b16 %v342
    %v1187 = vunpack.c.h.b16 %v342
    %v1188 = vunpack.c.l.b16 %v343
    %v1189 = vunpack.c.h.b16 %v343
    %v1190 = vunpack.c.l.b16 %v344
    %v1191 = vunpack.c.h.b16 %v344
    %v1192 = vunpack.c.l.b16 %v345
    %v1193 = vunpack.c.h.b16 %v345
    %v1194 = vunpack.c.l.b16 %v346
    %v1195 = vunpack.c.h.b16 %v346
    %v1196 = vunpack.c.l.b16 %v347
    %v1197 = vunpack.c.h.b16 %v347
    %v1198 = vunpack.c.l.b16 %v348
    %v1199 = vunpack.c.h.b16 %v348
    %v1200 = vunpack.c.l.b16 %v349
    %v1201 = vunpack.c.h.b16 %v349
    %v1202 = vunpack.c.l.b16 %v350
    %v1203 = vunpack.c.h.b16 %v350
    %v1204 = vunpack.c.l.b16 %v351
    %v1205 = vunpack.c.h.b16 %v351
    %v1206 = vunpack.c.l.b16 %v352
    %v1207 = vunpack.c.h.b16 %v352
    %v1208 = vunpack.c.l.b16 %v353
    %v1209 = vunpack.c.h.b16 %v353
    %v1210 = vunpack.c.l.b16 %v354
    %v1211 = vunpack.c.h.b16 %v354
    %v1212 = vunpack.c.l.b16 %v355
    %v1213 = vunpack.c.h.b16 %v355
    %v1214 = vunpack.c.l.b16 %v356
    %v1215 = vunpack.c.h.b16 %v356
    %v1216 = vunpack.c.l.b16 %v357
    %v1217 = vunpack.c.h.b16 %v357
    %v1218 = vunpack.c.l.b16 %v358
    %v1219 = vunpack.c.h.b16 %v358
    %v1220 = vunpack.c.l.b16 %v359
    %v1221 = vunpack.c.h.b16 %v359
    %v1222 = vunpack.c.l.b16 %v360
    %v1223 = vunpack.c.h.b16 %v360
    %v1224 = vunpack.c.l.b16 %v361
    %v1225 = vunpack.c.h.b16 %v361
    %v1226 = vunpack.c.l.b16 %v362
    %v1227 = vunpack.c.h.b16 %v362
    %v1228 = vunpack.c.l.b16 %v363
    %v1229 = vunpack.c.h.b16 %v363
    %v1230 = vunpack.c.l.b16 %v364
    %v1231 = vunpack.c.h.b16 %v364
    %v1232 = vunpack.c.l.b16 %v365
    %v1233 = vunpack.c.h.b16 %v365
    %v1234 = vunpack.c.l.b16 %v366
    %v1235 = vunpack.c.h.b16 %v366
    %v1236 = vunpack.c.l.b16 %v367
    %v1237 = vunpack.c.h.b16 %v367
    %v1238 = vunpack.c.l.b16 %v368
    %v1239 = vunpack.c.h.b16 %v368
    %v1240 = vunpack.c.l.b16 %v369
    %v1241 = vunpack.c.h.b16 %v369
    %v1242 = vunpack.c.l.b16 %v370
    %v1243 = vunpack.c.h.b16 %v370
    %v1244 = vunpack.c.l.b16 %v371
    %v1245 = vunpack.c.h.b16 %v371
    %v1246 = vpack.c.b16 %v674, %v670
    %v1247 = vpack.c.b16 %v675, %v671
    %v1248 = vpack.c.b16 %v676, %v672
    %v1249 = vpack.c.b16 %v677, %v673
    %v1250 = vpack.c.b16 %v682, %v678
    %v1251 = vpack.c.b16 %v683, %v679
    %v1252 = vpack.c.b16 %v684, %v680
    %v1253 = vpack.c.b16 %v685, %v681
    %v1254 = vpack.c.b16 %v690, %v686
    %v1255 = vpack.c.b16 %v691, %v687
    %v1256 = vpack.c.b16 %v692, %v688
    %v1257 = vpack.c.b16 %v693, %v689
    %v1258 = vpack.c.b16 %v698, %v694
    %v1259 = vpack.c.b16 %v699, %v695
    %v1260 = vpack.c.b16 %v700, %v696
    %v1261 = vpack.c.b16 %v701, %v697
    %v1262 = vpack.c.b16 %v706, %v702
    %v1263 = vpack.c.b16 %v707, %v703
    %v1264 = vpack.c.b16 %v708, %v704
    %v1265 = vpack.c.b16 %v709, %v705
    %v1266 = vpack.c.b16 %v714, %v710
    %v1267 = vpack.c.b16 %v715, %v711
    %v1268 = vpack.c.b16 %v716, %v712
    %v1269 = vpack.c.b16 %v717, %v713
    %v1270 = vpack.c.b16 %v722, %v718
    %v1271 = vpack.c.b16 %v723, %v719
    %v1272 = vpack.c.b16 %v724, %v720
    %v1273 = vpack.c.b16 %v725, %v721
    %v1274 = vpack.c.b16 %v730, %v726
    %v1275 = vpack.c.b16 %v731, %v727
    %v1276 = vpack.c.b16 %v732, %v728
    %v1277 = vpack.c.b16 %v733, %v729
    %v1278 = vpack.c.b16 %v738, %v734
    %v1279 = vpack.c.b16 %v739, %v735
    %v1280 = vpack.c.b16 %v740, %v736
    %v1281 = vpack.c.b16 %v741, %v737
    %v1282 = vpack.c.b16 %v746, %v742
    %v1283 = vpack.c.b16 %v747, %v743
    %v1284 = vpack.c.b16 %v748, %v744
    %v1285 = vpack.c.b16 %v749, %v745
    %v1286 = vpack.c.b16 %v754, %v750
    %v1287 = vpack.c.b16 %v755, %v751
    %v1288 = vpack.c.b16 %v756, %v752
    %v1289 = vpack.c.b16 %v757, %v753
    %v1290 = vpack.c.b16 %v762, %v758
    %v1291 = vpack.c.b16 %v763, %v759
    %v1292 = vpack.c.b16 %v764, %v760
    %v1293 = vpack.c.b16 %v765, %v761
    %v1294 = vpack.c.b16 %v770, %v766
    %v1295 = vpack.c.b16 %v771, %v767
    %v1296 = vpack.c.b16 %v772, %v768
    %v1297 = vpack.c.b16 %v773, %v769
    %v1298 = vpack.c.b16 %v778, %v774
    %v1299 = vpack.c.b16 %v779, %v775
    %v1300 = vpack.c.b16 %v780, %v776
    %v1301 = vpack.c.b16 %v781, %v777
    %v1302 = vpack.c.b16 %v786, %v782
    %v1303 = vpack.c.b16 %v787, %v783
    %v1304 = vpack.c.b16 %v788, %v784
    %v1305 = vpack.c.b16 %v789, %v785
    %v1306 = vpack.c.b16 %v794, %v790
    %v1307 = vpack.c.b16 %v795, %v791
    %v1308 = vpack.c.b16 %v796, %v792
    %v1309 = vpack.c.b16 %v797, %v793
    %v1310 = vpack.c.b16 %v802, %v798
    %v1311 = vpack.c.b16 %v803, %v799
    %v1312 = vpack.c.b16 %v804, %v800
    %v1313 = vpack.c.b16 %v805, %v801
    %v1314 = vpack.c.b16 %v810, %v806
    %v1315 = vpack.c.b16 %v811, %v807
    %v1316 = vpack.c.b16 %v812, %v808
    %v1317 = vpack.c.b16 %v813, %v809
    %v1318 = vpack.c.b16 %v818, %v814
    %v1319 = vpack.c.b16 %v819, %v815
    %v1320 = vpack.c.b16 %v820, %v816
    %v1321 = vpack.c.b16 %v821, %v817
    %v1322 = vpack.c.b16 %v826, %v822
    %v1323 = vpack.c.b16 %v827, %v823
    %v1324 = vpack.c.b16 %v828, %v824
    %v1325 = vpack.c.b16 %v829, %v825
    %v1326 = vpack.c.b16 %v834, %v830
    %v1327 = vpack.c.b16 %v835, %v831
    %v1328 = vpack.c.b16 %v836, %v832
    %v1329 = vpack.c.b16 %v837, %v833
    %v1330 = vpack.c.b16 %v842, %v838
    %v1331 = vpack.c.b16 %v843, %v839
    %v1332 = vpack.c.b16 %v844, %v840
    %v1333 = vpack.c.b16 %v845, %v841
    %v1334 = vpack.c.b16 %v850, %v846
    %v1335 = vpack.c.b16 %v851, %v847
    %v1336 = vpack.c.b16 %v852, %v848
    %v1337 = vpack.c.b16 %v853, %v849
    %v1338 = vpack.c.b16 %v858, %v854
    %v1339 = vpack.c.b16 %v859, %v855
    %v1340 = vpack.c.b16 %v860, %v856
    %v1341 = vpack.c.b16 %v861, %v857
    %v1342 = vpack.c.b16 %v866, %v862
    %v1343 = vpack.c.b16 %v867, %v863
    %v1344 = vpack.c.b16 %v868, %v864
    %v1345 = vpack.c.b16 %v869, %v865
    %v1346 = vpack.c.b16 %v874, %v870
    %v1347 = vpack.c.b16 %v875, %v871
    %v1348 = vpack.c.b16 %v876, %v872
    %v1349 = vpack.c.b16 %v877, %v873
    %v1350 = vpack.c.b16 %v882, %v878
    %v1351 = vpack.c.b16 %v883, %v879
    %v1352 = vpack.c.b16 %v884, %v880
    %v1353 = vpack.c.b16 %v885, %v881
    %v1354 = vpack.c.b16 %v890, %v886
    %v1355 = vpack.c.b16 %v891, %v887
    %v1356 = vpack.c.b16 %v892, %v888
    %v1357 = vpack.c.b16 %v893, %v889
    %v1358 = vpack.c.b16 %v898, %v894
    %v1359 = vpack.c.b16 %v899, %v895
    %v1360 = vpack.c.b16 %v900, %v896
    %v1361 = vpack.c.b16 %v901, %v897
    %v1362 = vpack.c.b16 %v906, %v902
    %v1363 = vpack.c.b16 %v907, %v903
    %v1364 = vpack.c.b16 %v908, %v904
    %v1365 = vpack.c.b16 %v909, %v905
    %v1366 = vpack.c.b16 %v914, %v910
    %v1367 = vpack.c.b16 %v915, %v911
    %v1368 = vpack.c.b16 %v916, %v912
    %v1369 = vpack.c.b16 %v917, %v913
    %v1370 = vpack.c.b16 %v922, %v918
    %v1371 = vpack.c.b16 %v923, %v919
    %v1372 = vpack.c.b16 %v924, %v920
    %v1373 = vpack.c.b16 %v925, %v921
    %v1374 = vpack.c.b16 %v930, %v926
    %v1375 = vpack.c.b16 %v931, %v927
    %v1376 = vpack.c.b16 %v932, %v928
    %v1377 = vpack.c.b16 %v933, %v929
    %v1378 = vpack.c.b16 %v938, %v934
    %v1379 = vpack.c.b16 %v939, %v935
    %v1380 = vpack.c.b16 %v940, %v936
    %v1381 = vpack.c.b16 %v941, %v937
    %v1382 = vpack.c.b16 %v946, %v942
    %v1383 = vpack.c.b16 %v947, %v943
    %v1384 = vpack.c.b16 %v948, %v944
    %v1385 = vpack.c.b16 %v949, %v945
    %v1386 = vpack.c.b16 %v954, %v950
    %v1387 = vpack.c.b16 %v955, %v951
    %v1388 = vpack.c.b16 %v956, %v952
    %v1389 = vpack.c.b16 %v957, %v953
    %v1390 = vpack.c.b16 %v962, %v958
    %v1391 = vpack.c.b16 %v963, %v959
    %v1392 = vpack.c.b16 %v964, %v960
    %v1393 = vpack.c.b16 %v965, %v961
    %v1394 = vpack.c.b16 %v970, %v966
    %v1395 = vpack.c.b16 %v971, %v967
    %v1396 = vpack.c.b16 %v972, %v968
    %v1397 = vpack.c.b16 %v973, %v969
    %v1398 = vpack.c.b16 %v978, %v974
    %v1399 = vpack.c.b16 %v979, %v975
    %v1400 = vpack.c.b16 %v980, %v976
    %v1401 = vpack.c.b16 %v981, %v977
    %v1402 = vpack.c.b16 %v986, %v982
    %v1403 = vpack.c.b16 %v987, %v983
    %v1404 = vpack.c.b16 %v988, %v984
    %v1405 = vpack.c.b16 %v989, %v985
    %v1406 = vpack.c.b16 %v994, %v990
    %v1407 = vpack.c.b16 %v995, %v991
    %v1408 = vpack.c.b16 %v996, %v992
    %v1409 = vpack.c.b16 %v997, %v993
    %v1410 = vpack.c.b16 %v1002, %v998
    %v1411 = vpack.c.b16 %v1003, %v999
    %v1412 = vpack.c.b16 %v1004, %v1000
    %v1413 = vpack.c.b16 %v1005, %v1001
    %v1414 = vpack.c.b16 %v1010, %v1006
    %v1415 = vpack.c.b16 %v1011, %v1007
    %v1416 = vpack.c.b16 %v1012, %v1008
    %v1417 = vpack.c.b16 %v1013, %v1009
    %v1418 = vpack.c.b16 %v1018, %v1014
    %v1419 = vpack.c.b16 %v1019, %v1015
    %v1420 = vpack.c.b16 %v1020, %v1016
    %v1421 = vpack.c.b16 %v1021, %v1017
    %v1422 = vpack.c.b16 %v1026, %v1022
    %v1423 = vpack.c.b16 %v1027, %v1023
    %v1424 = vpack.c.b16 %v1028, %v1024
    %v1425 = vpack.c.b16 %v1029, %v1025
    %v1426 = vpack.c.b16 %v1034, %v1030
    %v1427 = vpack.c.b16 %v1035, %v1031
    %v1428 = vpack.c.b16 %v1036, %v1032
    %v1429 = vpack.c.b16 %v1037, %v1033
    %v1430 = vpack.c.b16 %v1042, %v1038
    %v1431 = vpack.c.b16 %v1043, %v1039
    %v1432 = vpack.c.b16 %v1044, %v1040
    %v1433 = vpack.c.b16 %v1045, %v1041
    %v1434 = vpack.c.b16 %v1050, %v1046
    %v1435 = vpack.c.b16 %v1051, %v1047
    %v1436 = vpack.c.b16 %v1052, %v1048
    %v1437 = vpack.c.b16 %v1053, %v1049
    %v1438 = vpack.c.b16 %v1058, %v1054
    %v1439 = vpack.c.b16 %v1059, %v1055
    %v1440 = vpack.c.b16 %v1060, %v1056
    %v1441 = vpack.c.b16 %v1061, %v1057
    %v1442 = vpack.c.b16 %v1066, %v1062
    %v1443 = vpack.c.b16 %v1067, %v1063
    %v1444 = vpack.c.b16 %v1068, %v1064
    %v1445 = vpack.c.b16 %v1069, %v1065
    %v1446 = vpack.c.b16 %v1074, %v1070
    %v1447 = vpack.c.b16 %v1075, %v1071
    %v1448 = vpack.c.b16 %v1076, %v1072
    %v1449 = vpack.c.b16 %v1077, %v1073
    %v1450 = vpack.c.b16 %v1082, %v1078
    %v1451 = vpack.c.b16 %v1083, %v1079
    %v1452 = vpack.c.b16 %v1084, %v1080
    %v1453 = vpack.c.b16 %v1085, %v1081
    %v1454 = vpack.c.b16 %v1090, %v1086
    %v1455 = vpack.c.b16 %v1091, %v1087
    %v1456 = vpack.c.b16 %v1092, %v1088
    %v1457 = vpack.c.b16 %v1093, %v1089
    %v1458 = vpack.c.b16 %v1098, %v1094
    %v1459 = vpack.c.b16 %v1099, %v1095
    %v1460 = vpack.c.b16 %v1100, %v1096
    %v1461 = vpack.c.b16 %v1101, %v1097
    %v1462 = vpack.c.b16 %v1106, %v1102
    %v1463 = vpack.c.b16 %v1107, %v1103
    %v1464 = vpack.c.b16 %v1108, %v1104
    %v1465 = vpack.c.b16 %v1109, %v1105
    %v1466 = vpack.c.b16 %v1114, %v1110
    %v1467 = vpack.c.b16 %v1115, %v1111
    %v1468 = vpack.c.b16 %v1116, %v1112
    %v1469 = vpack.c.b16 %v1117, %v1113
    %v1470 = vpack.c.b16 %v1122, %v1118
    %v1471 = vpack.c.b16 %v1123, %v1119
    %v1472 = vpack.c.b16 %v1124, %v1120
    %v1473 = vpack.c.b16 %v1125, %v1121
    %v1474 = vpack.c.b16 %v1130, %v1126
    %v1475 = vpack.c.b16 %v1131, %v1127
    %v1476 = vpack.c.b16 %v1132, %v1128
    %v1477 = vpack.c.b16 %v1133, %v1129
    %v1478 = vpack.c.b16 %v1138, %v1134
    %v1479 = vpack.c.b16 %v1139, %v1135
    %v1480 = vpack.c.b16 %v1140, %v1136
    %v1481 = vpack.c.b16 %v1141, %v1137
    %v1482 = vpack.c.b16 %v1146, %v1142
    %v1483 = vpack.c.b16 %v1147, %v1143
    %v1484 = vpack.c.b16 %v1148, %v1144
    %v1485 = vpack.c.b16 %v1149, %v1145
    %v1486 = vpack.c.b16 %v1154, %v1150
    %v1487 = vpack.c.b16 %v1155, %v1151
    %v1488 = vpack.c.b16 %v1156, %v1152
    %v1489 = vpack.c.b16 %v1157, %v1153
    %v1490 = vpack.c.b16 %v1162, %v1158
    %v1491 = vpack.c.b16 %v1163, %v1159
    %v1492 = vpack.c.b16 %v1164, %v1160
    %v1493 = vpack.c.b16 %v1165, %v1161
    %v1494 = vpack.c.b16 %v1170, %v1166
    %v1495 = vpack.c.b16 %v1171, %v1167
    %v1496 = vpack.c.b16 %v1172, %v1168
    %v1497 = vpack.c.b16 %v1173, %v1169
    %v1498 = vpack.c.b16 %v1178, %v1174
    %v1499 = vpack.c.b16 %v1179, %v1175
    %v1500 = vpack.c.b16 %v1180, %v1176
    %v1501 = vpack.c.b16 %v1181, %v1177
    %v1502 = vpack.c.b16 %v1186, %v1182
    %v1503 = vpack.c.b16 %v1187, %v1183
    %v1504 = vpack.c.b16 %v1188, %v1184
    %v1505 = vpack.c.b16 %v1189, %v1185
    %v1506 = vpack.c.b16 %v1194, %v1190
    %v1507 = vpack.c.b16 %v1195, %v1191
    %v1508 = vpack.c.b16 %v1196, %v1192
    %v1509 = vpack.c.b16 %v1197, %v1193
    %v1510 = vpack.c.b16 %v1202, %v1198
    %v1511 = vpack.c.b16 %v1203, %v1199
    %v1512 = vpack.c.b16 %v1204, %v1200
    %v1513 = vpack.c.b16 %v1205, %v1201
    %v1514 = vpack.c.b16 %v1210, %v1206
    %v1515 = vpack.c.b16 %v1211, %v1207
    %v1516 = vpack.c.b16 %v1212, %v1208
    %v1517 = vpack.c.b16 %v1213, %v1209
    %v1518 = vpack.c.b16 %v1218, %v1214
    %v1519 = vpack.c.b16 %v1219, %v1215
    %v1520 = vpack.c.b16 %v1220, %v1216
    %v1521 = vpack.c.b16 %v1221, %v1217
    %v1522 = vpack.c.b16 %v1226, %v1222
    %v1523 = vpack.c.b16 %v1227, %v1223
    %v1524 = vpack.c.b16 %v1228, %v1224
    %v1525 = vpack.c.b16 %v1229, %v1225
    %v1526 = vpack.c.b16 %v1234, %v1230
    %v1527 = vpack.c.b16 %v1235, %v1231
    %v1528 = vpack.c.b16 %v1236, %v1232
    %v1529 = vpack.c.b16 %v1237, %v1233
    %v1530 = vpack.c.b16 %v1242, %v1238
    %v1531 = vpack.c.b16 %v1243, %v1239
    %v1532 = vpack.c.b16 %v1244, %v1240
    %v1533 = vpack.c.b16 %v1245, %v1241
    %1822 = vmatpush.bf16.msra.mxu0 %v1274
    %1823 = vmatpush.bf16.msra.mxu0 %v1270
    %1824 = vmatpush.bf16.msra.mxu0 %v1266
    %1825 = vmatpush.bf16.msra.mxu0 %v1262
    %1826 = vmatpush.bf16.msra.mxu0 %v1258
    %1827 = vmatpush.bf16.msra.mxu0 %v1254
    %1828 = vmatpush.bf16.msra.mxu0 %v1250
    %1829 = vmatpush.bf16.msra.mxu0 %v1246
    %1830 = vmatmul.bf16.gmra.mxu0 %v75
    %v1831 = vpop.f32.mrf.mxu0
    %v1832 = vadd.f32 %v374, %v1831
    %v1833 = vpop.f32.mrf.mxu0
    %1834 = vdwg.mxu0
    %1835 = vmatpush.bf16.msra.mxu0 %v1306
    %1836 = vmatpush.bf16.msra.mxu0 %v1302
    %1837 = vmatpush.bf16.msra.mxu0 %v1298
    %1838 = vmatpush.bf16.msra.mxu0 %v1294
    %1839 = vmatpush.bf16.msra.mxu0 %v1290
    %1840 = vmatpush.bf16.msra.mxu0 %v1286
    %1841 = vmatpush.bf16.msra.mxu0 %v1282
    %1842 = vmatpush.bf16.msra.mxu0 %v1278
    %1843 = vmatmul.bf16.gmra.mxu0 %v76
    %v1844 = vpop.f32.mrf.mxu0
    %v1845 = vadd.f32 %v1832, %v1844
    %v1846 = vpop.f32.mrf.mxu0
    %1847 = vdwg.mxu0
    %1848 = vmatpush.bf16.msra.mxu0 %v1338
    %1849 = vmatpush.bf16.msra.mxu0 %v1334
    %1850 = vmatpush.bf16.msra.mxu0 %v1330
    %1851 = vmatpush.bf16.msra.mxu0 %v1326
    %1852 = vmatpush.bf16.msra.mxu0 %v1322
    %1853 = vmatpush.bf16.msra.mxu0 %v1318
    %1854 = vmatpush.bf16.msra.mxu0 %v1314
    %1855 = vmatpush.bf16.msra.mxu0 %v1310
    %1856 = vmatmul.bf16.gmra.mxu0 %v77
    %v1857 = vpop.f32.mrf.mxu0
    %v1858 = vadd.f32 %v1845, %v1857
    %v1859 = vpop.f32.mrf.mxu0
    %1860 = vdwg.mxu0
    %1861 = vmatpush.bf16.msra.mxu0 %v1370
    %1862 = vmatpush.bf16.msra.mxu0 %v1366
    %1863 = vmatpush.bf16.msra.mxu0 %v1362
    %1864 = vmatpush.bf16.msra.mxu0 %v1358
    %1865 = vmatpush.bf16.msra.mxu0 %v1354
    %1866 = vmatpush.bf16.msra.mxu0 %v1350
    %1867 = vmatpush.bf16.msra.mxu0 %v1346
    %1868 = vmatpush.bf16.msra.mxu0 %v1342
    %1869 = vmatmul.bf16.gmra.mxu0 %v78
    %v1870 = vpop.f32.mrf.mxu0
    %v1871 = vadd.f32 %v1858, %v1870
    %v1872 = vpop.f32.mrf.mxu0
    %1873 = vdwg.mxu0
    %1874 = vmatpush.bf16.msra.mxu0 %v1402
    %1875 = vmatpush.bf16.msra.mxu0 %v1398
    %1876 = vmatpush.bf16.msra.mxu0 %v1394
    %1877 = vmatpush.bf16.msra.mxu0 %v1390
    %1878 = vmatpush.bf16.msra.mxu0 %v1386
    %1879 = vmatpush.bf16.msra.mxu0 %v1382
    %1880 = vmatpush.bf16.msra.mxu0 %v1378
    %1881 = vmatpush.bf16.msra.mxu0 %v1374
    %1882 = vmatmul.bf16.gmra.mxu0 %v79
    %v1883 = vpop.f32.mrf.mxu0
    %v1884 = vadd.f32 %v1871, %v1883
    %v1885 = vpop.f32.mrf.mxu0
    %1886 = vdwg.mxu0
    %1887 = vmatpush.bf16.msra.mxu0 %v1434
    %1888 = vmatpush.bf16.msra.mxu0 %v1430
    %1889 = vmatpush.bf16.msra.mxu0 %v1426
    %1890 = vmatpush.bf16.msra.mxu0 %v1422
    %1891 = vmatpush.bf16.msra.mxu0 %v1418
    %1892 = vmatpush.bf16.msra.mxu0 %v1414
    %1893 = vmatpush.bf16.msra.mxu0 %v1410
    %1894 = vmatpush.bf16.msra.mxu0 %v1406
    %1895 = vmatmul.bf16.gmra.mxu0 %v80
    %v1896 = vpop.f32.mrf.mxu0
    %v1897 = vadd.f32 %v1884, %v1896
    %v1898 = vpop.f32.mrf.mxu0
    %1899 = vdwg.mxu0
    %1900 = vmatpush.bf16.msra.mxu0 %v1466
    %1901 = vmatpush.bf16.msra.mxu0 %v1462
    %1902 = vmatpush.bf16.msra.mxu0 %v1458
    %1903 = vmatpush.bf16.msra.mxu0 %v1454
    %1904 = vmatpush.bf16.msra.mxu0 %v1450
    %1905 = vmatpush.bf16.msra.mxu0 %v1446
    %1906 = vmatpush.bf16.msra.mxu0 %v1442
    %1907 = vmatpush.bf16.msra.mxu0 %v1438
    %1908 = vmatmul.bf16.gmra.mxu0 %v81
    %v1909 = vpop.f32.mrf.mxu0
    %v1910 = vadd.f32 %v1897, %v1909
    %v1911 = vpop.f32.mrf.mxu0
    %1912 = vdwg.mxu0
    %1913 = vmatpush.bf16.msra.mxu0 %v1498
    %1914 = vmatpush.bf16.msra.mxu0 %v1494
    %1915 = vmatpush.bf16.msra.mxu0 %v1490
    %1916 = vmatpush.bf16.msra.mxu0 %v1486
    %1917 = vmatpush.bf16.msra.mxu0 %v1482
    %1918 = vmatpush.bf16.msra.mxu0 %v1478
    %1919 = vmatpush.bf16.msra.mxu0 %v1474
    %1920 = vmatpush.bf16.msra.mxu0 %v1470
    %1921 = vmatmul.bf16.gmra.mxu0 %v82
    %v1922 = vpop.f32.mrf.mxu0
    %v1923 = vadd.f32 %v1910, %v1922
    %v1924 = vpop.f32.mrf.mxu0
    %1925 = vdwg.mxu0
    %1926 = vmatpush.bf16.msra.mxu0 %v1530
    %1927 = vmatpush.bf16.msra.mxu0 %v1526
    %1928 = vmatpush.bf16.msra.mxu0 %v1522
    %1929 = vmatpush.bf16.msra.mxu0 %v1518
    %1930 = vmatpush.bf16.msra.mxu0 %v1514
    %1931 = vmatpush.bf16.msra.mxu0 %v1510
    %1932 = vmatpush.bf16.msra.mxu0 %v1506
    %1933 = vmatpush.bf16.msra.mxu0 %v1502
    %1934 = vmatmul.bf16.gmra.mxu0 %v83
    %v1935 = vpop.f32.mrf.mxu0
    %v1936 = vadd.f32 %v1923, %v1935
    %v1937 = vpop.f32.mrf.mxu0
    %1938 = vdwg.mxu0
    %1939 = vmatpush.bf16.msra.mxu0 %v1275
    %1940 = vmatpush.bf16.msra.mxu0 %v1271
    %1941 = vmatpush.bf16.msra.mxu0 %v1267
    %1942 = vmatpush.bf16.msra.mxu0 %v1263
    %1943 = vmatpush.bf16.msra.mxu0 %v1259
    %1944 = vmatpush.bf16.msra.mxu0 %v1255
    %1945 = vmatpush.bf16.msra.mxu0 %v1251
    %1946 = vmatpush.bf16.msra.mxu0 %v1247
    %1947 = vmatmul.bf16.gmra.mxu0 %v75
    %v1948 = vpop.f32.mrf.mxu0
    %v1949 = vadd.f32 %v375, %v1948
    %v1950 = vpop.f32.mrf.mxu0
    %1951 = vdwg.mxu0
    %1952 = vmatpush.bf16.msra.mxu0 %v1307
    %1953 = vmatpush.bf16.msra.mxu0 %v1303
    %1954 = vmatpush.bf16.msra.mxu0 %v1299
    %1955 = vmatpush.bf16.msra.mxu0 %v1295
    %1956 = vmatpush.bf16.msra.mxu0 %v1291
    %1957 = vmatpush.bf16.msra.mxu0 %v1287
    %1958 = vmatpush.bf16.msra.mxu0 %v1283
    %1959 = vmatpush.bf16.msra.mxu0 %v1279
    %1960 = vmatmul.bf16.gmra.mxu0 %v76
    %v1961 = vpop.f32.mrf.mxu0
    %v1962 = vadd.f32 %v1949, %v1961
    %v1963 = vpop.f32.mrf.mxu0
    %1964 = vdwg.mxu0
    %1965 = vmatpush.bf16.msra.mxu0 %v1339
    %1966 = vmatpush.bf16.msra.mxu0 %v1335
    %1967 = vmatpush.bf16.msra.mxu0 %v1331
    %1968 = vmatpush.bf16.msra.mxu0 %v1327
    %1969 = vmatpush.bf16.msra.mxu0 %v1323
    %1970 = vmatpush.bf16.msra.mxu0 %v1319
    %1971 = vmatpush.bf16.msra.mxu0 %v1315
    %1972 = vmatpush.bf16.msra.mxu0 %v1311
    %1973 = vmatmul.bf16.gmra.mxu0 %v77
    %v1974 = vpop.f32.mrf.mxu0
    %v1975 = vadd.f32 %v1962, %v1974
    %v1976 = vpop.f32.mrf.mxu0
    %1977 = vdwg.mxu0
    %1978 = vmatpush.bf16.msra.mxu0 %v1371
    %1979 = vmatpush.bf16.msra.mxu0 %v1367
    %1980 = vmatpush.bf16.msra.mxu0 %v1363
    %1981 = vmatpush.bf16.msra.mxu0 %v1359
    %1982 = vmatpush.bf16.msra.mxu0 %v1355
    %1983 = vmatpush.bf16.msra.mxu0 %v1351
    %1984 = vmatpush.bf16.msra.mxu0 %v1347
    %1985 = vmatpush.bf16.msra.mxu0 %v1343
    %1986 = vmatmul.bf16.gmra.mxu0 %v78
    %v1987 = vpop.f32.mrf.mxu0
    %v1988 = vadd.f32 %v1975, %v1987
    %v1989 = vpop.f32.mrf.mxu0
    %1990 = vdwg.mxu0
    %1991 = vmatpush.bf16.msra.mxu0 %v1403
    %1992 = vmatpush.bf16.msra.mxu0 %v1399
    %1993 = vmatpush.bf16.msra.mxu0 %v1395
    %1994 = vmatpush.bf16.msra.mxu0 %v1391
    %1995 = vmatpush.bf16.msra.mxu0 %v1387
    %1996 = vmatpush.bf16.msra.mxu0 %v1383
    %1997 = vmatpush.bf16.msra.mxu0 %v1379
    %1998 = vmatpush.bf16.msra.mxu0 %v1375
    %1999 = vmatmul.bf16.gmra.mxu0 %v79
    %v2000 = vpop.f32.mrf.mxu0
    %v2001 = vadd.f32 %v1988, %v2000
    %v2002 = vpop.f32.mrf.mxu0
    %2003 = vdwg.mxu0
    %2004 = vmatpush.bf16.msra.mxu0 %v1435
    %2005 = vmatpush.bf16.msra.mxu0 %v1431
    %2006 = vmatpush.bf16.msra.mxu0 %v1427
    %2007 = vmatpush.bf16.msra.mxu0 %v1423
    %2008 = vmatpush.bf16.msra.mxu0 %v1419
    %2009 = vmatpush.bf16.msra.mxu0 %v1415
    %2010 = vmatpush.bf16.msra.mxu0 %v1411
    %2011 = vmatpush.bf16.msra.mxu0 %v1407
    %2012 = vmatmul.bf16.gmra.mxu0 %v80
    %v2013 = vpop.f32.mrf.mxu0
    %v2014 = vadd.f32 %v2001, %v2013
    %v2015 = vpop.f32.mrf.mxu0
    %2016 = vdwg.mxu0
    %2017 = vmatpush.bf16.msra.mxu0 %v1467
    %2018 = vmatpush.bf16.msra.mxu0 %v1463
    %2019 = vmatpush.bf16.msra.mxu0 %v1459
    %2020 = vmatpush.bf16.msra.mxu0 %v1455
    %2021 = vmatpush.bf16.msra.mxu0 %v1451
    %2022 = vmatpush.bf16.msra.mxu0 %v1447
    %2023 = vmatpush.bf16.msra.mxu0 %v1443
    %2024 = vmatpush.bf16.msra.mxu0 %v1439
    %2025 = vmatmul.bf16.gmra.mxu0 %v81
    %v2026 = vpop.f32.mrf.mxu0
    %v2027 = vadd.f32 %v2014, %v2026
    %v2028 = vpop.f32.mrf.mxu0
    %2029 = vdwg.mxu0
    %2030 = vmatpush.bf16.msra.mxu0 %v1499
    %2031 = vmatpush.bf16.msra.mxu0 %v1495
    %2032 = vmatpush.bf16.msra.mxu0 %v1491
    %2033 = vmatpush.bf16.msra.mxu0 %v1487
    %2034 = vmatpush.bf16.msra.mxu0 %v1483
    %2035 = vmatpush.bf16.msra.mxu0 %v1479
    %2036 = vmatpush.bf16.msra.mxu0 %v1475
    %2037 = vmatpush.bf16.msra.mxu0 %v1471
    %2038 = vmatmul.bf16.gmra.mxu0 %v82
    %v2039 = vpop.f32.mrf.mxu0
    %v2040 = vadd.f32 %v2027, %v2039
    %v2041 = vpop.f32.mrf.mxu0
    %2042 = vdwg.mxu0
    %2043 = vmatpush.bf16.msra.mxu0 %v1531
    %2044 = vmatpush.bf16.msra.mxu0 %v1527
    %2045 = vmatpush.bf16.msra.mxu0 %v1523
    %2046 = vmatpush.bf16.msra.mxu0 %v1519
    %2047 = vmatpush.bf16.msra.mxu0 %v1515
    %2048 = vmatpush.bf16.msra.mxu0 %v1511
    %2049 = vmatpush.bf16.msra.mxu0 %v1507
    %2050 = vmatpush.bf16.msra.mxu0 %v1503
    %2051 = vmatmul.bf16.gmra.mxu0 %v83
    %v2052 = vpop.f32.mrf.mxu0
    %v2053 = vadd.f32 %v2040, %v2052
    %v2054 = vpop.f32.mrf.mxu0
    %2055 = vdwg.mxu0
    %2056 = vmatpush.bf16.msra.mxu0 %v1276
    %2057 = vmatpush.bf16.msra.mxu0 %v1272
    %2058 = vmatpush.bf16.msra.mxu0 %v1268
    %2059 = vmatpush.bf16.msra.mxu0 %v1264
    %2060 = vmatpush.bf16.msra.mxu0 %v1260
    %2061 = vmatpush.bf16.msra.mxu0 %v1256
    %2062 = vmatpush.bf16.msra.mxu0 %v1252
    %2063 = vmatpush.bf16.msra.mxu0 %v1248
    %2064 = vmatmul.bf16.gmra.mxu0 %v75
    %v2065 = vpop.f32.mrf.mxu0
    %v2066 = vadd.f32 %v376, %v2065
    %v2067 = vpop.f32.mrf.mxu0
    %2068 = vdwg.mxu0
    %2069 = vmatpush.bf16.msra.mxu0 %v1308
    %2070 = vmatpush.bf16.msra.mxu0 %v1304
    %2071 = vmatpush.bf16.msra.mxu0 %v1300
    %2072 = vmatpush.bf16.msra.mxu0 %v1296
    %2073 = vmatpush.bf16.msra.mxu0 %v1292
    %2074 = vmatpush.bf16.msra.mxu0 %v1288
    %2075 = vmatpush.bf16.msra.mxu0 %v1284
    %2076 = vmatpush.bf16.msra.mxu0 %v1280
    %2077 = vmatmul.bf16.gmra.mxu0 %v76
    %v2078 = vpop.f32.mrf.mxu0
    %v2079 = vadd.f32 %v2066, %v2078
    %v2080 = vpop.f32.mrf.mxu0
    %2081 = vdwg.mxu0
    %2082 = vmatpush.bf16.msra.mxu0 %v1340
    %2083 = vmatpush.bf16.msra.mxu0 %v1336
    %2084 = vmatpush.bf16.msra.mxu0 %v1332
    %2085 = vmatpush.bf16.msra.mxu0 %v1328
    %2086 = vmatpush.bf16.msra.mxu0 %v1324
    %2087 = vmatpush.bf16.msra.mxu0 %v1320
    %2088 = vmatpush.bf16.msra.mxu0 %v1316
    %2089 = vmatpush.bf16.msra.mxu0 %v1312
    %2090 = vmatmul.bf16.gmra.mxu0 %v77
    %v2091 = vpop.f32.mrf.mxu0
    %v2092 = vadd.f32 %v2079, %v2091
    %v2093 = vpop.f32.mrf.mxu0
    %2094 = vdwg.mxu0
    %2095 = vmatpush.bf16.msra.mxu0 %v1372
    %2096 = vmatpush.bf16.msra.mxu0 %v1368
    %2097 = vmatpush.bf16.msra.mxu0 %v1364
    %2098 = vmatpush.bf16.msra.mxu0 %v1360
    %2099 = vmatpush.bf16.msra.mxu0 %v1356
    %2100 = vmatpush.bf16.msra.mxu0 %v1352
    %2101 = vmatpush.bf16.msra.mxu0 %v1348
    %2102 = vmatpush.bf16.msra.mxu0 %v1344
    %2103 = vmatmul.bf16.gmra.mxu0 %v78
    %v2104 = vpop.f32.mrf.mxu0
    %v2105 = vadd.f32 %v2092, %v2104
    %v2106 = vpop.f32.mrf.mxu0
    %2107 = vdwg.mxu0
    %2108 = vmatpush.bf16.msra.mxu0 %v1404
    %2109 = vmatpush.bf16.msra.mxu0 %v1400
    %2110 = vmatpush.bf16.msra.mxu0 %v1396
    %2111 = vmatpush.bf16.msra.mxu0 %v1392
    %2112 = vmatpush.bf16.msra.mxu0 %v1388
    %2113 = vmatpush.bf16.msra.mxu0 %v1384
    %2114 = vmatpush.bf16.msra.mxu0 %v1380
    %2115 = vmatpush.bf16.msra.mxu0 %v1376
    %2116 = vmatmul.bf16.gmra.mxu0 %v79
    %v2117 = vpop.f32.mrf.mxu0
    %v2118 = vadd.f32 %v2105, %v2117
    %v2119 = vpop.f32.mrf.mxu0
    %2120 = vdwg.mxu0
    %2121 = vmatpush.bf16.msra.mxu0 %v1436
    %2122 = vmatpush.bf16.msra.mxu0 %v1432
    %2123 = vmatpush.bf16.msra.mxu0 %v1428
    %2124 = vmatpush.bf16.msra.mxu0 %v1424
    %2125 = vmatpush.bf16.msra.mxu0 %v1420
    %2126 = vmatpush.bf16.msra.mxu0 %v1416
    %2127 = vmatpush.bf16.msra.mxu0 %v1412
    %2128 = vmatpush.bf16.msra.mxu0 %v1408
    %2129 = vmatmul.bf16.gmra.mxu0 %v80
    %v2130 = vpop.f32.mrf.mxu0
    %v2131 = vadd.f32 %v2118, %v2130
    %v2132 = vpop.f32.mrf.mxu0
    %2133 = vdwg.mxu0
    %2134 = vmatpush.bf16.msra.mxu0 %v1468
    %2135 = vmatpush.bf16.msra.mxu0 %v1464
    %2136 = vmatpush.bf16.msra.mxu0 %v1460
    %2137 = vmatpush.bf16.msra.mxu0 %v1456
    %2138 = vmatpush.bf16.msra.mxu0 %v1452
    %2139 = vmatpush.bf16.msra.mxu0 %v1448
    %2140 = vmatpush.bf16.msra.mxu0 %v1444
    %2141 = vmatpush.bf16.msra.mxu0 %v1440
    %2142 = vmatmul.bf16.gmra.mxu0 %v81
    %v2143 = vpop.f32.mrf.mxu0
    %v2144 = vadd.f32 %v2131, %v2143
    %v2145 = vpop.f32.mrf.mxu0
    %2146 = vdwg.mxu0
    %2147 = vmatpush.bf16.msra.mxu0 %v1500
    %2148 = vmatpush.bf16.msra.mxu0 %v1496
    %2149 = vmatpush.bf16.msra.mxu0 %v1492
    %2150 = vmatpush.bf16.msra.mxu0 %v1488
    %2151 = vmatpush.bf16.msra.mxu0 %v1484
    %2152 = vmatpush.bf16.msra.mxu0 %v1480
    %2153 = vmatpush.bf16.msra.mxu0 %v1476
    %2154 = vmatpush.bf16.msra.mxu0 %v1472
    %2155 = vmatmul.bf16.gmra.mxu0 %v82
    %v2156 = vpop.f32.mrf.mxu0
    %v2157 = vadd.f32 %v2144, %v2156
    %v2158 = vpop.f32.mrf.mxu0
    %2159 = vdwg.mxu0
    %2160 = vmatpush.bf16.msra.mxu0 %v1532
    %2161 = vmatpush.bf16.msra.mxu0 %v1528
    %2162 = vmatpush.bf16.msra.mxu0 %v1524
    %2163 = vmatpush.bf16.msra.mxu0 %v1520
    %2164 = vmatpush.bf16.msra.mxu0 %v1516
    %2165 = vmatpush.bf16.msra.mxu0 %v1512
    %2166 = vmatpush.bf16.msra.mxu0 %v1508
    %2167 = vmatpush.bf16.msra.mxu0 %v1504
    %2168 = vmatmul.bf16.gmra.mxu0 %v83
    %v2169 = vpop.f32.mrf.mxu0
    %v2170 = vadd.f32 %v2157, %v2169
    %v2171 = vpop.f32.mrf.mxu0
    %2172 = vdwg.mxu0
    %2173 = vmatpush.bf16.msra.mxu0 %v1277
    %2174 = vmatpush.bf16.msra.mxu0 %v1273
    %2175 = vmatpush.bf16.msra.mxu0 %v1269
    %2176 = vmatpush.bf16.msra.mxu0 %v1265
    %2177 = vmatpush.bf16.msra.mxu0 %v1261
    %2178 = vmatpush.bf16.msra.mxu0 %v1257
    %2179 = vmatpush.bf16.msra.mxu0 %v1253
    %2180 = vmatpush.bf16.msra.mxu0 %v1249
    %2181 = vmatmul.bf16.gmra.mxu0 %v75
    %v2182 = vpop.f32.mrf.mxu0
    %v2183 = vadd.f32 %v377, %v2182
    %v2184 = vpop.f32.mrf.mxu0
    %2185 = vdwg.mxu0
    %2186 = vmatpush.bf16.msra.mxu0 %v1309
    %2187 = vmatpush.bf16.msra.mxu0 %v1305
    %2188 = vmatpush.bf16.msra.mxu0 %v1301
    %2189 = vmatpush.bf16.msra.mxu0 %v1297
    %2190 = vmatpush.bf16.msra.mxu0 %v1293
    %2191 = vmatpush.bf16.msra.mxu0 %v1289
    %2192 = vmatpush.bf16.msra.mxu0 %v1285
    %2193 = vmatpush.bf16.msra.mxu0 %v1281
    %2194 = vmatmul.bf16.gmra.mxu0 %v76
    %v2195 = vpop.f32.mrf.mxu0
    %v2196 = vadd.f32 %v2183, %v2195
    %v2197 = vpop.f32.mrf.mxu0
    %2198 = vdwg.mxu0
    %2199 = vmatpush.bf16.msra.mxu0 %v1341
    %2200 = vmatpush.bf16.msra.mxu0 %v1337
    %2201 = vmatpush.bf16.msra.mxu0 %v1333
    %2202 = vmatpush.bf16.msra.mxu0 %v1329
    %2203 = vmatpush.bf16.msra.mxu0 %v1325
    %2204 = vmatpush.bf16.msra.mxu0 %v1321
    %2205 = vmatpush.bf16.msra.mxu0 %v1317
    %2206 = vmatpush.bf16.msra.mxu0 %v1313
    %2207 = vmatmul.bf16.gmra.mxu0 %v77
    %v2208 = vpop.f32.mrf.mxu0
    %v2209 = vadd.f32 %v2196, %v2208
    %v2210 = vpop.f32.mrf.mxu0
    %2211 = vdwg.mxu0
    %2212 = vmatpush.bf16.msra.mxu0 %v1373
    %2213 = vmatpush.bf16.msra.mxu0 %v1369
    %2214 = vmatpush.bf16.msra.mxu0 %v1365
    %2215 = vmatpush.bf16.msra.mxu0 %v1361
    %2216 = vmatpush.bf16.msra.mxu0 %v1357
    %2217 = vmatpush.bf16.msra.mxu0 %v1353
    %2218 = vmatpush.bf16.msra.mxu0 %v1349
    %2219 = vmatpush.bf16.msra.mxu0 %v1345
    %2220 = vmatmul.bf16.gmra.mxu0 %v78
    %v2221 = vpop.f32.mrf.mxu0
    %v2222 = vadd.f32 %v2209, %v2221
    %v2223 = vpop.f32.mrf.mxu0
    %2224 = vdwg.mxu0
    %2225 = vmatpush.bf16.msra.mxu0 %v1405
    %2226 = vmatpush.bf16.msra.mxu0 %v1401
    %2227 = vmatpush.bf16.msra.mxu0 %v1397
    %2228 = vmatpush.bf16.msra.mxu0 %v1393
    %2229 = vmatpush.bf16.msra.mxu0 %v1389
    %2230 = vmatpush.bf16.msra.mxu0 %v1385
    %2231 = vmatpush.bf16.msra.mxu0 %v1381
    %2232 = vmatpush.bf16.msra.mxu0 %v1377
    %2233 = vmatmul.bf16.gmra.mxu0 %v79
    %v2234 = vpop.f32.mrf.mxu0
    %v2235 = vadd.f32 %v2222, %v2234
    %v2236 = vpop.f32.mrf.mxu0
    %2237 = vdwg.mxu0
    %2238 = vmatpush.bf16.msra.mxu0 %v1437
    %2239 = vmatpush.bf16.msra.mxu0 %v1433
    %2240 = vmatpush.bf16.msra.mxu0 %v1429
    %2241 = vmatpush.bf16.msra.mxu0 %v1425
    %2242 = vmatpush.bf16.msra.mxu0 %v1421
    %2243 = vmatpush.bf16.msra.mxu0 %v1417
    %2244 = vmatpush.bf16.msra.mxu0 %v1413
    %2245 = vmatpush.bf16.msra.mxu0 %v1409
    %2246 = vmatmul.bf16.gmra.mxu0 %v80
    %v2247 = vpop.f32.mrf.mxu0
    %v2248 = vadd.f32 %v2235, %v2247
    %v2249 = vpop.f32.mrf.mxu0
    %2250 = vdwg.mxu0
    %2251 = vmatpush.bf16.msra.mxu0 %v1469
    %2252 = vmatpush.bf16.msra.mxu0 %v1465
    %2253 = vmatpush.bf16.msra.mxu0 %v1461
    %2254 = vmatpush.bf16.msra.mxu0 %v1457
    %2255 = vmatpush.bf16.msra.mxu0 %v1453
    %2256 = vmatpush.bf16.msra.mxu0 %v1449
    %2257 = vmatpush.bf16.msra.mxu0 %v1445
    %2258 = vmatpush.bf16.msra.mxu0 %v1441
    %2259 = vmatmul.bf16.gmra.mxu0 %v81
    %v2260 = vpop.f32.mrf.mxu0
    %v2261 = vadd.f32 %v2248, %v2260
    %v2262 = vpop.f32.mrf.mxu0
    %2263 = vdwg.mxu0
    %2264 = vmatpush.bf16.msra.mxu0 %v1501
    %2265 = vmatpush.bf16.msra.mxu0 %v1497
    %2266 = vmatpush.bf16.msra.mxu0 %v1493
    %2267 = vmatpush.bf16.msra.mxu0 %v1489
    %2268 = vmatpush.bf16.msra.mxu0 %v1485
    %2269 = vmatpush.bf16.msra.mxu0 %v1481
    %2270 = vmatpush.bf16.msra.mxu0 %v1477
    %2271 = vmatpush.bf16.msra.mxu0 %v1473
    %2272 = vmatmul.bf16.gmra.mxu0 %v82
    %v2273 = vpop.f32.mrf.mxu0
    %v2274 = vadd.f32 %v2261, %v2273
    %v2275 = vpop.f32.mrf.mxu0
    %2276 = vdwg.mxu0
    %2277 = vmatpush.bf16.msra.mxu0 %v1533
    %2278 = vmatpush.bf16.msra.mxu0 %v1529
    %2279 = vmatpush.bf16.msra.mxu0 %v1525
    %2280 = vmatpush.bf16.msra.mxu0 %v1521
    %2281 = vmatpush.bf16.msra.mxu0 %v1517
    %2282 = vmatpush.bf16.msra.mxu0 %v1513
    %2283 = vmatpush.bf16.msra.mxu0 %v1509
    %2284 = vmatpush.bf16.msra.mxu0 %v1505
    %2285 = vmatmul.bf16.gmra.mxu0 %v83
    %v2286 = vpop.f32.mrf.mxu0
    %v2287 = vadd.f32 %v2274, %v2286
    %v2288 = vpop.f32.mrf.mxu0
    %2289 = vdwg.mxu0
    %v2290 = vmax.f32 %v1936, 0.0
    %v2291 = vmax.f32 %v2053, 0.0
    %v2292 = vmax.f32 %v2170, 0.0
    %v2293 = vmax.f32 %v2287, 0.0
    %v2294 = vpack.c.bf16 %v2290, %v2290
    %v2295 = vpack.c.bf16 %v2291, %v2291
    %v2296 = vpack.c.bf16 %v2292, %v2292
    %v2297 = vpack.c.bf16 %v2293, %v2293
    %v2298 = vld [vmem:[%s3] sm:$0xff]
    %v2299 = vld [vmem:[%s3 + $0x8] sm:$0xff]
    %v2300 = vld [vmem:[%s3 + $0x10] sm:$0xff]
    %v2301 = vld [vmem:[%s3 + $0x18] sm:$0xff]
    %v2302 = vld [vmem:[%s3 + $0x20] sm:$0xff]
    %v2303 = vld [vmem:[%s3 + $0x28] sm:$0xff]
    %v2304 = vld [vmem:[%s3 + $0x30] sm:$0xff]
    %v2305 = vld [vmem:[%s3 + $0x38] sm:$0xff]
    %v2306 = vld [vmem:[%s3 + $0x40] sm:$0xff]
    %v2307 = vld [vmem:[%s3 + $0x48] sm:$0xff]
    %v2308 = vld [vmem:[%s3 + $0x50] sm:$0xff]
    %v2309 = vld [vmem:[%s3 + $0x58] sm:$0xff]
    %v2310 = vld [vmem:[%s3 + $0x60] sm:$0xff]
    %v2311 = vld [vmem:[%s3 + $0x68] sm:$0xff]
    %v2312 = vld [vmem:[%s3 + $0x70] sm:$0xff]
    %v2313 = vld [vmem:[%s3 + $0x78] sm:$0xff]
    %v2314 = vld [vmem:[%s3 + $0x80] sm:$0xff]
    %v2315 = vld [vmem:[%s3 + $0x88] sm:$0xff]
    %v2316 = vld [vmem:[%s3 + $0x90] sm:$0xff]
    %v2317 = vld [vmem:[%s3 + $0x98] sm:$0xff]
    %v2318 = vld [vmem:[%s3 + $0xa0] sm:$0xff]
    %v2319 = vld [vmem:[%s3 + $0xa8] sm:$0xff]
    %v2320 = vld [vmem:[%s3 + $0xb0] sm:$0xff]
    %v2321 = vld [vmem:[%s3 + $0xb8] sm:$0xff]
    %v2322 = vld [vmem:[%s3 + $0xc0] sm:$0xff]
    %v2323 = vld [vmem:[%s3 + $0xc8] sm:$0xff]
    %v2324 = vld [vmem:[%s3 + $0xd0] sm:$0xff]
    %v2325 = vld [vmem:[%s3 + $0xd8] sm:$0xff]
    %v2326 = vld [vmem:[%s3 + $0xe0] sm:$0xff]
    %v2327 = vld [vmem:[%s3 + $0xe8] sm:$0xff]
    %v2328 = vld [vmem:[%s3 + $0xf0] sm:$0xff]
    %v2329 = vld [vmem:[%s3 + $0xf8] sm:$0xff]
    %v2330 = vld [vmem:[%s3 + $0x100] sm:$0xff]
    %v2331 = vld [vmem:[%s3 + $0x108] sm:$0xff]
    %v2332 = vld [vmem:[%s3 + $0x110] sm:$0xff]
    %v2333 = vld [vmem:[%s3 + $0x118] sm:$0xff]
    %v2334 = vld [vmem:[%s3 + $0x120] sm:$0xff]
    %v2335 = vld [vmem:[%s3 + $0x128] sm:$0xff]
    %v2336 = vld [vmem:[%s3 + $0x130] sm:$0xff]
    %v2337 = vld [vmem:[%s3 + $0x138] sm:$0xff]
    %v2338 = vld [vmem:[%s3 + $0x140] sm:$0xff]
    %v2339 = vld [vmem:[%s3 + $0x148] sm:$0xff]
    %v2340 = vld [vmem:[%s3 + $0x150] sm:$0xff]
    %v2341 = vld [vmem:[%s3 + $0x158] sm:$0xff]
    %v2342 = vld [vmem:[%s3 + $0x160] sm:$0xff]
    %v2343 = vld [vmem:[%s3 + $0x168] sm:$0xff]
    %v2344 = vld [vmem:[%s3 + $0x170] sm:$0xff]
    %v2345 = vld [vmem:[%s3 + $0x178] sm:$0xff]
    %v2346 = vld [vmem:[%s3 + $0x180] sm:$0xff]
    %v2347 = vld [vmem:[%s3 + $0x188] sm:$0xff]
    %v2348 = vld [vmem:[%s3 + $0x190] sm:$0xff]
    %v2349 = vld [vmem:[%s3 + $0x198] sm:$0xff]
    %v2350 = vld [vmem:[%s3 + $0x1a0] sm:$0xff]
    %v2351 = vld [vmem:[%s3 + $0x1a8] sm:$0xff]
    %v2352 = vld [vmem:[%s3 + $0x1b0] sm:$0xff]
    %v2353 = vld [vmem:[%s3 + $0x1b8] sm:$0xff]
    %v2354 = vld [vmem:[%s3 + $0x1c0] sm:$0xff]
    %v2355 = vld [vmem:[%s3 + $0x1c8] sm:$0xff]
    %v2356 = vld [vmem:[%s3 + $0x1d0] sm:$0xff]
    %v2357 = vld [vmem:[%s3 + $0x1d8] sm:$0xff]
    %v2358 = vld [vmem:[%s3 + $0x1e0] sm:$0xff]
    %v2359 = vld [vmem:[%s3 + $0x1e8] sm:$0xff]
    %v2360 = vld [vmem:[%s3 + $0x1f0] sm:$0xff]
    %v2361 = vld [vmem:[%s3 + $0x1f8] sm:$0xff]
    %v2362 = vld [vmem:[%s4] sm:$0x3]
    %v2364 = vperm.slane %v2362, 0
    %v2365 = vperm.slane %v2362, 1
    %v2432 = vunpack.c.l.b16 %v2298
    %v2433 = vunpack.c.h.b16 %v2298
    %v2434 = vunpack.c.l.b16 %v2299
    %v2435 = vunpack.c.h.b16 %v2299
    %v2436 = vunpack.c.l.b16 %v2300
    %v2437 = vunpack.c.h.b16 %v2300
    %v2438 = vunpack.c.l.b16 %v2301
    %v2439 = vunpack.c.h.b16 %v2301
    %v2440 = vunpack.c.l.b16 %v2302
    %v2441 = vunpack.c.h.b16 %v2302
    %v2442 = vunpack.c.l.b16 %v2303
    %v2443 = vunpack.c.h.b16 %v2303
    %v2444 = vunpack.c.l.b16 %v2304
    %v2445 = vunpack.c.h.b16 %v2304
    %v2446 = vunpack.c.l.b16 %v2305
    %v2447 = vunpack.c.h.b16 %v2305
    %v2448 = vunpack.c.l.b16 %v2306
    %v2449 = vunpack.c.h.b16 %v2306
    %v2450 = vunpack.c.l.b16 %v2307
    %v2451 = vunpack.c.h.b16 %v2307
    %v2452 = vunpack.c.l.b16 %v2308
    %v2453 = vunpack.c.h.b16 %v2308
    %v2454 = vunpack.c.l.b16 %v2309
    %v2455 = vunpack.c.h.b16 %v2309
    %v2456 = vunpack.c.l.b16 %v2310
    %v2457 = vunpack.c.h.b16 %v2310
    %v2458 = vunpack.c.l.b16 %v2311
    %v2459 = vunpack.c.h.b16 %v2311
    %v2460 = vunpack.c.l.b16 %v2312
    %v2461 = vunpack.c.h.b16 %v2312
    %v2462 = vunpack.c.l.b16 %v2313
    %v2463 = vunpack.c.h.b16 %v2313
    %v2464 = vunpack.c.l.b16 %v2314
    %v2465 = vunpack.c.h.b16 %v2314
    %v2466 = vunpack.c.l.b16 %v2315
    %v2467 = vunpack.c.h.b16 %v2315
    %v2468 = vunpack.c.l.b16 %v2316
    %v2469 = vunpack.c.h.b16 %v2316
    %v2470 = vunpack.c.l.b16 %v2317
    %v2471 = vunpack.c.h.b16 %v2317
    %v2472 = vunpack.c.l.b16 %v2318
    %v2473 = vunpack.c.h.b16 %v2318
    %v2474 = vunpack.c.l.b16 %v2319
    %v2475 = vunpack.c.h.b16 %v2319
    %v2476 = vunpack.c.l.b16 %v2320
    %v2477 = vunpack.c.h.b16 %v2320
    %v2478 = vunpack.c.l.b16 %v2321
    %v2479 = vunpack.c.h.b16 %v2321
    %v2480 = vunpack.c.l.b16 %v2322
    %v2481 = vunpack.c.h.b16 %v2322
    %v2482 = vunpack.c.l.b16 %v2323
    %v2483 = vunpack.c.h.b16 %v2323
    %v2484 = vunpack.c.l.b16 %v2324
    %v2485 = vunpack.c.h.b16 %v2324
    %v2486 = vunpack.c.l.b16 %v2325
    %v2487 = vunpack.c.h.b16 %v2325
    %v2488 = vunpack.c.l.b16 %v2326
    %v2489 = vunpack.c.h.b16 %v2326
    %v2490 = vunpack.c.l.b16 %v2327
    %v2491 = vunpack.c.h.b16 %v2327
    %v2492 = vunpack.c.l.b16 %v2328
    %v2493 = vunpack.c.h.b16 %v2328
    %v2494 = vunpack.c.l.b16 %v2329
    %v2495 = vunpack.c.h.b16 %v2329
    %v2496 = vunpack.c.l.b16 %v2330
    %v2497 = vunpack.c.h.b16 %v2330
    %v2498 = vunpack.c.l.b16 %v2331
    %v2499 = vunpack.c.h.b16 %v2331
    %v2500 = vunpack.c.l.b16 %v2332
    %v2501 = vunpack.c.h.b16 %v2332
    %v2502 = vunpack.c.l.b16 %v2333
    %v2503 = vunpack.c.h.b16 %v2333
    %v2504 = vunpack.c.l.b16 %v2334
    %v2505 = vunpack.c.h.b16 %v2334
    %v2506 = vunpack.c.l.b16 %v2335
    %v2507 = vunpack.c.h.b16 %v2335
    %v2508 = vunpack.c.l.b16 %v2336
    %v2509 = vunpack.c.h.b16 %v2336
    %v2510 = vunpack.c.l.b16 %v2337
    %v2511 = vunpack.c.h.b16 %v2337
    %v2512 = vunpack.c.l.b16 %v2338
    %v2513 = vunpack.c.h.b16 %v2338
    %v2514 = vunpack.c.l.b16 %v2339
    %v2515 = vunpack.c.h.b16 %v2339
    %v2516 = vunpack.c.l.b16 %v2340
    %v2517 = vunpack.c.h.b16 %v2340
    %v2518 = vunpack.c.l.b16 %v2341
    %v2519 = vunpack.c.h.b16 %v2341
    %v2520 = vunpack.c.l.b16 %v2342
    %v2521 = vunpack.c.h.b16 %v2342
    %v2522 = vunpack.c.l.b16 %v2343
    %v2523 = vunpack.c.h.b16 %v2343
    %v2524 = vunpack.c.l.b16 %v2344
    %v2525 = vunpack.c.h.b16 %v2344
    %v2526 = vunpack.c.l.b16 %v2345
    %v2527 = vunpack.c.h.b16 %v2345
    %v2528 = vunpack.c.l.b16 %v2346
    %v2529 = vunpack.c.h.b16 %v2346
    %v2530 = vunpack.c.l.b16 %v2347
    %v2531 = vunpack.c.h.b16 %v2347
    %v2532 = vunpack.c.l.b16 %v2348
    %v2533 = vunpack.c.h.b16 %v2348
    %v2534 = vunpack.c.l.b16 %v2349
    %v2535 = vunpack.c.h.b16 %v2349
    %v2536 = vunpack.c.l.b16 %v2350
    %v2537 = vunpack.c.h.b16 %v2350
    %v2538 = vunpack.c.l.b16 %v2351
    %v2539 = vunpack.c.h.b16 %v2351
    %v2540 = vunpack.c.l.b16 %v2352
    %v2541 = vunpack.c.h.b16 %v2352
    %v2542 = vunpack.c.l.b16 %v2353
    %v2543 = vunpack.c.h.b16 %v2353
    %v2544 = vunpack.c.l.b16 %v2354
    %v2545 = vunpack.c.h.b16 %v2354
    %v2546 = vunpack.c.l.b16 %v2355
    %v2547 = vunpack.c.h.b16 %v2355
    %v2548 = vunpack.c.l.b16 %v2356
    %v2549 = vunpack.c.h.b16 %v2356
    %v2550 = vunpack.c.l.b16 %v2357
    %v2551 = vunpack.c.h.b16 %v2357
    %v2552 = vunpack.c.l.b16 %v2358
    %v2553 = vunpack.c.h.b16 %v2358
    %v2554 = vunpack.c.l.b16 %v2359
    %v2555 = vunpack.c.h.b16 %v2359
    %v2556 = vunpack.c.l.b16 %v2360
    %v2557 = vunpack.c.h.b16 %v2360
    %v2558 = vunpack.c.l.b16 %v2361
    %v2559 = vunpack.c.h.b16 %v2361
    %v2560 = vpack.c.b16 %v2434, %v2432
    %v2561 = vpack.c.b16 %v2435, %v2433
    %v2562 = vpack.c.b16 %v2438, %v2436
    %v2563 = vpack.c.b16 %v2439, %v2437
    %v2564 = vpack.c.b16 %v2442, %v2440
    %v2565 = vpack.c.b16 %v2443, %v2441
    %v2566 = vpack.c.b16 %v2446, %v2444
    %v2567 = vpack.c.b16 %v2447, %v2445
    %v2568 = vpack.c.b16 %v2450, %v2448
    %v2569 = vpack.c.b16 %v2451, %v2449
    %v2570 = vpack.c.b16 %v2454, %v2452
    %v2571 = vpack.c.b16 %v2455, %v2453
    %v2572 = vpack.c.b16 %v2458, %v2456
    %v2573 = vpack.c.b16 %v2459, %v2457
    %v2574 = vpack.c.b16 %v2462, %v2460
    %v2575 = vpack.c.b16 %v2463, %v2461
    %v2576 = vpack.c.b16 %v2466, %v2464
    %v2577 = vpack.c.b16 %v2467, %v2465
    %v2578 = vpack.c.b16 %v2470, %v2468
    %v2579 = vpack.c.b16 %v2471, %v2469
    %v2580 = vpack.c.b16 %v2474, %v2472
    %v2581 = vpack.c.b16 %v2475, %v2473
    %v2582 = vpack.c.b16 %v2478, %v2476
    %v2583 = vpack.c.b16 %v2479, %v2477
    %v2584 = vpack.c.b16 %v2482, %v2480
    %v2585 = vpack.c.b16 %v2483, %v2481
    %v2586 = vpack.c.b16 %v2486, %v2484
    %v2587 = vpack.c.b16 %v2487, %v2485
    %v2588 = vpack.c.b16 %v2490, %v2488
    %v2589 = vpack.c.b16 %v2491, %v2489
    %v2590 = vpack.c.b16 %v2494, %v2492
    %v2591 = vpack.c.b16 %v2495, %v2493
    %v2592 = vpack.c.b16 %v2498, %v2496
    %v2593 = vpack.c.b16 %v2499, %v2497
    %v2594 = vpack.c.b16 %v2502, %v2500
    %v2595 = vpack.c.b16 %v2503, %v2501
    %v2596 = vpack.c.b16 %v2506, %v2504
    %v2597 = vpack.c.b16 %v2507, %v2505
    %v2598 = vpack.c.b16 %v2510, %v2508
    %v2599 = vpack.c.b16 %v2511, %v2509
    %v2600 = vpack.c.b16 %v2514, %v2512
    %v2601 = vpack.c.b16 %v2515, %v2513
    %v2602 = vpack.c.b16 %v2518, %v2516
    %v2603 = vpack.c.b16 %v2519, %v2517
    %v2604 = vpack.c.b16 %v2522, %v2520
    %v2605 = vpack.c.b16 %v2523, %v2521
    %v2606 = vpack.c.b16 %v2526, %v2524
    %v2607 = vpack.c.b16 %v2527, %v2525
    %v2608 = vpack.c.b16 %v2530, %v2528
    %v2609 = vpack.c.b16 %v2531, %v2529
    %v2610 = vpack.c.b16 %v2534, %v2532
    %v2611 = vpack.c.b16 %v2535, %v2533
    %v2612 = vpack.c.b16 %v2538, %v2536
    %v2613 = vpack.c.b16 %v2539, %v2537
    %v2614 = vpack.c.b16 %v2542, %v2540
    %v2615 = vpack.c.b16 %v2543, %v2541
    %v2616 = vpack.c.b16 %v2546, %v2544
    %v2617 = vpack.c.b16 %v2547, %v2545
    %v2618 = vpack.c.b16 %v2550, %v2548
    %v2619 = vpack.c.b16 %v2551, %v2549
    %v2620 = vpack.c.b16 %v2554, %v2552
    %v2621 = vpack.c.b16 %v2555, %v2553
    %v2622 = vpack.c.b16 %v2558, %v2556
    %v2623 = vpack.c.b16 %v2559, %v2557
    %2688 = vmatpush.bf16.msra.mxu0 %v2574
    %2689 = vmatpush.bf16.msra.mxu0 %v2572
    %2690 = vmatpush.bf16.msra.mxu0 %v2570
    %2691 = vmatpush.bf16.msra.mxu0 %v2568
    %2692 = vmatpush.bf16.msra.mxu0 %v2566
    %2693 = vmatpush.bf16.msra.mxu0 %v2564
    %2694 = vmatpush.bf16.msra.mxu0 %v2562
    %2695 = vmatpush.bf16.msra.mxu0 %v2560
    %2696 = vmatmul.bf16.gmra.mxu0 %v2294
    %v2697 = vpop.f32.mrf.mxu0
    %v2698 = vadd.f32 %v2364, %v2697
    %v2699 = vpop.f32.mrf.mxu0
    %2700 = vdwg.mxu0
    %2701 = vmatpush.bf16.msra.mxu0 %v2590
    %2702 = vmatpush.bf16.msra.mxu0 %v2588
    %2703 = vmatpush.bf16.msra.mxu0 %v2586
    %2704 = vmatpush.bf16.msra.mxu0 %v2584
    %2705 = vmatpush.bf16.msra.mxu0 %v2582
    %2706 = vmatpush.bf16.msra.mxu0 %v2580
    %2707 = vmatpush.bf16.msra.mxu0 %v2578
    %2708 = vmatpush.bf16.msra.mxu0 %v2576
    %2709 = vmatmul.bf16.gmra.mxu0 %v2295
    %v2710 = vpop.f32.mrf.mxu0
    %v2711 = vadd.f32 %v2698, %v2710
    %v2712 = vpop.f32.mrf.mxu0
    %2713 = vdwg.mxu0
    %2714 = vmatpush.bf16.msra.mxu0 %v2606
    %2715 = vmatpush.bf16.msra.mxu0 %v2604
    %2716 = vmatpush.bf16.msra.mxu0 %v2602
    %2717 = vmatpush.bf16.msra.mxu0 %v2600
    %2718 = vmatpush.bf16.msra.mxu0 %v2598
    %2719 = vmatpush.bf16.msra.mxu0 %v2596
    %2720 = vmatpush.bf16.msra.mxu0 %v2594
    %2721 = vmatpush.bf16.msra.mxu0 %v2592
    %2722 = vmatmul.bf16.gmra.mxu0 %v2296
    %v2723 = vpop.f32.mrf.mxu0
    %v2724 = vadd.f32 %v2711, %v2723
    %v2725 = vpop.f32.mrf.mxu0
    %2726 = vdwg.mxu0
    %2727 = vmatpush.bf16.msra.mxu0 %v2622
    %2728 = vmatpush.bf16.msra.mxu0 %v2620
    %2729 = vmatpush.bf16.msra.mxu0 %v2618
    %2730 = vmatpush.bf16.msra.mxu0 %v2616
    %2731 = vmatpush.bf16.msra.mxu0 %v2614
    %2732 = vmatpush.bf16.msra.mxu0 %v2612
    %2733 = vmatpush.bf16.msra.mxu0 %v2610
    %2734 = vmatpush.bf16.msra.mxu0 %v2608
    %2735 = vmatmul.bf16.gmra.mxu0 %v2297
    %v2736 = vpop.f32.mrf.mxu0
    %v2737 = vadd.f32 %v2724, %v2736
    %v2738 = vpop.f32.mrf.mxu0
    %2739 = vdwg.mxu0
    %2740 = vmatpush.bf16.msra.mxu0 %v2575
    %2741 = vmatpush.bf16.msra.mxu0 %v2573
    %2742 = vmatpush.bf16.msra.mxu0 %v2571
    %2743 = vmatpush.bf16.msra.mxu0 %v2569
    %2744 = vmatpush.bf16.msra.mxu0 %v2567
    %2745 = vmatpush.bf16.msra.mxu0 %v2565
    %2746 = vmatpush.bf16.msra.mxu0 %v2563
    %2747 = vmatpush.bf16.msra.mxu0 %v2561
    %2748 = vmatmul.bf16.gmra.mxu0 %v2294
    %v2749 = vpop.f32.mrf.mxu0
    %v2750 = vadd.f32 %v2365, %v2749
    %v2751 = vpop.f32.mrf.mxu0
    %2752 = vdwg.mxu0
    %2753 = vmatpush.bf16.msra.mxu0 %v2591
    %2754 = vmatpush.bf16.msra.mxu0 %v2589
    %2755 = vmatpush.bf16.msra.mxu0 %v2587
    %2756 = vmatpush.bf16.msra.mxu0 %v2585
    %2757 = vmatpush.bf16.msra.mxu0 %v2583
    %2758 = vmatpush.bf16.msra.mxu0 %v2581
    %2759 = vmatpush.bf16.msra.mxu0 %v2579
    %2760 = vmatpush.bf16.msra.mxu0 %v2577
    %2761 = vmatmul.bf16.gmra.mxu0 %v2295
    %v2762 = vpop.f32.mrf.mxu0
    %v2763 = vadd.f32 %v2750, %v2762
    %v2764 = vpop.f32.mrf.mxu0
    %2765 = vdwg.mxu0
    %2766 = vmatpush.bf16.msra.mxu0 %v2607
    %2767 = vmatpush.bf16.msra.mxu0 %v2605
    %2768 = vmatpush.bf16.msra.mxu0 %v2603
    %2769 = vmatpush.bf16.msra.mxu0 %v2601
    %2770 = vmatpush.bf16.msra.mxu0 %v2599
    %2771 = vmatpush.bf16.msra.mxu0 %v2597
    %2772 = vmatpush.bf16.msra.mxu0 %v2595
    %2773 = vmatpush.bf16.msra.mxu0 %v2593
    %2774 = vmatmul.bf16.gmra.mxu0 %v2296
    %v2775 = vpop.f32.mrf.mxu0
    %v2776 = vadd.f32 %v2763, %v2775
    %v2777 = vpop.f32.mrf.mxu0
    %2778 = vdwg.mxu0
    %2779 = vmatpush.bf16.msra.mxu0 %v2623
    %2780 = vmatpush.bf16.msra.mxu0 %v2621
    %2781 = vmatpush.bf16.msra.mxu0 %v2619
    %2782 = vmatpush.bf16.msra.mxu0 %v2617
    %2783 = vmatpush.bf16.msra.mxu0 %v2615
    %2784 = vmatpush.bf16.msra.mxu0 %v2613
    %2785 = vmatpush.bf16.msra.mxu0 %v2611
    %2786 = vmatpush.bf16.msra.mxu0 %v2609
    %2787 = vmatmul.bf16.gmra.mxu0 %v2297
    %v2788 = vpop.f32.mrf.mxu0
    %v2789 = vadd.f32 %v2776, %v2788
    %v2790 = vpop.f32.mrf.mxu0
    %2791 = vdwg.mxu0
    %v2792 = vmax.f32 %v2737, 0.0
    %v2793 = vmax.f32 %v2789, 0.0
    %v2794 = vpack.c.bf16 %v2792, %v2792
    %v2795 = vpack.c.bf16 %v2793, %v2793
    %v2796 = vld [vmem:[%s5] sm:$0xf]
    %v2797 = vld [vmem:[%s5 + $0x4] sm:$0xf]
    %v2798 = vld [vmem:[%s5 + $0x8] sm:$0xf]
    %v2799 = vld [vmem:[%s5 + $0xc] sm:$0xf]
    %v2800 = vld [vmem:[%s5 + $0x10] sm:$0xf]
    %v2801 = vld [vmem:[%s5 + $0x14] sm:$0xf]
    %v2802 = vld [vmem:[%s5 + $0x18] sm:$0xf]
    %v2803 = vld [vmem:[%s5 + $0x1c] sm:$0xf]
    %v2804 = vld [vmem:[%s5 + $0x20] sm:$0xf]
    %v2805 = vld [vmem:[%s5 + $0x24] sm:$0xf]
    %v2806 = vld [vmem:[%s5 + $0x28] sm:$0xf]
    %v2807 = vld [vmem:[%s5 + $0x2c] sm:$0xf]
    %v2808 = vld [vmem:[%s5 + $0x30] sm:$0xf]
    %v2809 = vld [vmem:[%s5 + $0x34] sm:$0xf]
    %v2810 = vld [vmem:[%s5 + $0x38] sm:$0xf]
    %v2811 = vld [vmem:[%s5 + $0x3c] sm:$0xf]
    %v2812 = vld [vmem:[%s5 + $0x40] sm:$0xf]
    %v2813 = vld [vmem:[%s5 + $0x44] sm:$0xf]
    %v2814 = vld [vmem:[%s5 + $0x48] sm:$0xf]
    %v2815 = vld [vmem:[%s5 + $0x4c] sm:$0xf]
    %v2816 = vld [vmem:[%s5 + $0x50] sm:$0xf]
    %v2817 = vld [vmem:[%s5 + $0x54] sm:$0xf]
    %v2818 = vld [vmem:[%s5 + $0x58] sm:$0xf]
    %v2819 = vld [vmem:[%s5 + $0x5c] sm:$0xf]
    %v2820 = vld [vmem:[%s5 + $0x60] sm:$0xf]
    %v2821 = vld [vmem:[%s5 + $0x64] sm:$0xf]
    %v2822 = vld [vmem:[%s5 + $0x68] sm:$0xf]
    %v2823 = vld [vmem:[%s5 + $0x6c] sm:$0xf]
    %v2824 = vld [vmem:[%s5 + $0x70] sm:$0xf]
    %v2825 = vld [vmem:[%s5 + $0x74] sm:$0xf]
    %v2826 = vld [vmem:[%s5 + $0x78] sm:$0xf]
    %v2827 = vld [vmem:[%s5 + $0x7c] sm:$0xf]
    %v2828 = vld [vmem:[%s6] sm:$0x1]
    %v2830 = vperm.slane %v2828, 0
    %v2864 = vunpack.c.l.b16 %v2796
    %v2865 = vunpack.c.l.b16 %v2797
    %v2866 = vunpack.c.l.b16 %v2798
    %v2867 = vunpack.c.l.b16 %v2799
    %v2868 = vunpack.c.l.b16 %v2800
    %v2869 = vunpack.c.l.b16 %v2801
    %v2870 = vunpack.c.l.b16 %v2802
    %v2871 = vunpack.c.l.b16 %v2803
    %v2872 = vunpack.c.l.b16 %v2804
    %v2873 = vunpack.c.l.b16 %v2805
    %v2874 = vunpack.c.l.b16 %v2806
    %v2875 = vunpack.c.l.b16 %v2807
    %v2876 = vunpack.c.l.b16 %v2808
    %v2877 = vunpack.c.l.b16 %v2809
    %v2878 = vunpack.c.l.b16 %v2810
    %v2879 = vunpack.c.l.b16 %v2811
    %v2880 = vunpack.c.l.b16 %v2812
    %v2881 = vunpack.c.l.b16 %v2813
    %v2882 = vunpack.c.l.b16 %v2814
    %v2883 = vunpack.c.l.b16 %v2815
    %v2884 = vunpack.c.l.b16 %v2816
    %v2885 = vunpack.c.l.b16 %v2817
    %v2886 = vunpack.c.l.b16 %v2818
    %v2887 = vunpack.c.l.b16 %v2819
    %v2888 = vunpack.c.l.b16 %v2820
    %v2889 = vunpack.c.l.b16 %v2821
    %v2890 = vunpack.c.l.b16 %v2822
    %v2891 = vunpack.c.l.b16 %v2823
    %v2892 = vunpack.c.l.b16 %v2824
    %v2893 = vunpack.c.l.b16 %v2825
    %v2894 = vunpack.c.l.b16 %v2826
    %v2895 = vunpack.c.l.b16 %v2827
    %v2896 = vpack.c.b16 %v2865, %v2864
    %v2897 = vpack.c.b16 %v2867, %v2866
    %v2898 = vpack.c.b16 %v2869, %v2868
    %v2899 = vpack.c.b16 %v2871, %v2870
    %v2900 = vpack.c.b16 %v2873, %v2872
    %v2901 = vpack.c.b16 %v2875, %v2874
    %v2902 = vpack.c.b16 %v2877, %v2876
    %v2903 = vpack.c.b16 %v2879, %v2878
    %v2904 = vpack.c.b16 %v2881, %v2880
    %v2905 = vpack.c.b16 %v2883, %v2882
    %v2906 = vpack.c.b16 %v2885, %v2884
    %v2907 = vpack.c.b16 %v2887, %v2886
    %v2908 = vpack.c.b16 %v2889, %v2888
    %v2909 = vpack.c.b16 %v2891, %v2890
    %v2910 = vpack.c.b16 %v2893, %v2892
    %v2911 = vpack.c.b16 %v2895, %v2894
    %2928 = vmatpush.bf16.msra.mxu0 %v2903
    %2929 = vmatpush.bf16.msra.mxu0 %v2902
    %2930 = vmatpush.bf16.msra.mxu0 %v2901
    %2931 = vmatpush.bf16.msra.mxu0 %v2900
    %2932 = vmatpush.bf16.msra.mxu0 %v2899
    %2933 = vmatpush.bf16.msra.mxu0 %v2898
    %2934 = vmatpush.bf16.msra.mxu0 %v2897
    %2935 = vmatpush.bf16.msra.mxu0 %v2896
    %2936 = vmatmul.bf16.gmra.mxu0 %v2794
    %v2937 = vpop.f32.mrf.mxu0
    %v2938 = vadd.f32 %v2830, %v2937
    %v2939 = vpop.f32.mrf.mxu0
    %2940 = vdwg.mxu0
    %2941 = vmatpush.bf16.msra.mxu0 %v2911
    %2942 = vmatpush.bf16.msra.mxu0 %v2910
    %2943 = vmatpush.bf16.msra.mxu0 %v2909
    %2944 = vmatpush.bf16.msra.mxu0 %v2908
    %2945 = vmatpush.bf16.msra.mxu0 %v2907
    %2946 = vmatpush.bf16.msra.mxu0 %v2906
    %2947 = vmatpush.bf16.msra.mxu0 %v2905
    %2948 = vmatpush.bf16.msra.mxu0 %v2904
    %2949 = vmatmul.bf16.gmra.mxu0 %v2795
    %v2950 = vpop.f32.mrf.mxu0
    %v2951 = vadd.f32 %v2938, %v2950
    %v2952 = vpop.f32.mrf.mxu0
    %2953 = vdwg.mxu0
    %v2954 = vmax.f32 %v2951, 0.0
    %v2955 = vpack.c.bf16 %v2954, %v2954
    %v2956 = vld [vmem:[%s7] sm:$0xf]
    %v2957 = vld [vmem:[%s7 + $0x4] sm:$0xf]
    %v2958 = vld [vmem:[%s7 + $0x8] sm:$0xf]
    %v2959 = vld [vmem:[%s7 + $0xc] sm:$0xf]
    %v2960 = vld [vmem:[%s7 + $0x10] sm:$0xf]
    %v2961 = vld [vmem:[%s7 + $0x14] sm:$0xf]
    %v2962 = vld [vmem:[%s7 + $0x18] sm:$0xf]
    %v2963 = vld [vmem:[%s7 + $0x1c] sm:$0xf]
    %v2964 = vld [vmem:[%s7 + $0x20] sm:$0xf]
    %v2965 = vld [vmem:[%s7 + $0x24] sm:$0xf]
    %v2966 = vld [vmem:[%s7 + $0x28] sm:$0xf]
    %v2967 = vld [vmem:[%s7 + $0x2c] sm:$0xf]
    %v2968 = vld [vmem:[%s7 + $0x30] sm:$0xf]
    %v2969 = vld [vmem:[%s7 + $0x34] sm:$0xf]
    %v2970 = vld [vmem:[%s7 + $0x38] sm:$0xf]
    %v2971 = vld [vmem:[%s7 + $0x3c] sm:$0xf]
    %v2972 = vld [vmem:[%s8] sm:$0x1]
    %v2974 = vperm.slane %v2972, 0
    %v2992 = vunpack.c.l.b16 %v2956
    %v2993 = vunpack.c.l.b16 %v2957
    %v2994 = vunpack.c.l.b16 %v2958
    %v2995 = vunpack.c.l.b16 %v2959
    %v2996 = vunpack.c.l.b16 %v2960
    %v2997 = vunpack.c.l.b16 %v2961
    %v2998 = vunpack.c.l.b16 %v2962
    %v2999 = vunpack.c.l.b16 %v2963
    %v3000 = vunpack.c.l.b16 %v2964
    %v3001 = vunpack.c.l.b16 %v2965
    %v3002 = vunpack.c.l.b16 %v2966
    %v3003 = vunpack.c.l.b16 %v2967
    %v3004 = vunpack.c.l.b16 %v2968
    %v3005 = vunpack.c.l.b16 %v2969
    %v3006 = vunpack.c.l.b16 %v2970
    %v3007 = vunpack.c.l.b16 %v2971
    %v3008 = vpack.c.b16 %v2993, %v2992
    %v3009 = vpack.c.b16 %v2995, %v2994
    %v3010 = vpack.c.b16 %v2997, %v2996
    %v3011 = vpack.c.b16 %v2999, %v2998
    %v3012 = vpack.c.b16 %v3001, %v3000
    %v3013 = vpack.c.b16 %v3003, %v3002
    %v3014 = vpack.c.b16 %v3005, %v3004
    %v3015 = vpack.c.b16 %v3007, %v3006
    %3024 = vmatpush.bf16.msra.mxu0 %v3015
    %3025 = vmatpush.bf16.msra.mxu0 %v3014
    %3026 = vmatpush.bf16.msra.mxu0 %v3013
    %3027 = vmatpush.bf16.msra.mxu0 %v3012
    %3028 = vmatpush.bf16.msra.mxu0 %v3011
    %3029 = vmatpush.bf16.msra.mxu0 %v3010
    %3030 = vmatpush.bf16.msra.mxu0 %v3009
    %3031 = vmatpush.bf16.msra.mxu0 %v3008
    %3032 = vmatmul.bf16.gmra.mxu0 %v2955
    %v3033 = vpop.f32.mrf.mxu0
    %v3034 = vadd.f32 %v2974, %v3033
    %v3035 = vpop.f32.mrf.mxu0
    %3036 = vdwg.mxu0
    %v3037 = vmax.f32 %v3034, 0.0
    %v3038 = vpack.c.bf16 %v3037, %v3037
    %v3039 = vld [vmem:[%s9] sm:$0xf]
    %v3040 = vld [vmem:[%s9 + $0x4] sm:$0xf]
    %v3041 = vld [vmem:[%s9 + $0x8] sm:$0xf]
    %v3042 = vld [vmem:[%s9 + $0xc] sm:$0xf]
    %v3043 = vld [vmem:[%s9 + $0x10] sm:$0xf]
    %v3044 = vld [vmem:[%s9 + $0x14] sm:$0xf]
    %v3045 = vld [vmem:[%s9 + $0x18] sm:$0xf]
    %v3046 = vld [vmem:[%s9 + $0x1c] sm:$0xf]
    %v3047 = vld [vmem:[%s9 + $0x20] sm:$0xf]
    %v3048 = vld [vmem:[%s9 + $0x24] sm:$0xf]
    %v3049 = vld [vmem:[%s9 + $0x28] sm:$0xf]
    %v3050 = vld [vmem:[%s9 + $0x2c] sm:$0xf]
    %v3051 = vld [vmem:[%s9 + $0x30] sm:$0xf]
    %v3052 = vld [vmem:[%s9 + $0x34] sm:$0xf]
    %v3053 = vld [vmem:[%s9 + $0x38] sm:$0xf]
    %v3054 = vld [vmem:[%s9 + $0x3c] sm:$0xf]
    %v3055 = vld [vmem:[%s10] sm:$0x1]
    %v3057 = vperm.slane %v3055, 0
    %v3075 = vunpack.c.l.b16 %v3039
    %v3076 = vunpack.c.l.b16 %v3040
    %v3077 = vunpack.c.l.b16 %v3041
    %v3078 = vunpack.c.l.b16 %v3042
    %v3079 = vunpack.c.l.b16 %v3043
    %v3080 = vunpack.c.l.b16 %v3044
    %v3081 = vunpack.c.l.b16 %v3045
    %v3082 = vunpack.c.l.b16 %v3046
    %v3083 = vunpack.c.l.b16 %v3047
    %v3084 = vunpack.c.l.b16 %v3048
    %v3085 = vunpack.c.l.b16 %v3049
    %v3086 = vunpack.c.l.b16 %v3050
    %v3087 = vunpack.c.l.b16 %v3051
    %v3088 = vunpack.c.l.b16 %v3052
    %v3089 = vunpack.c.l.b16 %v3053
    %v3090 = vunpack.c.l.b16 %v3054
    %v3091 = vpack.c.b16 %v3076, %v3075
    %v3092 = vpack.c.b16 %v3078, %v3077
    %v3093 = vpack.c.b16 %v3080, %v3079
    %v3094 = vpack.c.b16 %v3082, %v3081
    %v3095 = vpack.c.b16 %v3084, %v3083
    %v3096 = vpack.c.b16 %v3086, %v3085
    %v3097 = vpack.c.b16 %v3088, %v3087
    %v3098 = vpack.c.b16 %v3090, %v3089
    %3107 = vmatpush.bf16.msra.mxu0 %v3098
    %3108 = vmatpush.bf16.msra.mxu0 %v3097
    %3109 = vmatpush.bf16.msra.mxu0 %v3096
    %3110 = vmatpush.bf16.msra.mxu0 %v3095
    %3111 = vmatpush.bf16.msra.mxu0 %v3094
    %3112 = vmatpush.bf16.msra.mxu0 %v3093
    %3113 = vmatpush.bf16.msra.mxu0 %v3092
    %3114 = vmatpush.bf16.msra.mxu0 %v3091
    %3115 = vmatmul.bf16.gmra.mxu0 %v3038
    %v3116 = vpop.f32.mrf.mxu0
    %v3117 = vadd.f32 %v3057, %v3116
    %v3118 = vpop.f32.mrf.mxu0
    %3119 = vdwg.mxu0
    %v3120 = vmax.f32 %v3117, 0.0
    %3121 = vst [vmem:[#allocation4] sm:$0xff] %v3120
    %v3122 = vpack.c.bf16 %v3120, %v3120
    %v3123 = vld [vmem:[%s11] sm:$0xf]
    %v3124 = vld [vmem:[%s11 + $0x4] sm:$0xf]
    %v3125 = vld [vmem:[%s11 + $0x8] sm:$0xf]
    %v3126 = vld [vmem:[%s11 + $0xc] sm:$0xf]
    %v3127 = vld [vmem:[%s11 + $0x10] sm:$0xf]
    %v3128 = vld [vmem:[%s11 + $0x14] sm:$0xf]
    %v3129 = vld [vmem:[%s11 + $0x18] sm:$0xf]
    %v3130 = vld [vmem:[%s11 + $0x1c] sm:$0xf]
    %v3131 = vld [vmem:[%s11 + $0x20] sm:$0xf]
    %v3132 = vld [vmem:[%s11 + $0x24] sm:$0xf]
    %v3133 = vld [vmem:[%s11 + $0x28] sm:$0xf]
    %v3134 = vld [vmem:[%s11 + $0x2c] sm:$0xf]
    %v3135 = vld [vmem:[%s11 + $0x30] sm:$0xf]
    %v3136 = vld [vmem:[%s11 + $0x34] sm:$0xf]
    %v3137 = vld [vmem:[%s11 + $0x38] sm:$0xf]
    %v3138 = vld [vmem:[%s11 + $0x3c] sm:$0xf]
    %v3139 = vld [vmem:[%s12] sm:$0x1]
    %v3141 = vperm.slane %v3139, 0
    %v3159 = vunpack.c.l.b16 %v3123
    %v3160 = vunpack.c.l.b16 %v3124
    %v3161 = vunpack.c.l.b16 %v3125
    %v3162 = vunpack.c.l.b16 %v3126
    %v3163 = vunpack.c.l.b16 %v3127
    %v3164 = vunpack.c.l.b16 %v3128
    %v3165 = vunpack.c.l.b16 %v3129
    %v3166 = vunpack.c.l.b16 %v3130
    %v3167 = vunpack.c.l.b16 %v3131
    %v3168 = vunpack.c.l.b16 %v3132
    %v3169 = vunpack.c.l.b16 %v3133
    %v3170 = vunpack.c.l.b16 %v3134
    %v3171 = vunpack.c.l.b16 %v3135
    %v3172 = vunpack.c.l.b16 %v3136
    %v3173 = vunpack.c.l.b16 %v3137
    %v3174 = vunpack.c.l.b16 %v3138
    %v3175 = vpack.c.b16 %v3160, %v3159
    %v3176 = vpack.c.b16 %v3162, %v3161
    %v3177 = vpack.c.b16 %v3164, %v3163
    %v3178 = vpack.c.b16 %v3166, %v3165
    %v3179 = vpack.c.b16 %v3168, %v3167
    %v3180 = vpack.c.b16 %v3170, %v3169
    %v3181 = vpack.c.b16 %v3172, %v3171
    %v3182 = vpack.c.b16 %v3174, %v3173
    %3191 = vmatpush.bf16.msra.mxu0 %v3182
    %3192 = vmatpush.bf16.msra.mxu0 %v3181
    %3193 = vmatpush.bf16.msra.mxu0 %v3180
    %3194 = vmatpush.bf16.msra.mxu0 %v3179
    %3195 = vmatpush.bf16.msra.mxu0 %v3178
    %3196 = vmatpush.bf16.msra.mxu0 %v3177
    %3197 = vmatpush.bf16.msra.mxu0 %v3176
    %3198 = vmatpush.bf16.msra.mxu0 %v3175
    %3199 = vmatmul.bf16.gmra.mxu0 %v3122
    %v3200 = vpop.f32.mrf.mxu0
    %v3201 = vadd.f32 %v3141, %v3200
    %v3202 = vpop.f32.mrf.mxu0
    %3203 = vdwg.mxu0
    %v3204 = vmax.f32 %v3201, 0.0
    %v3205 = vpack.c.bf16 %v3204, %v3204
    %v3206 = vld [vmem:[%s13] sm:$0xf]
    %v3207 = vld [vmem:[%s13 + $0x4] sm:$0xf]
    %v3208 = vld [vmem:[%s13 + $0x8] sm:$0xf]
    %v3209 = vld [vmem:[%s13 + $0xc] sm:$0xf]
    %v3210 = vld [vmem:[%s13 + $0x10] sm:$0xf]
    %v3211 = vld [vmem:[%s13 + $0x14] sm:$0xf]
    %v3212 = vld [vmem:[%s13 + $0x18] sm:$0xf]
    %v3213 = vld [vmem:[%s13 + $0x1c] sm:$0xf]
    %v3214 = vld [vmem:[%s13 + $0x20] sm:$0xf]
    %v3215 = vld [vmem:[%s13 + $0x24] sm:$0xf]
    %v3216 = vld [vmem:[%s13 + $0x28] sm:$0xf]
    %v3217 = vld [vmem:[%s13 + $0x2c] sm:$0xf]
    %v3218 = vld [vmem:[%s13 + $0x30] sm:$0xf]
    %v3219 = vld [vmem:[%s13 + $0x34] sm:$0xf]
    %v3220 = vld [vmem:[%s13 + $0x38] sm:$0xf]
    %v3221 = vld [vmem:[%s13 + $0x3c] sm:$0xf]
    %v3222 = vld [vmem:[%s14] sm:$0x1]
    %v3224 = vperm.slane %v3222, 0
    %v3242 = vunpack.c.l.b16 %v3206
    %v3243 = vunpack.c.l.b16 %v3207
    %v3244 = vunpack.c.l.b16 %v3208
    %v3245 = vunpack.c.l.b16 %v3209
    %v3246 = vunpack.c.l.b16 %v3210
    %v3247 = vunpack.c.l.b16 %v3211
    %v3248 = vunpack.c.l.b16 %v3212
    %v3249 = vunpack.c.l.b16 %v3213
    %v3250 = vunpack.c.l.b16 %v3214
    %v3251 = vunpack.c.l.b16 %v3215
    %v3252 = vunpack.c.l.b16 %v3216
    %v3253 = vunpack.c.l.b16 %v3217
    %v3254 = vunpack.c.l.b16 %v3218
    %v3255 = vunpack.c.l.b16 %v3219
    %v3256 = vunpack.c.l.b16 %v3220
    %v3257 = vunpack.c.l.b16 %v3221
    %v3258 = vpack.c.b16 %v3243, %v3242
    %v3259 = vpack.c.b16 %v3245, %v3244
    %v3260 = vpack.c.b16 %v3247, %v3246
    %v3261 = vpack.c.b16 %v3249, %v3248
    %v3262 = vpack.c.b16 %v3251, %v3250
    %v3263 = vpack.c.b16 %v3253, %v3252
    %v3264 = vpack.c.b16 %v3255, %v3254
    %v3265 = vpack.c.b16 %v3257, %v3256
    %3274 = vmatpush.bf16.msra.mxu0 %v3265
    %3275 = vmatpush.bf16.msra.mxu0 %v3264
    %3276 = vmatpush.bf16.msra.mxu0 %v3263
    %3277 = vmatpush.bf16.msra.mxu0 %v3262
    %3278 = vmatpush.bf16.msra.mxu0 %v3261
    %3279 = vmatpush.bf16.msra.mxu0 %v3260
    %3280 = vmatpush.bf16.msra.mxu0 %v3259
    %3281 = vmatpush.bf16.msra.mxu0 %v3258
    %3282 = vmatmul.bf16.gmra.mxu0 %v3205
    %v3283 = vpop.f32.mrf.mxu0
    %v3284 = vadd.f32 %v3224, %v3283
    %v3285 = vpop.f32.mrf.mxu0
    %3286 = vdwg.mxu0
    %v3287 = vmax.f32 %v3284, 0.0
    %v3288 = vpack.c.bf16 %v3287, %v3287
    %v3289 = vld [vmem:[%s15] sm:$0xff]
    %v3290 = vld [vmem:[%s15 + $0x8] sm:$0xff]
    %v3291 = vld [vmem:[%s15 + $0x10] sm:$0xff]
    %v3292 = vld [vmem:[%s15 + $0x18] sm:$0xff]
    %v3293 = vld [vmem:[%s15 + $0x20] sm:$0xff]
    %v3294 = vld [vmem:[%s15 + $0x28] sm:$0xff]
    %v3295 = vld [vmem:[%s15 + $0x30] sm:$0xff]
    %v3296 = vld [vmem:[%s15 + $0x38] sm:$0xff]
    %v3297 = vld [vmem:[%s15 + $0x40] sm:$0xff]
    %v3298 = vld [vmem:[%s15 + $0x48] sm:$0xff]
    %v3299 = vld [vmem:[%s15 + $0x50] sm:$0xff]
    %v3300 = vld [vmem:[%s15 + $0x58] sm:$0xff]
    %v3301 = vld [vmem:[%s15 + $0x60] sm:$0xff]
    %v3302 = vld [vmem:[%s15 + $0x68] sm:$0xff]
    %v3303 = vld [vmem:[%s15 + $0x70] sm:$0xff]
    %v3304 = vld [vmem:[%s15 + $0x78] sm:$0xff]
    %v3305 = vld [vmem:[%s16] sm:$0x3]
    %v3307 = vperm.slane %v3305, 0
    %v3308 = vperm.slane %v3305, 1
    %v3327 = vunpack.c.l.b16 %v3289
    %v3328 = vunpack.c.h.b16 %v3289
    %v3329 = vunpack.c.l.b16 %v3290
    %v3330 = vunpack.c.h.b16 %v3290
    %v3331 = vunpack.c.l.b16 %v3291
    %v3332 = vunpack.c.h.b16 %v3291
    %v3333 = vunpack.c.l.b16 %v3292
    %v3334 = vunpack.c.h.b16 %v3292
    %v3335 = vunpack.c.l.b16 %v3293
    %v3336 = vunpack.c.h.b16 %v3293
    %v3337 = vunpack.c.l.b16 %v3294
    %v3338 = vunpack.c.h.b16 %v3294
    %v3339 = vunpack.c.l.b16 %v3295
    %v3340 = vunpack.c.h.b16 %v3295
    %v3341 = vunpack.c.l.b16 %v3296
    %v3342 = vunpack.c.h.b16 %v3296
    %v3343 = vunpack.c.l.b16 %v3297
    %v3344 = vunpack.c.h.b16 %v3297
    %v3345 = vunpack.c.l.b16 %v3298
    %v3346 = vunpack.c.h.b16 %v3298
    %v3347 = vunpack.c.l.b16 %v3299
    %v3348 = vunpack.c.h.b16 %v3299
    %v3349 = vunpack.c.l.b16 %v3300
    %v3350 = vunpack.c.h.b16 %v3300
    %v3351 = vunpack.c.l.b16 %v3301
    %v3352 = vunpack.c.h.b16 %v3301
    %v3353 = vunpack.c.l.b16 %v3302
    %v3354 = vunpack.c.h.b16 %v3302
    %v3355 = vunpack.c.l.b16 %v3303
    %v3356 = vunpack.c.h.b16 %v3303
    %v3357 = vunpack.c.l.b16 %v3304
    %v3358 = vunpack.c.h.b16 %v3304
    %v3359 = vpack.c.b16 %v3329, %v3327
    %v3360 = vpack.c.b16 %v3330, %v3328
    %v3361 = vpack.c.b16 %v3333, %v3331
    %v3362 = vpack.c.b16 %v3334, %v3332
    %v3363 = vpack.c.b16 %v3337, %v3335
    %v3364 = vpack.c.b16 %v3338, %v3336
    %v3365 = vpack.c.b16 %v3341, %v3339
    %v3366 = vpack.c.b16 %v3342, %v3340
    %v3367 = vpack.c.b16 %v3345, %v3343
    %v3368 = vpack.c.b16 %v3346, %v3344
    %v3369 = vpack.c.b16 %v3349, %v3347
    %v3370 = vpack.c.b16 %v3350, %v3348
    %v3371 = vpack.c.b16 %v3353, %v3351
    %v3372 = vpack.c.b16 %v3354, %v3352
    %v3373 = vpack.c.b16 %v3357, %v3355
    %v3374 = vpack.c.b16 %v3358, %v3356
    %3391 = vmatpush.bf16.msra.mxu0 %v3373
    %3392 = vmatpush.bf16.msra.mxu0 %v3371
    %3393 = vmatpush.bf16.msra.mxu0 %v3369
    %3394 = vmatpush.bf16.msra.mxu0 %v3367
    %3395 = vmatpush.bf16.msra.mxu0 %v3365
    %3396 = vmatpush.bf16.msra.mxu0 %v3363
    %3397 = vmatpush.bf16.msra.mxu0 %v3361
    %3398 = vmatpush.bf16.msra.mxu0 %v3359
    %3399 = vmatmul.bf16.gmra.mxu0 %v3288
    %v3400 = vpop.f32.mrf.mxu0
    %v3401 = vadd.f32 %v3307, %v3400
    %v3402 = vpop.f32.mrf.mxu0
    %3403 = vdwg.mxu0
    %3404 = vmatpush.bf16.msra.mxu0 %v3374
    %3405 = vmatpush.bf16.msra.mxu0 %v3372
    %3406 = vmatpush.bf16.msra.mxu0 %v3370
    %3407 = vmatpush.bf16.msra.mxu0 %v3368
    %3408 = vmatpush.bf16.msra.mxu0 %v3366
    %3409 = vmatpush.bf16.msra.mxu0 %v3364
    %3410 = vmatpush.bf16.msra.mxu0 %v3362
    %3411 = vmatpush.bf16.msra.mxu0 %v3360
    %3412 = vmatmul.bf16.gmra.mxu0 %v3288
    %v3413 = vpop.f32.mrf.mxu0
    %v3414 = vadd.f32 %v3308, %v3413
    %v3415 = vpop.f32.mrf.mxu0
    %3416 = vdwg.mxu0
    %v3417 = vmax.f32 %v3401, 0.0
    %v3418 = vmax.f32 %v3414, 0.0
    %v3419 = vpack.c.bf16 %v3417, %v3417
    %v3420 = vpack.c.bf16 %v3418, %v3418
    %v3421 = vld [vmem:[%s17] sm:$0xff]
    %v3422 = vld [vmem:[%s17 + $0x8] sm:$0xff]
    %v3423 = vld [vmem:[%s17 + $0x10] sm:$0xff]
    %v3424 = vld [vmem:[%s17 + $0x18] sm:$0xff]
    %v3425 = vld [vmem:[%s17 + $0x20] sm:$0xf]
    %v3426 = vld [vmem:[%s17 + $0x24] sm:$0xff]
    %v3427 = vld [vmem:[%s17 + $0x2c] sm:$0xff]
    %v3428 = vld [vmem:[%s17 + $0x34] sm:$0xff]
    %v3429 = vld [vmem:[%s17 + $0x3c] sm:$0xff]
    %v3430 = vld [vmem:[%s17 + $0x44] sm:$0xf]
    %v3431 = vld [vmem:[%s17 + $0x48] sm:$0xff]
    %v3432 = vld [vmem:[%s17 + $0x50] sm:$0xff]
    %v3433 = vld [vmem:[%s17 + $0x58] sm:$0xff]
    %v3434 = vld [vmem:[%s17 + $0x60] sm:$0xff]
    %v3435 = vld [vmem:[%s17 + $0x68] sm:$0xf]
    %v3436 = vld [vmem:[%s17 + $0x6c] sm:$0xff]
    %v3437 = vld [vmem:[%s17 + $0x74] sm:$0xff]
    %v3438 = vld [vmem:[%s17 + $0x7c] sm:$0xff]
    %v3439 = vld [vmem:[%s17 + $0x84] sm:$0xff]
    %v3440 = vld [vmem:[%s17 + $0x8c] sm:$0xf]
    %v3441 = vld [vmem:[%s17 + $0x90] sm:$0xff]
    %v3442 = vld [vmem:[%s17 + $0x98] sm:$0xff]
    %v3443 = vld [vmem:[%s17 + $0xa0] sm:$0xff]
    %v3444 = vld [vmem:[%s17 + $0xa8] sm:$0xff]
    %v3445 = vld [vmem:[%s17 + $0xb0] sm:$0xf]
    %v3446 = vld [vmem:[%s17 + $0xb4] sm:$0xff]
    %v3447 = vld [vmem:[%s17 + $0xbc] sm:$0xff]
    %v3448 = vld [vmem:[%s17 + $0xc4] sm:$0xff]
    %v3449 = vld [vmem:[%s17 + $0xcc] sm:$0xff]
    %v3450 = vld [vmem:[%s17 + $0xd4] sm:$0xf]
    %v3451 = vld [vmem:[%s17 + $0xd8] sm:$0xff]
    %v3452 = vld [vmem:[%s17 + $0xe0] sm:$0xff]
    %v3453 = vld [vmem:[%s17 + $0xe8] sm:$0xff]
    %v3454 = vld [vmem:[%s17 + $0xf0] sm:$0xff]
    %v3455 = vld [vmem:[%s17 + $0xf8] sm:$0xf]
    %v3456 = vld [vmem:[%s17 + $0xfc] sm:$0xff]
    %v3457 = vld [vmem:[%s17 + $0x104] sm:$0xff]
    %v3458 = vld [vmem:[%s17 + $0x10c] sm:$0xff]
    %v3459 = vld [vmem:[%s17 + $0x114] sm:$0xff]
    %v3460 = vld [vmem:[%s17 + $0x11c] sm:$0xf]
    %v3461 = vld [vmem:[%s17 + $0x120] sm:$0xff]
    %v3462 = vld [vmem:[%s17 + $0x128] sm:$0xff]
    %v3463 = vld [vmem:[%s17 + $0x130] sm:$0xff]
    %v3464 = vld [vmem:[%s17 + $0x138] sm:$0xff]
    %v3465 = vld [vmem:[%s17 + $0x140] sm:$0xf]
    %v3466 = vld [vmem:[%s17 + $0x144] sm:$0xff]
    %v3467 = vld [vmem:[%s17 + $0x14c] sm:$0xff]
    %v3468 = vld [vmem:[%s17 + $0x154] sm:$0xff]
    %v3469 = vld [vmem:[%s17 + $0x15c] sm:$0xff]
    %v3470 = vld [vmem:[%s17 + $0x164] sm:$0xf]
    %v3471 = vld [vmem:[%s17 + $0x168] sm:$0xff]
    %v3472 = vld [vmem:[%s17 + $0x170] sm:$0xff]
    %v3473 = vld [vmem:[%s17 + $0x178] sm:$0xff]
    %v3474 = vld [vmem:[%s17 + $0x180] sm:$0xff]
    %v3475 = vld [vmem:[%s17 + $0x188] sm:$0xf]
    %v3476 = vld [vmem:[%s17 + $0x18c] sm:$0xff]
    %v3477 = vld [vmem:[%s17 + $0x194] sm:$0xff]
    %v3478 = vld [vmem:[%s17 + $0x19c] sm:$0xff]
    %v3479 = vld [vmem:[%s17 + $0x1a4] sm:$0xff]
    %v3480 = vld [vmem:[%s17 + $0x1ac] sm:$0xf]
    %v3481 = vld [vmem:[%s17 + $0x1b0] sm:$0xff]
    %v3482 = vld [vmem:[%s17 + $0x1b8] sm:$0xff]
    %v3483 = vld [vmem:[%s17 + $0x1c0] sm:$0xff]
    %v3484 = vld [vmem:[%s17 + $0x1c8] sm:$0xff]
    %v3485 = vld [vmem:[%s17 + $0x1d0] sm:$0xf]
    %v3486 = vld [vmem:[%s17 + $0x1d4] sm:$0xff]
    %v3487 = vld [vmem:[%s17 + $0x1dc] sm:$0xff]
    %v3488 = vld [vmem:[%s17 + $0x1e4] sm:$0xff]
    %v3489 = vld [vmem:[%s17 + $0x1ec] sm:$0xff]
    %v3490 = vld [vmem:[%s17 + $0x1f4] sm:$0xf]
    %v3491 = vld [vmem:[%s17 + $0x1f8] sm:$0xff]
    %v3492 = vld [vmem:[%s17 + $0x200] sm:$0xff]
    %v3493 = vld [vmem:[%s17 + $0x208] sm:$0xff]
    %v3494 = vld [vmem:[%s17 + $0x210] sm:$0xff]
    %v3495 = vld [vmem:[%s17 + $0x218] sm:$0xf]
    %v3496 = vld [vmem:[%s17 + $0x21c] sm:$0xff]
    %v3497 = vld [vmem:[%s17 + $0x224] sm:$0xff]
    %v3498 = vld [vmem:[%s17 + $0x22c] sm:$0xff]
    %v3499 = vld [vmem:[%s17 + $0x234] sm:$0xff]
    %v3500 = vld [vmem:[%s17 + $0x23c] sm:$0xf]
    %v3501 = vld [vmem:[%s17 + $0x240] sm:$0xff]
    %v3502 = vld [vmem:[%s17 + $0x248] sm:$0xff]
    %v3503 = vld [vmem:[%s17 + $0x250] sm:$0xff]
    %v3504 = vld [vmem:[%s17 + $0x258] sm:$0xff]
    %v3505 = vld [vmem:[%s17 + $0x260] sm:$0xf]
    %v3506 = vld [vmem:[%s17 + $0x264] sm:$0xff]
    %v3507 = vld [vmem:[%s17 + $0x26c] sm:$0xff]
    %v3508 = vld [vmem:[%s17 + $0x274] sm:$0xff]
    %v3509 = vld [vmem:[%s17 + $0x27c] sm:$0xff]
    %v3510 = vld [vmem:[%s17 + $0x284] sm:$0xf]
    %v3511 = vld [vmem:[%s17 + $0x288] sm:$0xff]
    %v3512 = vld [vmem:[%s17 + $0x290] sm:$0xff]
    %v3513 = vld [vmem:[%s17 + $0x298] sm:$0xff]
    %v3514 = vld [vmem:[%s17 + $0x2a0] sm:$0xff]
    %v3515 = vld [vmem:[%s17 + $0x2a8] sm:$0xf]
    %v3516 = vld [vmem:[%s17 + $0x2ac] sm:$0xff]
    %v3517 = vld [vmem:[%s17 + $0x2b4] sm:$0xff]
    %v3518 = vld [vmem:[%s17 + $0x2bc] sm:$0xff]
    %v3519 = vld [vmem:[%s17 + $0x2c4] sm:$0xff]
    %v3520 = vld [vmem:[%s17 + $0x2cc] sm:$0xf]
    %v3521 = vld [vmem:[%s17 + $0x2d0] sm:$0xff]
    %v3522 = vld [vmem:[%s17 + $0x2d8] sm:$0xff]
    %v3523 = vld [vmem:[%s17 + $0x2e0] sm:$0xff]
    %v3524 = vld [vmem:[%s17 + $0x2e8] sm:$0xff]
    %v3525 = vld [vmem:[%s17 + $0x2f0] sm:$0xf]
    %v3526 = vld [vmem:[%s17 + $0x2f4] sm:$0xff]
    %v3527 = vld [vmem:[%s17 + $0x2fc] sm:$0xff]
    %v3528 = vld [vmem:[%s17 + $0x304] sm:$0xff]
    %v3529 = vld [vmem:[%s17 + $0x30c] sm:$0xff]
    %v3530 = vld [vmem:[%s17 + $0x314] sm:$0xf]
    %v3531 = vld [vmem:[%s17 + $0x318] sm:$0xff]
    %v3532 = vld [vmem:[%s17 + $0x320] sm:$0xff]
    %v3533 = vld [vmem:[%s17 + $0x328] sm:$0xff]
    %v3534 = vld [vmem:[%s17 + $0x330] sm:$0xff]
    %v3535 = vld [vmem:[%s17 + $0x338] sm:$0xf]
    %v3536 = vld [vmem:[%s17 + $0x33c] sm:$0xff]
    %v3537 = vld [vmem:[%s17 + $0x344] sm:$0xff]
    %v3538 = vld [vmem:[%s17 + $0x34c] sm:$0xff]
    %v3539 = vld [vmem:[%s17 + $0x354] sm:$0xff]
    %v3540 = vld [vmem:[%s17 + $0x35c] sm:$0xf]
    %v3541 = vld [vmem:[%s17 + $0x360] sm:$0xff]
    %v3542 = vld [vmem:[%s17 + $0x368] sm:$0xff]
    %v3543 = vld [vmem:[%s17 + $0x370] sm:$0xff]
    %v3544 = vld [vmem:[%s17 + $0x378] sm:$0xff]
    %v3545 = vld [vmem:[%s17 + $0x380] sm:$0xf]
    %v3546 = vld [vmem:[%s17 + $0x384] sm:$0xff]
    %v3547 = vld [vmem:[%s17 + $0x38c] sm:$0xff]
    %v3548 = vld [vmem:[%s17 + $0x394] sm:$0xff]
    %v3549 = vld [vmem:[%s17 + $0x39c] sm:$0xff]
    %v3550 = vld [vmem:[%s17 + $0x3a4] sm:$0xf]
    %v3551 = vld [vmem:[%s17 + $0x3a8] sm:$0xff]
    %v3552 = vld [vmem:[%s17 + $0x3b0] sm:$0xff]
    %v3553 = vld [vmem:[%s17 + $0x3b8] sm:$0xff]
    %v3554 = vld [vmem:[%s17 + $0x3c0] sm:$0xff]
    %v3555 = vld [vmem:[%s17 + $0x3c8] sm:$0xf]
    %v3556 = vld [vmem:[%s17 + $0x3cc] sm:$0xff]
    %v3557 = vld [vmem:[%s17 + $0x3d4] sm:$0xff]
    %v3558 = vld [vmem:[%s17 + $0x3dc] sm:$0xff]
    %v3559 = vld [vmem:[%s17 + $0x3e4] sm:$0xff]
    %v3560 = vld [vmem:[%s17 + $0x3ec] sm:$0xf]
    %v3561 = vld [vmem:[%s17 + $0x3f0] sm:$0xff]
    %v3562 = vld [vmem:[%s17 + $0x3f8] sm:$0xff]
    %v3563 = vld [vmem:[%s17 + $0x400] sm:$0xff]
    %v3564 = vld [vmem:[%s17 + $0x408] sm:$0xff]
    %v3565 = vld [vmem:[%s17 + $0x410] sm:$0xf]
    %v3566 = vld [vmem:[%s17 + $0x414] sm:$0xff]
    %v3567 = vld [vmem:[%s17 + $0x41c] sm:$0xff]
    %v3568 = vld [vmem:[%s17 + $0x424] sm:$0xff]
    %v3569 = vld [vmem:[%s17 + $0x42c] sm:$0xff]
    %v3570 = vld [vmem:[%s17 + $0x434] sm:$0xf]
    %v3571 = vld [vmem:[%s17 + $0x438] sm:$0xff]
    %v3572 = vld [vmem:[%s17 + $0x440] sm:$0xff]
    %v3573 = vld [vmem:[%s17 + $0x448] sm:$0xff]
    %v3574 = vld [vmem:[%s17 + $0x450] sm:$0xff]
    %v3575 = vld [vmem:[%s17 + $0x458] sm:$0xf]
    %v3576 = vld [vmem:[%s17 + $0x45c] sm:$0xff]
    %v3577 = vld [vmem:[%s17 + $0x464] sm:$0xff]
    %v3578 = vld [vmem:[%s17 + $0x46c] sm:$0xff]
    %v3579 = vld [vmem:[%s17 + $0x474] sm:$0xff]
    %v3580 = vld [vmem:[%s17 + $0x47c] sm:$0xf]
    %v3581 = vld [vmem:[%s18] sm:$0xff]
    %v3582 = vld [vmem:[%s18 + $0x8] sm:$0x1]
    %v3585 = vperm.slane %v3581, 0
    %v3586 = vperm.slane %v3581, 1
    %v3587 = vperm.slane %v3581, 2
    %v3588 = vperm.slane %v3581, 3
    %v3589 = vperm.slane %v3581, 4
    %v3590 = vperm.slane %v3581, 5
    %v3591 = vperm.slane %v3581, 6
    %v3592 = vperm.slane %v3581, 7
    %v3593 = vperm.slane %v3582, 0
    %v3763 = vunpack.c.l.b16 %v3421
    %v3764 = vunpack.c.h.b16 %v3421
    %v3765 = vunpack.c.l.b16 %v3422
    %v3766 = vunpack.c.h.b16 %v3422
    %v3767 = vunpack.c.l.b16 %v3423
    %v3768 = vunpack.c.h.b16 %v3423
    %v3769 = vunpack.c.l.b16 %v3424
    %v3770 = vunpack.c.h.b16 %v3424
    %v3771 = vunpack.c.l.b16 %v3425
    %v3772 = vunpack.c.l.b16 %v3426
    %v3773 = vunpack.c.h.b16 %v3426
    %v3774 = vunpack.c.l.b16 %v3427
    %v3775 = vunpack.c.h.b16 %v3427
    %v3776 = vunpack.c.l.b16 %v3428
    %v3777 = vunpack.c.h.b16 %v3428
    %v3778 = vunpack.c.l.b16 %v3429
    %v3779 = vunpack.c.h.b16 %v3429
    %v3780 = vunpack.c.l.b16 %v3430
    %v3781 = vunpack.c.l.b16 %v3431
    %v3782 = vunpack.c.h.b16 %v3431
    %v3783 = vunpack.c.l.b16 %v3432
    %v3784 = vunpack.c.h.b16 %v3432
    %v3785 = vunpack.c.l.b16 %v3433
    %v3786 = vunpack.c.h.b16 %v3433
    %v3787 = vunpack.c.l.b16 %v3434
    %v3788 = vunpack.c.h.b16 %v3434
    %v3789 = vunpack.c.l.b16 %v3435
    %v3790 = vunpack.c.l.b16 %v3436
    %v3791 = vunpack.c.h.b16 %v3436
    %v3792 = vunpack.c.l.b16 %v3437
    %v3793 = vunpack.c.h.b16 %v3437
    %v3794 = vunpack.c.l.b16 %v3438
    %v3795 = vunpack.c.h.b16 %v3438
    %v3796 = vunpack.c.l.b16 %v3439
    %v3797 = vunpack.c.h.b16 %v3439
    %v3798 = vunpack.c.l.b16 %v3440
    %v3799 = vunpack.c.l.b16 %v3441
    %v3800 = vunpack.c.h.b16 %v3441
    %v3801 = vunpack.c.l.b16 %v3442
    %v3802 = vunpack.c.h.b16 %v3442
    %v3803 = vunpack.c.l.b16 %v3443
    %v3804 = vunpack.c.h.b16 %v3443
    %v3805 = vunpack.c.l.b16 %v3444
    %v3806 = vunpack.c.h.b16 %v3444
    %v3807 = vunpack.c.l.b16 %v3445
    %v3808 = vunpack.c.l.b16 %v3446
    %v3809 = vunpack.c.h.b16 %v3446
    %v3810 = vunpack.c.l.b16 %v3447
    %v3811 = vunpack.c.h.b16 %v3447
    %v3812 = vunpack.c.l.b16 %v3448
    %v3813 = vunpack.c.h.b16 %v3448
    %v3814 = vunpack.c.l.b16 %v3449
    %v3815 = vunpack.c.h.b16 %v3449
    %v3816 = vunpack.c.l.b16 %v3450
    %v3817 = vunpack.c.l.b16 %v3451
    %v3818 = vunpack.c.h.b16 %v3451
    %v3819 = vunpack.c.l.b16 %v3452
    %v3820 = vunpack.c.h.b16 %v3452
    %v3821 = vunpack.c.l.b16 %v3453
    %v3822 = vunpack.c.h.b16 %v3453
    %v3823 = vunpack.c.l.b16 %v3454
    %v3824 = vunpack.c.h.b16 %v3454
    %v3825 = vunpack.c.l.b16 %v3455
    %v3826 = vunpack.c.l.b16 %v3456
    %v3827 = vunpack.c.h.b16 %v3456
    %v3828 = vunpack.c.l.b16 %v3457
    %v3829 = vunpack.c.h.b16 %v3457
    %v3830 = vunpack.c.l.b16 %v3458
    %v3831 = vunpack.c.h.b16 %v3458
    %v3832 = vunpack.c.l.b16 %v3459
    %v3833 = vunpack.c.h.b16 %v3459
    %v3834 = vunpack.c.l.b16 %v3460
    %v3835 = vunpack.c.l.b16 %v3461
    %v3836 = vunpack.c.h.b16 %v3461
    %v3837 = vunpack.c.l.b16 %v3462
    %v3838 = vunpack.c.h.b16 %v3462
    %v3839 = vunpack.c.l.b16 %v3463
    %v3840 = vunpack.c.h.b16 %v3463
    %v3841 = vunpack.c.l.b16 %v3464
    %v3842 = vunpack.c.h.b16 %v3464
    %v3843 = vunpack.c.l.b16 %v3465
    %v3844 = vunpack.c.l.b16 %v3466
    %v3845 = vunpack.c.h.b16 %v3466
    %v3846 = vunpack.c.l.b16 %v3467
    %v3847 = vunpack.c.h.b16 %v3467
    %v3848 = vunpack.c.l.b16 %v3468
    %v3849 = vunpack.c.h.b16 %v3468
    %v3850 = vunpack.c.l.b16 %v3469
    %v3851 = vunpack.c.h.b16 %v3469
    %v3852 = vunpack.c.l.b16 %v3470
    %v3853 = vunpack.c.l.b16 %v3471
    %v3854 = vunpack.c.h.b16 %v3471
    %v3855 = vunpack.c.l.b16 %v3472
    %v3856 = vunpack.c.h.b16 %v3472
    %v3857 = vunpack.c.l.b16 %v3473
    %v3858 = vunpack.c.h.b16 %v3473
    %v3859 = vunpack.c.l.b16 %v3474
    %v3860 = vunpack.c.h.b16 %v3474
    %v3861 = vunpack.c.l.b16 %v3475
    %v3862 = vunpack.c.l.b16 %v3476
    %v3863 = vunpack.c.h.b16 %v3476
    %v3864 = vunpack.c.l.b16 %v3477
    %v3865 = vunpack.c.h.b16 %v3477
    %v3866 = vunpack.c.l.b16 %v3478
    %v3867 = vunpack.c.h.b16 %v3478
    %v3868 = vunpack.c.l.b16 %v3479
    %v3869 = vunpack.c.h.b16 %v3479
    %v3870 = vunpack.c.l.b16 %v3480
    %v3871 = vunpack.c.l.b16 %v3481
    %v3872 = vunpack.c.h.b16 %v3481
    %v3873 = vunpack.c.l.b16 %v3482
    %v3874 = vunpack.c.h.b16 %v3482
    %v3875 = vunpack.c.l.b16 %v3483
    %v3876 = vunpack.c.h.b16 %v3483
    %v3877 = vunpack.c.l.b16 %v3484
    %v3878 = vunpack.c.h.b16 %v3484
    %v3879 = vunpack.c.l.b16 %v3485
    %v3880 = vunpack.c.l.b16 %v3486
    %v3881 = vunpack.c.h.b16 %v3486
    %v3882 = vunpack.c.l.b16 %v3487
    %v3883 = vunpack.c.h.b16 %v3487
    %v3884 = vunpack.c.l.b16 %v3488
    %v3885 = vunpack.c.h.b16 %v3488
    %v3886 = vunpack.c.l.b16 %v3489
    %v3887 = vunpack.c.h.b16 %v3489
    %v3888 = vunpack.c.l.b16 %v3490
    %v3889 = vunpack.c.l.b16 %v3491
    %v3890 = vunpack.c.h.b16 %v3491
    %v3891 = vunpack.c.l.b16 %v3492
    %v3892 = vunpack.c.h.b16 %v3492
    %v3893 = vunpack.c.l.b16 %v3493
    %v3894 = vunpack.c.h.b16 %v3493
    %v3895 = vunpack.c.l.b16 %v3494
    %v3896 = vunpack.c.h.b16 %v3494
    %v3897 = vunpack.c.l.b16 %v3495
    %v3898 = vunpack.c.l.b16 %v3496
    %v3899 = vunpack.c.h.b16 %v3496
    %v3900 = vunpack.c.l.b16 %v3497
    %v3901 = vunpack.c.h.b16 %v3497
    %v3902 = vunpack.c.l.b16 %v3498
    %v3903 = vunpack.c.h.b16 %v3498
    %v3904 = vunpack.c.l.b16 %v3499
    %v3905 = vunpack.c.h.b16 %v3499
    %v3906 = vunpack.c.l.b16 %v3500
    %v3907 = vunpack.c.l.b16 %v3501
    %v3908 = vunpack.c.h.b16 %v3501
    %v3909 = vunpack.c.l.b16 %v3502
    %v3910 = vunpack.c.h.b16 %v3502
    %v3911 = vunpack.c.l.b16 %v3503
    %v3912 = vunpack.c.h.b16 %v3503
    %v3913 = vunpack.c.l.b16 %v3504
    %v3914 = vunpack.c.h.b16 %v3504
    %v3915 = vunpack.c.l.b16 %v3505
    %v3916 = vunpack.c.l.b16 %v3506
    %v3917 = vunpack.c.h.b16 %v3506
    %v3918 = vunpack.c.l.b16 %v3507
    %v3919 = vunpack.c.h.b16 %v3507
    %v3920 = vunpack.c.l.b16 %v3508
    %v3921 = vunpack.c.h.b16 %v3508
    %v3922 = vunpack.c.l.b16 %v3509
    %v3923 = vunpack.c.h.b16 %v3509
    %v3924 = vunpack.c.l.b16 %v3510
    %v3925 = vunpack.c.l.b16 %v3511
    %v3926 = vunpack.c.h.b16 %v3511
    %v3927 = vunpack.c.l.b16 %v3512
    %v3928 = vunpack.c.h.b16 %v3512
    %v3929 = vunpack.c.l.b16 %v3513
    %v3930 = vunpack.c.h.b16 %v3513
    %v3931 = vunpack.c.l.b16 %v3514
    %v3932 = vunpack.c.h.b16 %v3514
    %v3933 = vunpack.c.l.b16 %v3515
    %v3934 = vunpack.c.l.b16 %v3516
    %v3935 = vunpack.c.h.b16 %v3516
    %v3936 = vunpack.c.l.b16 %v3517
    %v3937 = vunpack.c.h.b16 %v3517
    %v3938 = vunpack.c.l.b16 %v3518
    %v3939 = vunpack.c.h.b16 %v3518
    %v3940 = vunpack.c.l.b16 %v3519
    %v3941 = vunpack.c.h.b16 %v3519
    %v3942 = vunpack.c.l.b16 %v3520
    %v3943 = vunpack.c.l.b16 %v3521
    %v3944 = vunpack.c.h.b16 %v3521
    %v3945 = vunpack.c.l.b16 %v3522
    %v3946 = vunpack.c.h.b16 %v3522
    %v3947 = vunpack.c.l.b16 %v3523
    %v3948 = vunpack.c.h.b16 %v3523
    %v3949 = vunpack.c.l.b16 %v3524
    %v3950 = vunpack.c.h.b16 %v3524
    %v3951 = vunpack.c.l.b16 %v3525
    %v3952 = vunpack.c.l.b16 %v3526
    %v3953 = vunpack.c.h.b16 %v3526
    %v3954 = vunpack.c.l.b16 %v3527
    %v3955 = vunpack.c.h.b16 %v3527
    %v3956 = vunpack.c.l.b16 %v3528
    %v3957 = vunpack.c.h.b16 %v3528
    %v3958 = vunpack.c.l.b16 %v3529
    %v3959 = vunpack.c.h.b16 %v3529
    %v3960 = vunpack.c.l.b16 %v3530
    %v3961 = vunpack.c.l.b16 %v3531
    %v3962 = vunpack.c.h.b16 %v3531
    %v3963 = vunpack.c.l.b16 %v3532
    %v3964 = vunpack.c.h.b16 %v3532
    %v3965 = vunpack.c.l.b16 %v3533
    %v3966 = vunpack.c.h.b16 %v3533
    %v3967 = vunpack.c.l.b16 %v3534
    %v3968 = vunpack.c.h.b16 %v3534
    %v3969 = vunpack.c.l.b16 %v3535
    %v3970 = vunpack.c.l.b16 %v3536
    %v3971 = vunpack.c.h.b16 %v3536
    %v3972 = vunpack.c.l.b16 %v3537
    %v3973 = vunpack.c.h.b16 %v3537
    %v3974 = vunpack.c.l.b16 %v3538
    %v3975 = vunpack.c.h.b16 %v3538
    %v3976 = vunpack.c.l.b16 %v3539
    %v3977 = vunpack.c.h.b16 %v3539
    %v3978 = vunpack.c.l.b16 %v3540
    %v3979 = vunpack.c.l.b16 %v3541
    %v3980 = vunpack.c.h.b16 %v3541
    %v3981 = vunpack.c.l.b16 %v3542
    %v3982 = vunpack.c.h.b16 %v3542
    %v3983 = vunpack.c.l.b16 %v3543
    %v3984 = vunpack.c.h.b16 %v3543
    %v3985 = vunpack.c.l.b16 %v3544
    %v3986 = vunpack.c.h.b16 %v3544
    %v3987 = vunpack.c.l.b16 %v3545
    %v3988 = vunpack.c.l.b16 %v3546
    %v3989 = vunpack.c.h.b16 %v3546
    %v3990 = vunpack.c.l.b16 %v3547
    %v3991 = vunpack.c.h.b16 %v3547
    %v3992 = vunpack.c.l.b16 %v3548
    %v3993 = vunpack.c.h.b16 %v3548
    %v3994 = vunpack.c.l.b16 %v3549
    %v3995 = vunpack.c.h.b16 %v3549
    %v3996 = vunpack.c.l.b16 %v3550
    %v3997 = vunpack.c.l.b16 %v3551
    %v3998 = vunpack.c.h.b16 %v3551
    %v3999 = vunpack.c.l.b16 %v3552
    %v4000 = vunpack.c.h.b16 %v3552
    %v4001 = vunpack.c.l.b16 %v3553
    %v4002 = vunpack.c.h.b16 %v3553
    %v4003 = vunpack.c.l.b16 %v3554
    %v4004 = vunpack.c.h.b16 %v3554
    %v4005 = vunpack.c.l.b16 %v3555
    %v4006 = vunpack.c.l.b16 %v3556
    %v4007 = vunpack.c.h.b16 %v3556
    %v4008 = vunpack.c.l.b16 %v3557
    %v4009 = vunpack.c.h.b16 %v3557
    %v4010 = vunpack.c.l.b16 %v3558
    %v4011 = vunpack.c.h.b16 %v3558
    %v4012 = vunpack.c.l.b16 %v3559
    %v4013 = vunpack.c.h.b16 %v3559
    %v4014 = vunpack.c.l.b16 %v3560
    %v4015 = vunpack.c.l.b16 %v3561
    %v4016 = vunpack.c.h.b16 %v3561
    %v4017 = vunpack.c.l.b16 %v3562
    %v4018 = vunpack.c.h.b16 %v3562
    %v4019 = vunpack.c.l.b16 %v3563
    %v4020 = vunpack.c.h.b16 %v3563
    %v4021 = vunpack.c.l.b16 %v3564
    %v4022 = vunpack.c.h.b16 %v3564
    %v4023 = vunpack.c.l.b16 %v3565
    %v4024 = vunpack.c.l.b16 %v3566
    %v4025 = vunpack.c.h.b16 %v3566
    %v4026 = vunpack.c.l.b16 %v3567
    %v4027 = vunpack.c.h.b16 %v3567
    %v4028 = vunpack.c.l.b16 %v3568
    %v4029 = vunpack.c.h.b16 %v3568
    %v4030 = vunpack.c.l.b16 %v3569
    %v4031 = vunpack.c.h.b16 %v3569
    %v4032 = vunpack.c.l.b16 %v3570
    %v4033 = vunpack.c.l.b16 %v3571
    %v4034 = vunpack.c.h.b16 %v3571
    %v4035 = vunpack.c.l.b16 %v3572
    %v4036 = vunpack.c.h.b16 %v3572
    %v4037 = vunpack.c.l.b16 %v3573
    %v4038 = vunpack.c.h.b16 %v3573
    %v4039 = vunpack.c.l.b16 %v3574
    %v4040 = vunpack.c.h.b16 %v3574
    %v4041 = vunpack.c.l.b16 %v3575
    %v4042 = vunpack.c.l.b16 %v3576
    %v4043 = vunpack.c.h.b16 %v3576
    %v4044 = vunpack.c.l.b16 %v3577
    %v4045 = vunpack.c.h.b16 %v3577
    %v4046 = vunpack.c.l.b16 %v3578
    %v4047 = vunpack.c.h.b16 %v3578
    %v4048 = vunpack.c.l.b16 %v3579
    %v4049 = vunpack.c.h.b16 %v3579
    %v4050 = vunpack.c.l.b16 %v3580
    %v4051 = vpack.c.b16 %v3772, %v3763
    %v4052 = vpack.c.b16 %v3773, %v3764
    %v4053 = vpack.c.b16 %v3774, %v3765
    %v4054 = vpack.c.b16 %v3775, %v3766
    %v4055 = vpack.c.b16 %v3776, %v3767
    %v4056 = vpack.c.b16 %v3777, %v3768
    %v4057 = vpack.c.b16 %v3778, %v3769
    %v4058 = vpack.c.b16 %v3779, %v3770
    %v4059 = vpack.c.b16 %v3780, %v3771
    %v4060 = vpack.c.b16 %v3790, %v3781
    %v4061 = vpack.c.b16 %v3791, %v3782
    %v4062 = vpack.c.b16 %v3792, %v3783
    %v4063 = vpack.c.b16 %v3793, %v3784
    %v4064 = vpack.c.b16 %v3794, %v3785
    %v4065 = vpack.c.b16 %v3795, %v3786
    %v4066 = vpack.c.b16 %v3796, %v3787
    %v4067 = vpack.c.b16 %v3797, %v3788
    %v4068 = vpack.c.b16 %v3798, %v3789
    %v4069 = vpack.c.b16 %v3808, %v3799
    %v4070 = vpack.c.b16 %v3809, %v3800
    %v4071 = vpack.c.b16 %v3810, %v3801
    %v4072 = vpack.c.b16 %v3811, %v3802
    %v4073 = vpack.c.b16 %v3812, %v3803
    %v4074 = vpack.c.b16 %v3813, %v3804
    %v4075 = vpack.c.b16 %v3814, %v3805
    %v4076 = vpack.c.b16 %v3815, %v3806
    %v4077 = vpack.c.b16 %v3816, %v3807
    %v4078 = vpack.c.b16 %v3826, %v3817
    %v4079 = vpack.c.b16 %v3827, %v3818
    %v4080 = vpack.c.b16 %v3828, %v3819
    %v4081 = vpack.c.b16 %v3829, %v3820
    %v4082 = vpack.c.b16 %v3830, %v3821
    %v4083 = vpack.c.b16 %v3831, %v3822
    %v4084 = vpack.c.b16 %v3832, %v3823
    %v4085 = vpack.c.b16 %v3833, %v3824
    %v4086 = vpack.c.b16 %v3834, %v3825
    %v4087 = vpack.c.b16 %v3844, %v3835
    %v4088 = vpack.c.b16 %v3845, %v3836
    %v4089 = vpack.c.b16 %v3846, %v3837
    %v4090 = vpack.c.b16 %v3847, %v3838
    %v4091 = vpack.c.b16 %v3848, %v3839
    %v4092 = vpack.c.b16 %v3849, %v3840
    %v4093 = vpack.c.b16 %v3850, %v3841
    %v4094 = vpack.c.b16 %v3851, %v3842
    %v4095 = vpack.c.b16 %v3852, %v3843
    %v4096 = vpack.c.b16 %v3862, %v3853
    %v4097 = vpack.c.b16 %v3863, %v3854
    %v4098 = vpack.c.b16 %v3864, %v3855
    %v4099 = vpack.c.b16 %v3865, %v3856
    %v4100 = vpack.c.b16 %v3866, %v3857
    %v4101 = vpack.c.b16 %v3867, %v3858
    %v4102 = vpack.c.b16 %v3868, %v3859
    %v4103 = vpack.c.b16 %v3869, %v3860
    %v4104 = vpack.c.b16 %v3870, %v3861
    %v4105 = vpack.c.b16 %v3880, %v3871
    %v4106 = vpack.c.b16 %v3881, %v3872
    %v4107 = vpack.c.b16 %v3882, %v3873
    %v4108 = vpack.c.b16 %v3883, %v3874
    %v4109 = vpack.c.b16 %v3884, %v3875
    %v4110 = vpack.c.b16 %v3885, %v3876
    %v4111 = vpack.c.b16 %v3886, %v3877
    %v4112 = vpack.c.b16 %v3887, %v3878
    %v4113 = vpack.c.b16 %v3888, %v3879
    %v4114 = vpack.c.b16 %v3898, %v3889
    %v4115 = vpack.c.b16 %v3899, %v3890
    %v4116 = vpack.c.b16 %v3900, %v3891
    %v4117 = vpack.c.b16 %v3901, %v3892
    %v4118 = vpack.c.b16 %v3902, %v3893
    %v4119 = vpack.c.b16 %v3903, %v3894
    %v4120 = vpack.c.b16 %v3904, %v3895
    %v4121 = vpack.c.b16 %v3905, %v3896
    %v4122 = vpack.c.b16 %v3906, %v3897
    %v4123 = vpack.c.b16 %v3916, %v3907
    %v4124 = vpack.c.b16 %v3917, %v3908
    %v4125 = vpack.c.b16 %v3918, %v3909
    %v4126 = vpack.c.b16 %v3919, %v3910
    %v4127 = vpack.c.b16 %v3920, %v3911
    %v4128 = vpack.c.b16 %v3921, %v3912
    %v4129 = vpack.c.b16 %v3922, %v3913
    %v4130 = vpack.c.b16 %v3923, %v3914
    %v4131 = vpack.c.b16 %v3924, %v3915
    %v4132 = vpack.c.b16 %v3934, %v3925
    %v4133 = vpack.c.b16 %v3935, %v3926
    %v4134 = vpack.c.b16 %v3936, %v3927
    %v4135 = vpack.c.b16 %v3937, %v3928
    %v4136 = vpack.c.b16 %v3938, %v3929
    %v4137 = vpack.c.b16 %v3939, %v3930
    %v4138 = vpack.c.b16 %v3940, %v3931
    %v4139 = vpack.c.b16 %v3941, %v3932
    %v4140 = vpack.c.b16 %v3942, %v3933
    %v4141 = vpack.c.b16 %v3952, %v3943
    %v4142 = vpack.c.b16 %v3953, %v3944
    %v4143 = vpack.c.b16 %v3954, %v3945
    %v4144 = vpack.c.b16 %v3955, %v3946
    %v4145 = vpack.c.b16 %v3956, %v3947
    %v4146 = vpack.c.b16 %v3957, %v3948
    %v4147 = vpack.c.b16 %v3958, %v3949
    %v4148 = vpack.c.b16 %v3959, %v3950
    %v4149 = vpack.c.b16 %v3960, %v3951
    %v4150 = vpack.c.b16 %v3970, %v3961
    %v4151 = vpack.c.b16 %v3971, %v3962
    %v4152 = vpack.c.b16 %v3972, %v3963
    %v4153 = vpack.c.b16 %v3973, %v3964
    %v4154 = vpack.c.b16 %v3974, %v3965
    %v4155 = vpack.c.b16 %v3975, %v3966
    %v4156 = vpack.c.b16 %v3976, %v3967
    %v4157 = vpack.c.b16 %v3977, %v3968
    %v4158 = vpack.c.b16 %v3978, %v3969
    %v4159 = vpack.c.b16 %v3988, %v3979
    %v4160 = vpack.c.b16 %v3989, %v3980
    %v4161 = vpack.c.b16 %v3990, %v3981
    %v4162 = vpack.c.b16 %v3991, %v3982
    %v4163 = vpack.c.b16 %v3992, %v3983
    %v4164 = vpack.c.b16 %v3993, %v3984
    %v4165 = vpack.c.b16 %v3994, %v3985
    %v4166 = vpack.c.b16 %v3995, %v3986
    %v4167 = vpack.c.b16 %v3996, %v3987
    %v4168 = vpack.c.b16 %v4006, %v3997
    %v4169 = vpack.c.b16 %v4007, %v3998
    %v4170 = vpack.c.b16 %v4008, %v3999
    %v4171 = vpack.c.b16 %v4009, %v4000
    %v4172 = vpack.c.b16 %v4010, %v4001
    %v4173 = vpack.c.b16 %v4011, %v4002
    %v4174 = vpack.c.b16 %v4012, %v4003
    %v4175 = vpack.c.b16 %v4013, %v4004
    %v4176 = vpack.c.b16 %v4014, %v4005
    %v4177 = vpack.c.b16 %v4024, %v4015
    %v4178 = vpack.c.b16 %v4025, %v4016
    %v4179 = vpack.c.b16 %v4026, %v4017
    %v4180 = vpack.c.b16 %v4027, %v4018
    %v4181 = vpack.c.b16 %v4028, %v4019
    %v4182 = vpack.c.b16 %v4029, %v4020
    %v4183 = vpack.c.b16 %v4030, %v4021
    %v4184 = vpack.c.b16 %v4031, %v4022
    %v4185 = vpack.c.b16 %v4032, %v4023
    %v4186 = vpack.c.b16 %v4042, %v4033
    %v4187 = vpack.c.b16 %v4043, %v4034
    %v4188 = vpack.c.b16 %v4044, %v4035
    %v4189 = vpack.c.b16 %v4045, %v4036
    %v4190 = vpack.c.b16 %v4046, %v4037
    %v4191 = vpack.c.b16 %v4047, %v4038
    %v4192 = vpack.c.b16 %v4048, %v4039
    %v4193 = vpack.c.b16 %v4049, %v4040
    %v4194 = vpack.c.b16 %v4050, %v4041
    %4339 = vmatpush.bf16.msra.mxu0 %v4114
    %4340 = vmatpush.bf16.msra.mxu0 %v4105
    %4341 = vmatpush.bf16.msra.mxu0 %v4096
    %4342 = vmatpush.bf16.msra.mxu0 %v4087
    %4343 = vmatpush.bf16.msra.mxu0 %v4078
    %4344 = vmatpush.bf16.msra.mxu0 %v4069
    %4345 = vmatpush.bf16.msra.mxu0 %v4060
    %4346 = vmatpush.bf16.msra.mxu0 %v4051
    %4347 = vmatmul.bf16.gmra.mxu0 %v3419
    %v4348 = vpop.f32.mrf.mxu0
    %v4349 = vadd.f32 %v3585, %v4348
    %v4350 = vpop.f32.mrf.mxu0
    %4351 = vdwg.mxu0
    %4352 = vmatpush.bf16.msra.mxu0 %v4186
    %4353 = vmatpush.bf16.msra.mxu0 %v4177
    %4354 = vmatpush.bf16.msra.mxu0 %v4168
    %4355 = vmatpush.bf16.msra.mxu0 %v4159
    %4356 = vmatpush.bf16.msra.mxu0 %v4150
    %4357 = vmatpush.bf16.msra.mxu0 %v4141
    %4358 = vmatpush.bf16.msra.mxu0 %v4132
    %4359 = vmatpush.bf16.msra.mxu0 %v4123
    %4360 = vmatmul.bf16.gmra.mxu0 %v3420
    %v4361 = vpop.f32.mrf.mxu0
    %v4362 = vadd.f32 %v4349, %v4361
    %v4363 = vpop.f32.mrf.mxu0
    %4364 = vdwg.mxu0
    %4365 = vmatpush.bf16.msra.mxu0 %v4115
    %4366 = vmatpush.bf16.msra.mxu0 %v4106
    %4367 = vmatpush.bf16.msra.mxu0 %v4097
    %4368 = vmatpush.bf16.msra.mxu0 %v4088
    %4369 = vmatpush.bf16.msra.mxu0 %v4079
    %4370 = vmatpush.bf16.msra.mxu0 %v4070
    %4371 = vmatpush.bf16.msra.mxu0 %v4061
    %4372 = vmatpush.bf16.msra.mxu0 %v4052
    %4373 = vmatmul.bf16.gmra.mxu0 %v3419
    %v4374 = vpop.f32.mrf.mxu0
    %v4375 = vadd.f32 %v3586, %v4374
    %v4376 = vpop.f32.mrf.mxu0
    %4377 = vdwg.mxu0
    %4378 = vmatpush.bf16.msra.mxu0 %v4187
    %4379 = vmatpush.bf16.msra.mxu0 %v4178
    %4380 = vmatpush.bf16.msra.mxu0 %v4169
    %4381 = vmatpush.bf16.msra.mxu0 %v4160
    %4382 = vmatpush.bf16.msra.mxu0 %v4151
    %4383 = vmatpush.bf16.msra.mxu0 %v4142
    %4384 = vmatpush.bf16.msra.mxu0 %v4133
    %4385 = vmatpush.bf16.msra.mxu0 %v4124
    %4386 = vmatmul.bf16.gmra.mxu0 %v3420
    %v4387 = vpop.f32.mrf.mxu0
    %v4388 = vadd.f32 %v4375, %v4387
    %v4389 = vpop.f32.mrf.mxu0
    %4390 = vdwg.mxu0
    %4391 = vmatpush.bf16.msra.mxu0 %v4116
    %4392 = vmatpush.bf16.msra.mxu0 %v4107
    %4393 = vmatpush.bf16.msra.mxu0 %v4098
    %4394 = vmatpush.bf16.msra.mxu0 %v4089
    %4395 = vmatpush.bf16.msra.mxu0 %v4080
    %4396 = vmatpush.bf16.msra.mxu0 %v4071
    %4397 = vmatpush.bf16.msra.mxu0 %v4062
    %4398 = vmatpush.bf16.msra.mxu0 %v4053
    %4399 = vmatmul.bf16.gmra.mxu0 %v3419
    %v4400 = vpop.f32.mrf.mxu0
    %v4401 = vadd.f32 %v3587, %v4400
    %v4402 = vpop.f32.mrf.mxu0
    %4403 = vdwg.mxu0
    %4404 = vmatpush.bf16.msra.mxu0 %v4188
    %4405 = vmatpush.bf16.msra.mxu0 %v4179
    %4406 = vmatpush.bf16.msra.mxu0 %v4170
    %4407 = vmatpush.bf16.msra.mxu0 %v4161
    %4408 = vmatpush.bf16.msra.mxu0 %v4152
    %4409 = vmatpush.bf16.msra.mxu0 %v4143
    %4410 = vmatpush.bf16.msra.mxu0 %v4134
    %4411 = vmatpush.bf16.msra.mxu0 %v4125
    %4412 = vmatmul.bf16.gmra.mxu0 %v3420
    %v4413 = vpop.f32.mrf.mxu0
    %v4414 = vadd.f32 %v4401, %v4413
    %v4415 = vpop.f32.mrf.mxu0
    %4416 = vdwg.mxu0
    %4417 = vmatpush.bf16.msra.mxu0 %v4117
    %4418 = vmatpush.bf16.msra.mxu0 %v4108
    %4419 = vmatpush.bf16.msra.mxu0 %v4099
    %4420 = vmatpush.bf16.msra.mxu0 %v4090
    %4421 = vmatpush.bf16.msra.mxu0 %v4081
    %4422 = vmatpush.bf16.msra.mxu0 %v4072
    %4423 = vmatpush.bf16.msra.mxu0 %v4063
    %4424 = vmatpush.bf16.msra.mxu0 %v4054
    %4425 = vmatmul.bf16.gmra.mxu0 %v3419
    %v4426 = vpop.f32.mrf.mxu0
    %v4427 = vadd.f32 %v3588, %v4426
    %v4428 = vpop.f32.mrf.mxu0
    %4429 = vdwg.mxu0
    %4430 = vmatpush.bf16.msra.mxu0 %v4189
    %4431 = vmatpush.bf16.msra.mxu0 %v4180
    %4432 = vmatpush.bf16.msra.mxu0 %v4171
    %4433 = vmatpush.bf16.msra.mxu0 %v4162
    %4434 = vmatpush.bf16.msra.mxu0 %v4153
    %4435 = vmatpush.bf16.msra.mxu0 %v4144
    %4436 = vmatpush.bf16.msra.mxu0 %v4135
    %4437 = vmatpush.bf16.msra.mxu0 %v4126
    %4438 = vmatmul.bf16.gmra.mxu0 %v3420
    %v4439 = vpop.f32.mrf.mxu0
    %v4440 = vadd.f32 %v4427, %v4439
    %v4441 = vpop.f32.mrf.mxu0
    %4442 = vdwg.mxu0
    %4443 = vmatpush.bf16.msra.mxu0 %v4118
    %4444 = vmatpush.bf16.msra.mxu0 %v4109
    %4445 = vmatpush.bf16.msra.mxu0 %v4100
    %4446 = vmatpush.bf16.msra.mxu0 %v4091
    %4447 = vmatpush.bf16.msra.mxu0 %v4082
    %4448 = vmatpush.bf16.msra.mxu0 %v4073
    %4449 = vmatpush.bf16.msra.mxu0 %v4064
    %4450 = vmatpush.bf16.msra.mxu0 %v4055
    %4451 = vmatmul.bf16.gmra.mxu0 %v3419
    %v4452 = vpop.f32.mrf.mxu0
    %v4453 = vadd.f32 %v3589, %v4452
    %v4454 = vpop.f32.mrf.mxu0
    %4455 = vdwg.mxu0
    %4456 = vmatpush.bf16.msra.mxu0 %v4190
    %4457 = vmatpush.bf16.msra.mxu0 %v4181
    %4458 = vmatpush.bf16.msra.mxu0 %v4172
    %4459 = vmatpush.bf16.msra.mxu0 %v4163
    %4460 = vmatpush.bf16.msra.mxu0 %v4154
    %4461 = vmatpush.bf16.msra.mxu0 %v4145
    %4462 = vmatpush.bf16.msra.mxu0 %v4136
    %4463 = vmatpush.bf16.msra.mxu0 %v4127
    %4464 = vmatmul.bf16.gmra.mxu0 %v3420
    %v4465 = vpop.f32.mrf.mxu0
    %v4466 = vadd.f32 %v4453, %v4465
    %v4467 = vpop.f32.mrf.mxu0
    %4468 = vdwg.mxu0
    %4469 = vmatpush.bf16.msra.mxu0 %v4119
    %4470 = vmatpush.bf16.msra.mxu0 %v4110
    %4471 = vmatpush.bf16.msra.mxu0 %v4101
    %4472 = vmatpush.bf16.msra.mxu0 %v4092
    %4473 = vmatpush.bf16.msra.mxu0 %v4083
    %4474 = vmatpush.bf16.msra.mxu0 %v4074
    %4475 = vmatpush.bf16.msra.mxu0 %v4065
    %4476 = vmatpush.bf16.msra.mxu0 %v4056
    %4477 = vmatmul.bf16.gmra.mxu0 %v3419
    %v4478 = vpop.f32.mrf.mxu0
    %v4479 = vadd.f32 %v3590, %v4478
    %v4480 = vpop.f32.mrf.mxu0
    %4481 = vdwg.mxu0
    %4482 = vmatpush.bf16.msra.mxu0 %v4191
    %4483 = vmatpush.bf16.msra.mxu0 %v4182
    %4484 = vmatpush.bf16.msra.mxu0 %v4173
    %4485 = vmatpush.bf16.msra.mxu0 %v4164
    %4486 = vmatpush.bf16.msra.mxu0 %v4155
    %4487 = vmatpush.bf16.msra.mxu0 %v4146
    %4488 = vmatpush.bf16.msra.mxu0 %v4137
    %4489 = vmatpush.bf16.msra.mxu0 %v4128
    %4490 = vmatmul.bf16.gmra.mxu0 %v3420
    %v4491 = vpop.f32.mrf.mxu0
    %v4492 = vadd.f32 %v4479, %v4491
    %v4493 = vpop.f32.mrf.mxu0
    %4494 = vdwg.mxu0
    %4495 = vmatpush.bf16.msra.mxu0 %v4120
    %4496 = vmatpush.bf16.msra.mxu0 %v4111
    %4497 = vmatpush.bf16.msra.mxu0 %v4102
    %4498 = vmatpush.bf16.msra.mxu0 %v4093
    %4499 = vmatpush.bf16.msra.mxu0 %v4084
    %4500 = vmatpush.bf16.msra.mxu0 %v4075
    %4501 = vmatpush.bf16.msra.mxu0 %v4066
    %4502 = vmatpush.bf16.msra.mxu0 %v4057
    %4503 = vmatmul.bf16.gmra.mxu0 %v3419
    %v4504 = vpop.f32.mrf.mxu0
    %v4505 = vadd.f32 %v3591, %v4504
    %v4506 = vpop.f32.mrf.mxu0
    %4507 = vdwg.mxu0
    %4508 = vmatpush.bf16.msra.mxu0 %v4192
    %4509 = vmatpush.bf16.msra.mxu0 %v4183
    %4510 = vmatpush.bf16.msra.mxu0 %v4174
    %4511 = vmatpush.bf16.msra.mxu0 %v4165
    %4512 = vmatpush.bf16.msra.mxu0 %v4156
    %4513 = vmatpush.bf16.msra.mxu0 %v4147
    %4514 = vmatpush.bf16.msra.mxu0 %v4138
    %4515 = vmatpush.bf16.msra.mxu0 %v4129
    %4516 = vmatmul.bf16.gmra.mxu0 %v3420
    %v4517 = vpop.f32.mrf.mxu0
    %v4518 = vadd.f32 %v4505, %v4517
    %v4519 = vpop.f32.mrf.mxu0
    %4520 = vdwg.mxu0
    %4521 = vmatpush.bf16.msra.mxu0 %v4121
    %4522 = vmatpush.bf16.msra.mxu0 %v4112
    %4523 = vmatpush.bf16.msra.mxu0 %v4103
    %4524 = vmatpush.bf16.msra.mxu0 %v4094
    %4525 = vmatpush.bf16.msra.mxu0 %v4085
    %4526 = vmatpush.bf16.msra.mxu0 %v4076
    %4527 = vmatpush.bf16.msra.mxu0 %v4067
    %4528 = vmatpush.bf16.msra.mxu0 %v4058
    %4529 = vmatmul.bf16.gmra.mxu0 %v3419
    %v4530 = vpop.f32.mrf.mxu0
    %v4531 = vadd.f32 %v3592, %v4530
    %v4532 = vpop.f32.mrf.mxu0
    %4533 = vdwg.mxu0
    %4534 = vmatpush.bf16.msra.mxu0 %v4193
    %4535 = vmatpush.bf16.msra.mxu0 %v4184
    %4536 = vmatpush.bf16.msra.mxu0 %v4175
    %4537 = vmatpush.bf16.msra.mxu0 %v4166
    %4538 = vmatpush.bf16.msra.mxu0 %v4157
    %4539 = vmatpush.bf16.msra.mxu0 %v4148
    %4540 = vmatpush.bf16.msra.mxu0 %v4139
    %4541 = vmatpush.bf16.msra.mxu0 %v4130
    %4542 = vmatmul.bf16.gmra.mxu0 %v3420
    %v4543 = vpop.f32.mrf.mxu0
    %v4544 = vadd.f32 %v4531, %v4543
    %v4545 = vpop.f32.mrf.mxu0
    %4546 = vdwg.mxu0
    %4547 = vmatpush.bf16.msra.mxu0 %v4122
    %4548 = vmatpush.bf16.msra.mxu0 %v4113
    %4549 = vmatpush.bf16.msra.mxu0 %v4104
    %4550 = vmatpush.bf16.msra.mxu0 %v4095
    %4551 = vmatpush.bf16.msra.mxu0 %v4086
    %4552 = vmatpush.bf16.msra.mxu0 %v4077
    %4553 = vmatpush.bf16.msra.mxu0 %v4068
    %4554 = vmatpush.bf16.msra.mxu0 %v4059
    %4555 = vmatmul.bf16.gmra.mxu0 %v3419
    %v4556 = vpop.f32.mrf.mxu0
    %v4557 = vadd.f32 %v3593, %v4556
    %v4558 = vpop.f32.mrf.mxu0
    %4559 = vdwg.mxu0
    %4560 = vmatpush.bf16.msra.mxu0 %v4194
    %4561 = vmatpush.bf16.msra.mxu0 %v4185
    %4562 = vmatpush.bf16.msra.mxu0 %v4176
    %4563 = vmatpush.bf16.msra.mxu0 %v4167
    %4564 = vmatpush.bf16.msra.mxu0 %v4158
    %4565 = vmatpush.bf16.msra.mxu0 %v4149
    %4566 = vmatpush.bf16.msra.mxu0 %v4140
    %4567 = vmatpush.bf16.msra.mxu0 %v4131
    %4568 = vmatmul.bf16.gmra.mxu0 %v3420
    %v4569 = vpop.f32.mrf.mxu0
    %v4570 = vadd.f32 %v4557, %v4569
    %v4571 = vpop.f32.mrf.mxu0
    %4572 = vdwg.mxu0
    %v4573 = vmax.f32 %v4362, 0.0
    %v4574 = vmax.f32 %v4388, 0.0
    %v4575 = vmax.f32 %v4414, 0.0
    %v4576 = vmax.f32 %v4440, 0.0
    %v4577 = vmax.f32 %v4466, 0.0
    %v4578 = vmax.f32 %v4492, 0.0
    %v4579 = vmax.f32 %v4518, 0.0
    %v4580 = vmax.f32 %v4544, 0.0
    %v4581 = vmax.f32 %v4570, 0.0
    %4582 = vst [vmem:[#allocation2] sm:$0xff] %v4573
    %4583 = vst [vmem:[#allocation2 + $0x8] sm:$0xff] %v4574
    %4584 = vst [vmem:[#allocation2 + $0x10] sm:$0xff] %v4575
    %4585 = vst [vmem:[#allocation2 + $0x18] sm:$0xff] %v4576
    %4586 = vst [vmem:[#allocation2 + $0x20] sm:$0xff] %v4577
    %4587 = vst [vmem:[#allocation2 + $0x28] sm:$0xff] %v4578
    %4588 = vst [vmem:[#allocation2 + $0x30] sm:$0xff] %v4579
    %4589 = vst [vmem:[#allocation2 + $0x38] sm:$0xff] %v4580
    %4590 = vst [vmem:[#allocation2 + $0x40] sm:$0xff] %v4581
    // Predicated region
    $region78: #{deepae_forward.1} parent=1 // pred_check
      _
    $region79: #{deepae_forward.1} parent=1 // pred_check_branch
      %4592 = sbr.rel (0) target = $region81
    $region80: #{deepae_forward.1} parent=1 // pred_region
      %4594 = vsyncadd [#allocation3], 0
      %s4596 = sshll.u32 [#allocation2], 4
      %s4597 = int_to_ptr.vmem [resolvable:$true] %s4596
      %s4598 = sshll.u32 %s19, 4
      %s4599 = int_to_ptr.hbm [resolvable:$true] %s4598
      %4601 = dma.vmem_to_hbm [thread:$0]  %s4597, 1152, %s4599, [#allocation3]
    $region81: #{deepae_forward.1} parent=1 // pred_fallthru
      _
    // Predicated region
    $region82: #{deepae_forward.1} parent=1 // pred_check
      _
    $region83: #{deepae_forward.1} parent=1 // pred_check_branch
      %4603 = sbr.rel (0) target = $region85
    $region84: #{deepae_forward.1} parent=1 // pred_region
      %4605 = vsyncadd [#allocation5], 0
      %s4607 = sshll.u32 [#allocation4], 4
      %s4608 = int_to_ptr.vmem [resolvable:$true] %s4607
      %s4609 = sshll.u32 %s20, 4
      %s4610 = int_to_ptr.hbm [resolvable:$true] %s4609
      %4612 = dma.vmem_to_hbm [thread:$0]  %s4608, 128, %s4610, [#allocation5]
    $region85: #{deepae_forward.1} parent=1 // pred_fallthru
      _
    // Predicated region
    $region86: #{deepae_forward.1} parent=1 // pred_check
      _
    $region87: #{deepae_forward.1} parent=1 // pred_check_branch
      %4614 = sbr.rel (0) target = $region89
    $region88: #{deepae_forward.1} parent=1 // pred_region
      %4616 = dma.done [#allocation3], 1152
    $region89: #{deepae_forward.1} parent=1 // pred_fallthru
      _
    // Predicated region
    $region90: #{deepae_forward.1} parent=1 // pred_check
      _
    $region91: #{deepae_forward.1} parent=1 // pred_check_branch
      %4618 = sbr.rel (0) target = $region93
    $region92: #{deepae_forward.1} parent=1 // pred_region
      %4620 = dma.done [#allocation5], 128
    $region93: #{deepae_forward.1} parent=1 // pred_fallthru
      _
    %4621 = vsyncpa [#allocation3], 1
    %4622 = vsyncpa [#allocation5], 1

</llo_original>
